<compile_context>
chip_gen: v6e
topology: v6e:2x2x1
jax: 0.10.0
libtpu: 0.0.40
codegen_flags: <defaults>
</compile_context>

<pallas_src>
import functools
import math

import numpy as np
import jax
import jax.numpy as jnp
from jax.experimental import pallas as pl
from jax.experimental.pallas import tpu as pltpu


def _round_up(x, m):
    return ((x + m - 1) // m) * m


def _pad2(x, shape):
    return jnp.pad(x, [(0, s - d) for d, s in zip(x.shape, shape)])


# ----------------------------------------------------------------------------
# Fused decoder kernel: one grid step == one decode time step.
# ----------------------------------------------------------------------------
def decoder_kernel(
    # --- small VMEM-resident inputs (constant index_map) ---
    dl_ref,          # (Bp, 1)  int32   decode length per padded row
    inp0_ref,        # (Bp, Mp) bf16    embedding of the first token
    w1_ref,          # (Mp+Dp, Ap+Ep+4Dp) bf16  fused [emb|h] projection
    b1_ref,          # (1, Ap+Ep+4Dp)   f32     fused bias (0 | b_beta | b_lstm)
    w_x_att_ref,     # (Ep, 4Dp) bf16   LSTM contribution of attention encoding
    w_enc_ref,       # (Ep, Ap)  bf16   attention encoder projection
    b_enc_ref,       # (1, Ap)   f32    b_enc + b_dec (folded)
    w_f_ref,         # (1, Ap)   f32    f_att weight (its bias cancels in softmax)
    w_init_ref,      # (Ep, 2Dp) bf16   [w_init_h | w_init_c]
    b_init_ref,      # (1, 2Dp)  f32
    b_fc_ref,        # (1, Vp)   f32
    # --- large inputs left in HBM, copied once into scratch at t == 0 ---
    enc_hbm,         # (Bp, Pp, Ep) bf16
    wfc_hbm,         # (Dp, Vp)     bf16
    emb_hbm,         # (Vp, Mp)     bf16
    # --- outputs: one (t)-indexed block per grid step ---
    preds_ref,       # (1, Bp, Vp) f32
    alphas_ref,      # (1, Bp, Pp) f32
    # --- VMEM scratch (persists across grid steps; single-buffered) ---
    enc_vmem,        # (Bp, Pp, Ep) bf16
    wfc_vmem,        # (Dp, Vp)     bf16
    embtbl_vmem,     # (Vp, Mp)     bf16
    encatt_scr,      # (Bp, Pp, Ap) f32   hoisted encoder projection
    h_scr, c_scr,    # (Bp, Dp)     f32
    inp_scr,         # (Bp, Mp)     bf16  current input embedding
    dma_sem,         # DMA semaphores (3,)
    *, n_pixels, n_vocab, d_pad, a_pad, e_pad,
):
    t = pl.program_id(0)
    f32 = jnp.float32
    bf16 = jnp.bfloat16

    # ---- one-time init at t == 0 -------------------------------------------------
    @pl.when(t == 0)
    def _init():
        # Copy the big arrays HBM -> VMEM exactly once (single buffered).
        cps = [pltpu.make_async_copy(enc_hbm, enc_vmem, dma_sem.at[0]),
               pltpu.make_async_copy(wfc_hbm, wfc_vmem, dma_sem.at[1]),
               pltpu.make_async_copy(emb_hbm, embtbl_vmem, dma_sem.at[2])]
        for cp in cps:
            cp.start()
        for cp in cps:
            cp.wait()

        enc0 = enc_vmem[...]                                  # (Bp, Pp, Ep) bf16
        bp, pp, ep = enc0.shape
        mean_enc = jnp.sum(enc0, axis=1, dtype=f32) * (1.0 / n_pixels)   # (Bp, Ep) f32
        hc0 = (jnp.dot(mean_enc.astype(bf16), w_init_ref[...],
                       preferred_element_type=f32) + b_init_ref[...])    # (Bp, 2Dp)
        h_scr[...] = hc0[:, :d_pad]
        c_scr[...] = hc0[:, d_pad:]
        inp_scr[...] = inp0_ref[...]
        # Hoisted encoder attention projection (+ folded b_dec).
        enc2d = enc0.reshape(bp * pp, ep)
        encatt_scr[...] = (jnp.dot(enc2d, w_enc_ref[...],
                                   preferred_element_type=f32)
                           + b_enc_ref[...]).reshape(bp, pp, a_pad)

    h = h_scr[...]                                            # f32
    c = c_scr[...]                                            # f32
    emb = inp_scr[...]                                        # bf16

    # ---- one wide matmul: attention decoder proj | beta gate | LSTM x/h part ----
    x1 = jnp.concatenate([emb, h.astype(bf16)], axis=1)       # (Bp, Mp+Dp)
    proj = jnp.dot(x1, w1_ref[...], preferred_element_type=f32) + b1_ref[...]
    dec_att = proj[:, :a_pad]                                 # (Bp, Ap)
    gate_pre = proj[:, a_pad:a_pad + e_pad]                   # (Bp, Ep)
    lstm_xh = proj[:, a_pad + e_pad:]                         # (Bp, 4Dp)

    # ---- attention (encoder projection precomputed) ----
    att = jnp.maximum(encatt_scr[...] + dec_att[:, None, :], 0.0)      # relu, f32
    e = jnp.sum(att * w_f_ref[...], axis=-1)                  # (Bp, Pp)
    pix_ids = jax.lax.broadcasted_iota(jnp.int32, e.shape, 1)
    e = jnp.where(pix_ids < n_pixels, e, -1e30)               # mask padded pixels
    e_max = jnp.max(e, axis=1, keepdims=True)
    p = jnp.exp(e - e_max)
    alpha = p / jnp.sum(p, axis=1, keepdims=True)             # exact softmax
    # attention-weighted encoding
    z = jnp.sum(enc_vmem[...] * alpha[:, :, None], axis=1)    # (Bp, Ep) f32

    # ---- sigmoid gate ----
    gate = jax.nn.sigmoid(gate_pre)
    awe = gate * z

    # ---- LSTMCell: fused (Bp, 4*Dp) pre-activation ----
    pre = lstm_xh + jnp.dot(awe.astype(bf16), w_x_att_ref[...],
                            preferred_element_type=f32)
    i_g = jax.nn.sigmoid(pre[:, 0 * d_pad:1 * d_pad])
    f_g = jax.nn.sigmoid(pre[:, 1 * d_pad:2 * d_pad])
    g_g = jnp.tanh(pre[:, 2 * d_pad:3 * d_pad])
    o_g = jax.nn.sigmoid(pre[:, 3 * d_pad:4 * d_pad])
    c_new = f_g * c + i_g * g_g
    h_new = o_g * jnp.tanh(c_new)

    # ---- fc (dropout p = 0.0 -> identity) ----
    logits = (jnp.dot(h_new.astype(bf16), wfc_vmem[...],
                      preferred_element_type=f32) + b_fc_ref[...])

    # ---- masked writes: rows with decode_length <= t keep the zero init ----
    active = dl_ref[...] > t                                  # (Bp, 1) bool
    preds_ref[0] = jnp.where(active, logits, 0.0)
    alphas_ref[0] = jnp.where(active, alpha, 0.0)

    # ---- carry recurrent state ----
    h_scr[...] = h_new
    c_scr[...] = c_new

    # ---- next input = embedding(argmax(logits)) (dropout=0 -> never teacher-forced)
    vocab_ids = jax.lax.broadcasted_iota(jnp.int32, logits.shape, 1)
    vocab_f = vocab_ids.astype(f32)
    masked = jnp.where(vocab_ids < n_vocab, logits, -1e30)    # mask padded vocab
    row_max = jnp.max(masked, axis=1, keepdims=True)
    idx_f = jnp.where(masked == row_max, vocab_f, 1e9)
    first_idx = jnp.min(idx_f, axis=1, keepdims=True)         # argmax, first-index tie-break
    onehot = (vocab_f == first_idx).astype(bf16)              # (Bp, Vp)
    inp_scr[...] = jnp.dot(onehot, embtbl_vmem[...],
                           preferred_element_type=f32).astype(bf16)


@functools.lru_cache(maxsize=None)
def make_decoder(T, Bp, Pp, Ep, Dp, Ap, Mp, Vp, n_pixels, n_vocab):
    kernel = functools.partial(decoder_kernel, n_pixels=n_pixels, n_vocab=n_vocab,
                               d_pad=Dp, a_pad=Ap, e_pad=Ep)
    W1_cols = Ap + Ep + 4 * Dp

    def resident(shape):
        # Constant block index across the grid -> DMA'd once, stays in VMEM.
        return pl.BlockSpec(shape, lambda t, _n=len(shape): (0,) * _n)

    in_specs = [
        resident((Bp, 1)),                      # decode lengths (int32)
        resident((Bp, Mp)),                     # first-token embedding (bf16)
        resident((Mp + Dp, W1_cols)),           # fused [emb|h] weight (bf16)
        resident((1, W1_cols)),                 # fused bias (f32)
        resident((Ep, 4 * Dp)),                 # LSTM attention-input weight (bf16)
        resident((Ep, Ap)),                     # attention encoder proj (bf16)
        resident((1, Ap)),                      # b_enc + b_dec (f32)
        resident((1, Ap)),                      # f_att weight (f32)
        resident((Ep, 2 * Dp)),                 # [w_init_h | w_init_c] (bf16)
        resident((1, 2 * Dp)),                  # [b_init_h | b_init_c] (f32)
        resident((1, Vp)),                      # b_fc (f32)
        pl.BlockSpec(memory_space=pl.ANY),      # encoder features (HBM, bf16)
        pl.BlockSpec(memory_space=pl.ANY),      # fc weight (HBM, bf16)
        pl.BlockSpec(memory_space=pl.ANY),      # embedding table (HBM, bf16)
    ]
    out_specs = (
        pl.BlockSpec((1, Bp, Vp), lambda t: (t, 0, 0)),    # lane-dense per-step block
        pl.BlockSpec((1, Bp, Pp), lambda t: (t, 0, 0)),
    )
    out_shape = (
        jax.ShapeDtypeStruct((T, Bp, Vp), jnp.float32),
        jax.ShapeDtypeStruct((T, Bp, Pp), jnp.float32),
    )
    scratch_shapes = [
        pltpu.VMEM((Bp, Pp, Ep), jnp.bfloat16),   # encoder features (single buffer)
        pltpu.VMEM((Dp, Vp), jnp.bfloat16),       # fc weight
        pltpu.VMEM((Vp, Mp), jnp.bfloat16),       # embedding table
        pltpu.VMEM((Bp, Pp, Ap), jnp.float32),    # hoisted enc_att (f32: v5e-safe VPU path)
        pltpu.VMEM((Bp, Dp), jnp.float32),        # h
        pltpu.VMEM((Bp, Dp), jnp.float32),        # c
        pltpu.VMEM((Bp, Mp), jnp.bfloat16),       # current input embedding
        pltpu.SemaphoreType.DMA((3,)),
    ]

    # ---- explicit VMEM budget: resident inputs (double-buffered by the pipeline),
    # per-step output blocks, and single-buffered scratch, with headroom. Never set
    # below 32 MiB so toy shapes keep the (safe) default behavior.
    def nbytes(shape, dtype):
        return int(np.prod(shape)) * jnp.dtype(dtype).itemsize

    resident_bytes = (
        nbytes((Bp, 1), jnp.int32) + nbytes((Bp, Mp), jnp.bfloat16)
        + nbytes((Mp + Dp, W1_cols), jnp.bfloat16) + nbytes((1, W1_cols), jnp.float32)
        + nbytes((Ep, 4 * Dp), jnp.bfloat16)
        + nbytes((Ep, Ap), jnp.bfloat16) + 2 * nbytes((1, Ap), jnp.float32)
        + nbytes((Ep, 2 * Dp), jnp.bfloat16) + nbytes((1, 2 * Dp), jnp.float32)
        + nbytes((1, Vp), jnp.float32))
    out_bytes = nbytes((1, Bp, Vp), jnp.float32) + nbytes((1, Bp, Pp), jnp.float32)
    scratch_bytes = (nbytes((Bp, Pp, Ep), jnp.bfloat16) + nbytes((Dp, Vp), jnp.bfloat16)
                     + nbytes((Vp, Mp), jnp.bfloat16) + nbytes((Bp, Pp, Ap), jnp.float32)
                     + 2 * nbytes((Bp, Dp), jnp.float32) + nbytes((Bp, Mp), jnp.bfloat16))
    vmem_bytes = int(1.5 * (2 * resident_bytes + 2 * out_bytes + scratch_bytes)) + (4 << 20)
    vmem_bytes = min(max(vmem_bytes, 32 << 20), 128 << 20)

    return pl.pallas_call(
        kernel,
        out_shape=out_shape,
        grid_spec=pltpu.PrefetchScalarGridSpec(
            num_scalar_prefetch=0,
            grid=(T,),
            in_specs=in_specs,
            out_specs=out_specs,
            scratch_shapes=scratch_shapes),
        compiler_params=pltpu.CompilerParams(
            dimension_semantics=("arbitrary",),      # sequential recurrence over time
            vmem_limit_bytes=vmem_bytes),
    )


# ----------------------------------------------------------------------------
# Deterministic parameter construction (synthetic; matches the module's shapes).
# Weights are stored (in, out) so kernels compute y = x @ W + b, zero-padded to
# aligned feature dims, pre-fused, and cast to bf16 (biases stay f32).
# ----------------------------------------------------------------------------
def init_params(key, E, D, A, M, V, Ep, Dp, Ap, Mp, Vp):
    ks = jax.random.split(key, 20)
    bf16 = jnp.bfloat16

    def uni(k, shape, scale):
        return jax.random.uniform(k, shape, jnp.float32, -scale, scale)

    # Attention
    w_enc = uni(ks[0], (E, A), 1.0 / math.sqrt(E))
    b_enc = uni(ks[1], (1, A), 1.0 / math.sqrt(E))
    w_dec = uni(ks[2], (D, A), 1.0 / math.sqrt(D))
    b_dec = uni(ks[3], (1, A), 1.0 / math.sqrt(D))
    w_f = uni(ks[4], (1, A), 1.0 / math.sqrt(A))
    # NOTE: f_att's bias shifts every pixel score equally -> cancels in softmax.
    # Embedding (uniform(-0.1, 0.1) like the module)
    emb_tbl = uni(ks[5], (V, M), 0.1)
    # LSTMCell fused gate weights (i, f, g, o); each gate padded to Dp columns so
    # in-kernel lane slices are 128-aligned.  b_ih + b_hh combined.
    kk = 1.0 / math.sqrt(D)
    w_ih = uni(ks[6], (M + E, 4 * D), kk)
    w_hh = uni(ks[7], (D, 4 * D), kk)
    b_lstm = uni(ks[8], (1, 4 * D), kk) + uni(ks[9], (1, 4 * D), kk)

    def fuse_gates(w, rows_pad):
        return jnp.concatenate(
            [_pad2(w[:, g * D:(g + 1) * D], (rows_pad, Dp)) for g in range(4)], axis=1)

    w_x_emb_p = fuse_gates(w_ih[:M], Mp)          # (Mp, 4Dp)
    w_x_att_p = fuse_gates(w_ih[M:], Ep)          # (Ep, 4Dp)
    w_hh_p = fuse_gates(w_hh, Dp)                 # (Dp, 4Dp)
    b_lstm_p = fuse_gates(b_lstm, 1)              # (1, 4Dp)

    # Fused [emb | h] projection: rows [emb(Mp) | h(Dp)], cols [att(Ap) | beta(Ep) | 4Dp]
    w_dec_p = _pad2(w_dec, (Dp, Ap))
    w_beta_p = _pad2(uni(ks[14], (D, E), 1.0 / math.sqrt(D)), (Dp, Ep))
    b_beta_p = _pad2(uni(ks[15], (1, E), 1.0 / math.sqrt(D)), (1, Ep))
    top = jnp.concatenate([jnp.zeros((Mp, Ap), jnp.float32),
                           jnp.zeros((Mp, Ep), jnp.float32), w_x_emb_p], axis=1)
    bot = jnp.concatenate([w_dec_p, w_beta_p, w_hh_p], axis=1)
    w1 = jnp.concatenate([top, bot], axis=0)                       # (Mp+Dp, Ap+Ep+4Dp)
    b1 = jnp.concatenate([jnp.zeros((1, Ap), jnp.float32), b_beta_p, b_lstm_p], axis=1)

    # init_h / init_c fused
    w_init = jnp.concatenate(
        [_pad2(uni(ks[10], (E, D), 1.0 / math.sqrt(E)), (Ep, Dp)),
         _pad2(uni(ks[12], (E, D), 1.0 / math.sqrt(E)), (Ep, Dp))], axis=1)
    b_init = jnp.concatenate(
        [_pad2(uni(ks[11], (1, D), 1.0 / math.sqrt(E)), (1, Dp)),
         _pad2(uni(ks[13], (1, D), 1.0 / math.sqrt(E)), (1, Dp))], axis=1)

    # fc (uniform(-0.1, 0.1), bias 0, like the module)
    w_fc = _pad2(uni(ks[16], (D, V), 0.1), (Dp, Vp))
    b_fc = jnp.zeros((1, Vp), jnp.float32)

    return {
        'w1': w1.astype(bf16),
        'b1': b1,
        'w_x_att': w_x_att_p.astype(bf16),
        'w_enc': _pad2(w_enc, (Ep, Ap)).astype(bf16),
        'b_enc': _pad2(b_enc + b_dec, (1, Ap)),        # b_dec folded (only used inside relu)
        'w_f': _pad2(w_f, (1, Ap)),
        'w_init': w_init.astype(bf16),
        'b_init': b_init,
        'b_fc': b_fc,
        'w_fc': w_fc.astype(bf16),
        'embedding': _pad2(emb_tbl, (Vp, Mp)).astype(bf16),
    }


# ----------------------------------------------------------------------------
# Full forward pass (mirrors DecoderWithAttention.forward, dropout = 0.0)
# ----------------------------------------------------------------------------
def decoder_with_attention_forward(params, encoder_out, encoded_captions,
                                   caption_lengths, dims):
    E, D, A, M, V = dims['E'], dims['D'], dims['A'], dims['M'], dims['V']
    Ep, Dp, Ap, Mp, Vp = (_round_up(x, 128) for x in (E, D, A, M, V))

    B = encoder_out.shape[0]
    enc = jnp.asarray(encoder_out).reshape(B, -1, E)        # (B, P, E)
    P = enc.shape[1]
    Pp = _round_up(P, 8)          # pixel dim is a sublane dim for enc/encatt -> pad to 8
    Bp = _round_up(B, 8)

    # Sort by caption length, descending (host side, like torch.sort).
    cap_len = np.asarray(caption_lengths).reshape(-1)
    sort_ind = np.argsort(-cap_len, kind='stable')
    cap_len_sorted = cap_len[sort_ind]
    enc = enc[jnp.asarray(sort_ind)]
    caps_sorted = jnp.asarray(encoded_captions)[jnp.asarray(sort_ind)]

    decode_lengths = [int(l) - 1 for l in cap_len_sorted]
    T = max(decode_lengths)

    # Pad once to fixed aligned shapes; big read-only tensors go to the kernel as bf16.
    enc_p = jnp.pad(enc.astype(jnp.float32),
                    ((0, Bp - B), (0, Pp - P), (0, Ep - E))).astype(jnp.bfloat16)
    inp0 = params['embedding'][caps_sorted[:, 0]]           # (B, Mp) bf16, one-time gather
    inp0 = jnp.pad(inp0, ((0, Bp - B), (0, 0)))
    dl = np.zeros((Bp, 1), np.int32)
    dl[:B, 0] = np.asarray(decode_lengths, np.int32)
    dl = jnp.asarray(dl)

    decoder = make_decoder(T, Bp, Pp, Ep, Dp, Ap, Mp, Vp, P, V)
    preds_p, alphas_p = decoder(
        dl, inp0,
        params['w1'], params['b1'], params['w_x_att'],
        params['w_enc'], params['b_enc'], params['w_f'],
        params['w_init'], params['b_init'], params['b_fc'],
        enc_p, params['w_fc'], params['embedding'])

    predictions = jnp.transpose(preds_p, (1, 0, 2))[:B, :, :V]
    alphas = jnp.transpose(alphas_p, (1, 0, 2))[:B, :, :P]
    return predictions, caps_sorted, decode_lengths, alphas, jnp.asarray(sort_ind)


if __name__ == "__main__":
    # Small shapes consistent with the module's forward contract.
    cfg = dict(decoder_dim=32, attention_dim=32, embed_dim=16,
               vocab_size=64, dropout=0.0)
    encoder_dim = 32
    B, enc_size, max_cap_len = 2, 4, 8

    key = jax.random.PRNGKey(0)
    k_param, k_enc, k_cap = jax.random.split(key, 3)

    dims = dict(E=encoder_dim, D=cfg['decoder_dim'], A=cfg['attention_dim'],
                M=cfg['embed_dim'], V=cfg['vocab_size'])
    Ep, Dp, Ap, Mp, Vp = (_round_up(dims[k], 128) for k in ('E', 'D', 'A', 'M', 'V'))
    params = init_params(k_param, dims['E'], dims['D'], dims['A'], dims['M'],
                         dims['V'], Ep, Dp, Ap, Mp, Vp)

    encoder_out = jax.random.normal(
        k_enc, (B, enc_size, enc_size, encoder_dim), jnp.float32)
    encoded_captions = jax.random.randint(
        k_cap, (B, max_cap_len), 0, cfg['vocab_size'], dtype=jnp.int32)
    caption_lengths = np.array([[6], [8]], dtype=np.int32)

    preds, caps_sorted, dec_lens, alphas, sort_ind = decoder_with_attention_forward(
        params, encoder_out, encoded_captions, caption_lengths, dims)

    jax.block_until_ready(preds)
    jax.block_until_ready(alphas)
    assert preds.shape == (B, max(dec_lens), cfg['vocab_size'])
    assert alphas.shape == (B, max(dec_lens), enc_size * enc_size)
    assert bool(jnp.all(jnp.isfinite(preds)))
    assert bool(jnp.all(jnp.isfinite(alphas)))
    print("KERNEL_OK")
</pallas_src>

<mosaic_0001>
module attributes {stable_mosaic.version = 11 : i64} {
  func.func @decoder_kernel(%arg0: i32, %arg1: memref<8x1xi32, #tpu.memory_space<vmem>>, %arg2: memref<8x128xbf16, #tpu.memory_space<vmem>>, %arg3: memref<256x768xbf16, #tpu.memory_space<vmem>>, %arg4: memref<1x768xf32, #tpu.memory_space<vmem>>, %arg5: memref<128x512xbf16, #tpu.memory_space<vmem>>, %arg6: memref<128x128xbf16, #tpu.memory_space<vmem>>, %arg7: memref<1x128xf32, #tpu.memory_space<vmem>>, %arg8: memref<1x128xf32, #tpu.memory_space<vmem>>, %arg9: memref<128x256xbf16, #tpu.memory_space<vmem>>, %arg10: memref<1x256xf32, #tpu.memory_space<vmem>>, %arg11: memref<1x128xf32, #tpu.memory_space<vmem>>, %arg12: memref<8x16x128xbf16, #tpu.memory_space<any>>, %arg13: memref<128x128xbf16, #tpu.memory_space<any>>, %arg14: memref<128x128xbf16, #tpu.memory_space<any>>, %arg15: memref<1x8x128xf32, #tpu.memory_space<vmem>>, %arg16: memref<1x8x16xf32, #tpu.memory_space<vmem>>, %arg17: memref<8x16x128xbf16, #tpu.memory_space<vmem>>, %arg18: memref<128x128xbf16, #tpu.memory_space<vmem>>, %arg19: memref<128x128xbf16, #tpu.memory_space<vmem>>, %arg20: memref<8x16x128xf32, #tpu.memory_space<vmem>>, %arg21: memref<8x128xf32, #tpu.memory_space<vmem>>, %arg22: memref<8x128xf32, #tpu.memory_space<vmem>>, %arg23: memref<8x128xbf16, #tpu.memory_space<vmem>>, %arg24: memref<3x!tpu.dma_semaphore, #tpu.memory_space<semaphore_mem>>) attributes {dimension_semantics = [#tpu.dimension_semantics<arbitrary>], iteration_bounds = array<i64: 7>, scalar_prefetch = 0 : i64, scratch_operands = 8 : i64, tpu.core_type = #tpu.core_type<tc>, window_params = [{pipeline_mode = #tpu.pipeline_mode<synchronous>, transform_indices = @transform_0, window_bounds = array<i64: 8, 1>}, {pipeline_mode = #tpu.pipeline_mode<synchronous>, transform_indices = @transform_1, window_bounds = array<i64: 8, 128>}, {pipeline_mode = #tpu.pipeline_mode<synchronous>, transform_indices = @transform_2, window_bounds = array<i64: 256, 768>}, {pipeline_mode = #tpu.pipeline_mode<synchronous>, transform_indices = @transform_3, window_bounds = array<i64: 1, 768>}, {pipeline_mode = #tpu.pipeline_mode<synchronous>, transform_indices = @transform_4, window_bounds = array<i64: 128, 512>}, {pipeline_mode = #tpu.pipeline_mode<synchronous>, transform_indices = @transform_5, window_bounds = array<i64: 128, 128>}, {pipeline_mode = #tpu.pipeline_mode<synchronous>, transform_indices = @transform_6, window_bounds = array<i64: 1, 128>}, {pipeline_mode = #tpu.pipeline_mode<synchronous>, transform_indices = @transform_7, window_bounds = array<i64: 1, 128>}, {pipeline_mode = #tpu.pipeline_mode<synchronous>, transform_indices = @transform_8, window_bounds = array<i64: 128, 256>}, {pipeline_mode = #tpu.pipeline_mode<synchronous>, transform_indices = @transform_9, window_bounds = array<i64: 1, 256>}, {pipeline_mode = #tpu.pipeline_mode<synchronous>, transform_indices = @transform_10, window_bounds = array<i64: 1, 128>}, {}, {}, {}, {transform_indices = @transform_14, window_bounds = array<i64: 1, 8, 128>}, {transform_indices = @transform_15, window_bounds = array<i64: 1, 8, 16>}]} {
    %c0_i32 = arith.constant 0 : i32
    %0 = arith.cmpi eq, %arg0, %c0_i32 : i32
    %1 = arith.extui %0 : i1 to i32
    %c0_i32_0 = arith.constant 0 : i32
    %2 = arith.cmpi ne, %1, %c0_i32_0 : i32
    scf.if %2 {
      %c0_i32_59 = arith.constant 0 : i32
      %130 = tpu.memref_slice %arg24[%c0_i32_59] : memref<3x!tpu.dma_semaphore, #tpu.memory_space<semaphore_mem>> -> memref<1x!tpu.dma_semaphore, #tpu.memory_space<semaphore_mem>>
      %131 = tpu.memref_squeeze %130 : memref<1x!tpu.dma_semaphore, #tpu.memory_space<semaphore_mem>> -> memref<!tpu.dma_semaphore, #tpu.memory_space<semaphore_mem>>
      tpu.enqueue_dma source(%arg12 : memref<8x16x128xbf16, #tpu.memory_space<any>>) target(%arg17 : memref<8x16x128xbf16, #tpu.memory_space<vmem>>) target_semaphore(%131 : memref<!tpu.dma_semaphore, #tpu.memory_space<semaphore_mem>>)
      %c1_i32 = arith.constant 1 : i32
      %132 = tpu.memref_slice %arg24[%c1_i32] : memref<3x!tpu.dma_semaphore, #tpu.memory_space<semaphore_mem>> -> memref<1x!tpu.dma_semaphore, #tpu.memory_space<semaphore_mem>>
      %133 = tpu.memref_squeeze %132 : memref<1x!tpu.dma_semaphore, #tpu.memory_space<semaphore_mem>> -> memref<!tpu.dma_semaphore, #tpu.memory_space<semaphore_mem>>
      tpu.enqueue_dma source(%arg13 : memref<128x128xbf16, #tpu.memory_space<any>>) target(%arg18 : memref<128x128xbf16, #tpu.memory_space<vmem>>) target_semaphore(%133 : memref<!tpu.dma_semaphore, #tpu.memory_space<semaphore_mem>>)
      %c2_i32 = arith.constant 2 : i32
      %134 = tpu.memref_slice %arg24[%c2_i32] : memref<3x!tpu.dma_semaphore, #tpu.memory_space<semaphore_mem>> -> memref<1x!tpu.dma_semaphore, #tpu.memory_space<semaphore_mem>>
      %135 = tpu.memref_squeeze %134 : memref<1x!tpu.dma_semaphore, #tpu.memory_space<semaphore_mem>> -> memref<!tpu.dma_semaphore, #tpu.memory_space<semaphore_mem>>
      tpu.enqueue_dma source(%arg14 : memref<128x128xbf16, #tpu.memory_space<any>>) target(%arg19 : memref<128x128xbf16, #tpu.memory_space<vmem>>) target_semaphore(%135 : memref<!tpu.dma_semaphore, #tpu.memory_space<semaphore_mem>>)
      %c0_i32_60 = arith.constant 0 : i32
      %136 = tpu.memref_slice %arg24[%c0_i32_60] : memref<3x!tpu.dma_semaphore, #tpu.memory_space<semaphore_mem>> -> memref<1x!tpu.dma_semaphore, #tpu.memory_space<semaphore_mem>>
      %137 = tpu.memref_squeeze %136 : memref<1x!tpu.dma_semaphore, #tpu.memory_space<semaphore_mem>> -> memref<!tpu.dma_semaphore, #tpu.memory_space<semaphore_mem>>
      tpu.wait_dma2 semaphore(%137 : memref<!tpu.dma_semaphore, #tpu.memory_space<semaphore_mem>>) src(%arg12 : memref<8x16x128xbf16, #tpu.memory_space<any>>) dst(%arg17 : memref<8x16x128xbf16, #tpu.memory_space<vmem>>)
      %c1_i32_61 = arith.constant 1 : i32
      %138 = tpu.memref_slice %arg24[%c1_i32_61] : memref<3x!tpu.dma_semaphore, #tpu.memory_space<semaphore_mem>> -> memref<1x!tpu.dma_semaphore, #tpu.memory_space<semaphore_mem>>
      %139 = tpu.memref_squeeze %138 : memref<1x!tpu.dma_semaphore, #tpu.memory_space<semaphore_mem>> -> memref<!tpu.dma_semaphore, #tpu.memory_space<semaphore_mem>>
      tpu.wait_dma2 semaphore(%139 : memref<!tpu.dma_semaphore, #tpu.memory_space<semaphore_mem>>) src(%arg13 : memref<128x128xbf16, #tpu.memory_space<any>>) dst(%arg18 : memref<128x128xbf16, #tpu.memory_space<vmem>>)
      %c2_i32_62 = arith.constant 2 : i32
      %140 = tpu.memref_slice %arg24[%c2_i32_62] : memref<3x!tpu.dma_semaphore, #tpu.memory_space<semaphore_mem>> -> memref<1x!tpu.dma_semaphore, #tpu.memory_space<semaphore_mem>>
      %141 = tpu.memref_squeeze %140 : memref<1x!tpu.dma_semaphore, #tpu.memory_space<semaphore_mem>> -> memref<!tpu.dma_semaphore, #tpu.memory_space<semaphore_mem>>
      tpu.wait_dma2 semaphore(%141 : memref<!tpu.dma_semaphore, #tpu.memory_space<semaphore_mem>>) src(%arg14 : memref<128x128xbf16, #tpu.memory_space<any>>) dst(%arg19 : memref<128x128xbf16, #tpu.memory_space<vmem>>)
      %c0_63 = arith.constant 0 : index
      %c0_64 = arith.constant 0 : index
      %c0_65 = arith.constant 0 : index
      %142 = vector.load %arg17[%c0_63, %c0_64, %c0_65] : memref<8x16x128xbf16, #tpu.memory_space<vmem>>, vector<8x16x128xbf16>
      %143 = arith.extf %142 : vector<8x16x128xbf16> to vector<8x16x128xf32>
      %cst_66 = arith.constant dense<0.000000e+00> : vector<8x128xf32>
      %144 = vector.multi_reduction <add>, %143, %cst_66 [1] : vector<8x16x128xf32> to vector<8x128xf32>
      %cst_67 = arith.constant 6.250000e-02 : f32
      %145 = vector.broadcast %cst_67 : f32 to vector<8x128xf32>
      %146 = arith.mulf %144, %145 : vector<8x128xf32>
      %147 = arith.truncf %146 : vector<8x128xf32> to vector<8x128xbf16>
      %c0_68 = arith.constant 0 : index
      %c0_69 = arith.constant 0 : index
      %148 = vector.load %arg9[%c0_68, %c0_69] : memref<128x256xbf16, #tpu.memory_space<vmem>>, vector<128x256xbf16>
      %cst_70 = arith.constant dense<0.000000e+00> : vector<8x256xf32>
      %149 = tpu.matmul %147, %148, %cst_70 {dimension_numbers = #tpu.dot_dimension_numbers<[1], [0], [0], [1], [0, 0, 1, 1], [], []>} : vector<8x128xbf16>, vector<128x256xbf16>, vector<8x256xf32> -> vector<8x256xf32>
      %c0_71 = arith.constant 0 : index
      %c0_72 = arith.constant 0 : index
      %150 = vector.load %arg10[%c0_71, %c0_72] : memref<1x256xf32, #tpu.memory_space<vmem>>, vector<1x256xf32>
      %151 = vector.broadcast %150 : vector<1x256xf32> to vector<8x256xf32>
      %152 = arith.addf %149, %151 : vector<8x256xf32>
      %153 = vector.extract_strided_slice %152 {offsets = [0, 0], sizes = [8, 128], strides = [1, 1]} : vector<8x256xf32> to vector<8x128xf32>
      %c0_73 = arith.constant 0 : index
      %c0_74 = arith.constant 0 : index
      %154 = vector.load %arg21[%c0_73, %c0_74] : memref<8x128xf32, #tpu.memory_space<vmem>>, vector<8x128xf32>
      tpu.vector_store %arg21[%c0_73, %c0_74], %153 {strides = array<i32>} : memref<8x128xf32, #tpu.memory_space<vmem>>, vector<8x128xf32>,
      %155 = vector.extract_strided_slice %152 {offsets = [0, 128], sizes = [8, 128], strides = [1, 1]} : vector<8x256xf32> to vector<8x128xf32>
      %c0_75 = arith.constant 0 : index
      %c0_76 = arith.constant 0 : index
      %156 = vector.load %arg22[%c0_75, %c0_76] : memref<8x128xf32, #tpu.memory_space<vmem>>, vector<8x128xf32>
      tpu.vector_store %arg22[%c0_75, %c0_76], %155 {strides = array<i32>} : memref<8x128xf32, #tpu.memory_space<vmem>>, vector<8x128xf32>,
      %c0_77 = arith.constant 0 : index
      %c0_78 = arith.constant 0 : index
      %157 = vector.load %arg2[%c0_77, %c0_78] : memref<8x128xbf16, #tpu.memory_space<vmem>>, vector<8x128xbf16>
      %c0_79 = arith.constant 0 : index
      %c0_80 = arith.constant 0 : index
      %158 = vector.load %arg23[%c0_79, %c0_80] : memref<8x128xbf16, #tpu.memory_space<vmem>>, vector<8x128xbf16>
      tpu.vector_store %arg23[%c0_79, %c0_80], %157 {strides = array<i32>} : memref<8x128xbf16, #tpu.memory_space<vmem>>, vector<8x128xbf16>,
      %159 = vector.shape_cast %142 : vector<8x16x128xbf16> to vector<128x128xbf16>
      %c0_81 = arith.constant 0 : index
      %c0_82 = arith.constant 0 : index
      %160 = vector.load %arg6[%c0_81, %c0_82] : memref<128x128xbf16, #tpu.memory_space<vmem>>, vector<128x128xbf16>
      %cst_83 = arith.constant dense<0.000000e+00> : vector<128x128xf32>
      %161 = tpu.matmul %159, %160, %cst_83 {dimension_numbers = #tpu.dot_dimension_numbers<[1], [0], [0], [1], [0, 0, 1, 1], [], []>} : vector<128x128xbf16>, vector<128x128xbf16>, vector<128x128xf32> -> vector<128x128xf32>
      %c0_84 = arith.constant 0 : index
      %c0_85 = arith.constant 0 : index
      %162 = vector.load %arg7[%c0_84, %c0_85] : memref<1x128xf32, #tpu.memory_space<vmem>>, vector<1x128xf32>
      %163 = vector.broadcast %162 : vector<1x128xf32> to vector<128x128xf32>
      %164 = arith.addf %161, %163 : vector<128x128xf32>
      %165 = vector.shape_cast %164 : vector<128x128xf32> to vector<8x16x128xf32>
      %c0_86 = arith.constant 0 : index
      %c0_87 = arith.constant 0 : index
      %c0_88 = arith.constant 0 : index
      %166 = vector.load %arg20[%c0_86, %c0_87, %c0_88] : memref<8x16x128xf32, #tpu.memory_space<vmem>>, vector<8x16x128xf32>
      tpu.vector_store %arg20[%c0_86, %c0_87, %c0_88], %165 {strides = array<i32>} : memref<8x16x128xf32, #tpu.memory_space<vmem>>, vector<8x16x128xf32>,
    } else {
    }
    %c0 = arith.constant 0 : index
    %c0_1 = arith.constant 0 : index
    %3 = vector.load %arg21[%c0, %c0_1] : memref<8x128xf32, #tpu.memory_space<vmem>>, vector<8x128xf32>
    %c0_2 = arith.constant 0 : index
    %c0_3 = arith.constant 0 : index
    %4 = vector.load %arg22[%c0_2, %c0_3] : memref<8x128xf32, #tpu.memory_space<vmem>>, vector<8x128xf32>
    %c0_4 = arith.constant 0 : index
    %c0_5 = arith.constant 0 : index
    %5 = vector.load %arg23[%c0_4, %c0_5] : memref<8x128xbf16, #tpu.memory_space<vmem>>, vector<8x128xbf16>
    %6 = arith.truncf %3 : vector<8x128xf32> to vector<8x128xbf16>
    %7 = tpu.concatenate %5, %6 in 1 : vector<8x128xbf16>, vector<8x128xbf16> -> vector<8x256xbf16>
    %c0_6 = arith.constant 0 : index
    %c0_7 = arith.constant 0 : index
    %8 = vector.load %arg3[%c0_6, %c0_7] : memref<256x768xbf16, #tpu.memory_space<vmem>>, vector<256x768xbf16>
    %cst = arith.constant dense<0.000000e+00> : vector<8x768xf32>
    %9 = tpu.matmul %7, %8, %cst {dimension_numbers = #tpu.dot_dimension_numbers<[1], [0], [0], [1], [0, 0, 1, 1], [], []>} : vector<8x256xbf16>, vector<256x768xbf16>, vector<8x768xf32> -> vector<8x768xf32>
    %c0_8 = arith.constant 0 : index
    %c0_9 = arith.constant 0 : index
    %10 = vector.load %arg4[%c0_8, %c0_9] : memref<1x768xf32, #tpu.memory_space<vmem>>, vector<1x768xf32>
    %11 = vector.broadcast %10 : vector<1x768xf32> to vector<8x768xf32>
    %12 = arith.addf %9, %11 : vector<8x768xf32>
    %13 = vector.extract_strided_slice %12 {offsets = [0, 0], sizes = [8, 128], strides = [1, 1]} : vector<8x768xf32> to vector<8x128xf32>
    %14 = vector.extract_strided_slice %12 {offsets = [0, 128], sizes = [8, 128], strides = [1, 1]} : vector<8x768xf32> to vector<8x128xf32>
    %15 = vector.extract_strided_slice %12 {offsets = [0, 256], sizes = [8, 512], strides = [1, 1]} : vector<8x768xf32> to vector<8x512xf32>
    %c0_10 = arith.constant 0 : index
    %c0_11 = arith.constant 0 : index
    %c0_12 = arith.constant 0 : index
    %16 = vector.load %arg20[%c0_10, %c0_11, %c0_12] : memref<8x16x128xf32, #tpu.memory_space<vmem>>, vector<8x16x128xf32>
    %17 = vector.shape_cast %13 : vector<8x128xf32> to vector<8x1x128xf32>
    %18 = vector.broadcast %17 : vector<8x1x128xf32> to vector<8x16x128xf32>
    %19 = arith.addf %16, %18 : vector<8x16x128xf32>
    %cst_13 = arith.constant 0.000000e+00 : f32
    %20 = vector.broadcast %cst_13 : f32 to vector<8x16x128xf32>
    %21 = arith.maximumf %19, %20 : vector<8x16x128xf32>
    %c0_14 = arith.constant 0 : index
    %c0_15 = arith.constant 0 : index
    %22 = vector.load %arg8[%c0_14, %c0_15] : memref<1x128xf32, #tpu.memory_space<vmem>>, vector<1x128xf32>
    %23 = vector.shape_cast %22 : vector<1x128xf32> to vector<1x1x128xf32>
    %24 = vector.broadcast %23 : vector<1x1x128xf32> to vector<8x16x128xf32>
    %25 = arith.mulf %21, %24 : vector<8x16x128xf32>
    %cst_16 = arith.constant dense<0.000000e+00> : vector<8x16xf32>
    %26 = vector.multi_reduction <add>, %25, %cst_16 [2] : vector<8x16x128xf32> to vector<8x16xf32>
    %27 = tpu.iota {dimensions = array<i32: 1>} : vector<8x16xi32>
    %c16_i32 = arith.constant 16 : i32
    %28 = vector.broadcast %c16_i32 : i32 to vector<8x16xi32>
    %29 = arith.cmpi slt, %27, %28 : vector<8x16xi32>
    %cst_17 = arith.constant -1.000000e+30 : f32
    %30 = vector.broadcast %cst_17 : f32 to vector<8x16xf32>
    %31 = arith.select %29, %26, %30 : vector<8x16xi1>, vector<8x16xf32>
    %cst_18 = arith.constant dense<0xFF800000> : vector<8xf32>
    %32 = vector.multi_reduction <maximumf>, %31, %cst_18 [1] : vector<8x16xf32> to vector<8xf32>
    %33 = vector.shape_cast %32 : vector<8xf32> to vector<8x1xf32>
    %34 = vector.broadcast %33 : vector<8x1xf32> to vector<8x16xf32>
    %35 = arith.subf %31, %34 : vector<8x16xf32>
    %36 = math.exp %35 : vector<8x16xf32>
    %cst_19 = arith.constant dense<0.000000e+00> : vector<8xf32>
    %37 = vector.multi_reduction <add>, %36, %cst_19 [1] : vector<8x16xf32> to vector<8xf32>
    %38 = vector.shape_cast %37 : vector<8xf32> to vector<8x1xf32>
    %39 = vector.broadcast %38 : vector<8x1xf32> to vector<8x16xf32>
    %40 = arith.divf %36, %39 : vector<8x16xf32>
    %c0_20 = arith.constant 0 : index
    %c0_21 = arith.constant 0 : index
    %c0_22 = arith.constant 0 : index
    %41 = vector.load %arg17[%c0_20, %c0_21, %c0_22] : memref<8x16x128xbf16, #tpu.memory_space<vmem>>, vector<8x16x128xbf16>
    %42 = vector.shape_cast %40 : vector<8x16xf32> to vector<8x16x1xf32>
    %43 = arith.extf %41 : vector<8x16x128xbf16> to vector<8x16x128xf32>
    %44 = vector.broadcast %42 : vector<8x16x1xf32> to vector<8x16x128xf32>
    %45 = arith.mulf %43, %44 : vector<8x16x128xf32>
    %cst_23 = arith.constant dense<0.000000e+00> : vector<8x128xf32>
    %46 = vector.multi_reduction <add>, %45, %cst_23 [1] : vector<8x16x128xf32> to vector<8x128xf32>
    %47 = arith.negf %14 : vector<8x128xf32>
    %48 = math.exp %47 : vector<8x128xf32>
    %cst_24 = arith.constant 1.000000e+00 : f32
    %49 = vector.broadcast %cst_24 : f32 to vector<8x128xf32>
    %50 = arith.addf %49, %48 : vector<8x128xf32>
    %51 = arith.divf %49, %50 : vector<8x128xf32>
    %52 = arith.mulf %51, %46 : vector<8x128xf32>
    %53 = arith.truncf %52 : vector<8x128xf32> to vector<8x128xbf16>
    %c0_25 = arith.constant 0 : index
    %c0_26 = arith.constant 0 : index
    %54 = vector.load %arg5[%c0_25, %c0_26] : memref<128x512xbf16, #tpu.memory_space<vmem>>, vector<128x512xbf16>
    %cst_27 = arith.constant dense<0.000000e+00> : vector<8x512xf32>
    %55 = tpu.matmul %53, %54, %cst_27 {dimension_numbers = #tpu.dot_dimension_numbers<[1], [0], [0], [1], [0, 0, 1, 1], [], []>} : vector<8x128xbf16>, vector<128x512xbf16>, vector<8x512xf32> -> vector<8x512xf32>
    %56 = arith.addf %15, %55 : vector<8x512xf32>
    %57 = vector.extract_strided_slice %56 {offsets = [0, 0], sizes = [8, 128], strides = [1, 1]} : vector<8x512xf32> to vector<8x128xf32>
    %58 = arith.negf %57 : vector<8x128xf32>
    %59 = math.exp %58 : vector<8x128xf32>
    %cst_28 = arith.constant 1.000000e+00 : f32
    %60 = vector.broadcast %cst_28 : f32 to vector<8x128xf32>
    %61 = arith.addf %60, %59 : vector<8x128xf32>
    %62 = arith.divf %60, %61 : vector<8x128xf32>
    %63 = vector.extract_strided_slice %56 {offsets = [0, 128], sizes = [8, 128], strides = [1, 1]} : vector<8x512xf32> to vector<8x128xf32>
    %64 = arith.negf %63 : vector<8x128xf32>
    %65 = math.exp %64 : vector<8x128xf32>
    %cst_29 = arith.constant 1.000000e+00 : f32
    %66 = vector.broadcast %cst_29 : f32 to vector<8x128xf32>
    %67 = arith.addf %66, %65 : vector<8x128xf32>
    %68 = arith.divf %66, %67 : vector<8x128xf32>
    %69 = vector.extract_strided_slice %56 {offsets = [0, 256], sizes = [8, 128], strides = [1, 1]} : vector<8x512xf32> to vector<8x128xf32>
    %70 = math.tanh %69 : vector<8x128xf32>
    %71 = vector.extract_strided_slice %56 {offsets = [0, 384], sizes = [8, 128], strides = [1, 1]} : vector<8x512xf32> to vector<8x128xf32>
    %72 = arith.negf %71 : vector<8x128xf32>
    %73 = math.exp %72 : vector<8x128xf32>
    %cst_30 = arith.constant 1.000000e+00 : f32
    %74 = vector.broadcast %cst_30 : f32 to vector<8x128xf32>
    %75 = arith.addf %74, %73 : vector<8x128xf32>
    %76 = arith.divf %74, %75 : vector<8x128xf32>
    %77 = arith.mulf %68, %4 : vector<8x128xf32>
    %78 = arith.mulf %62, %70 : vector<8x128xf32>
    %79 = arith.addf %77, %78 : vector<8x128xf32>
    %80 = math.tanh %79 : vector<8x128xf32>
    %81 = arith.mulf %76, %80 : vector<8x128xf32>
    %82 = arith.truncf %81 : vector<8x128xf32> to vector<8x128xbf16>
    %c0_31 = arith.constant 0 : index
    %c0_32 = arith.constant 0 : index
    %83 = vector.load %arg18[%c0_31, %c0_32] : memref<128x128xbf16, #tpu.memory_space<vmem>>, vector<128x128xbf16>
    %cst_33 = arith.constant dense<0.000000e+00> : vector<8x128xf32>
    %84 = tpu.matmul %82, %83, %cst_33 {dimension_numbers = #tpu.dot_dimension_numbers<[1], [0], [0], [1], [0, 0, 1, 1], [], []>} : vector<8x128xbf16>, vector<128x128xbf16>, vector<8x128xf32> -> vector<8x128xf32>
    %c0_34 = arith.constant 0 : index
    %c0_35 = arith.constant 0 : index
    %85 = vector.load %arg11[%c0_34, %c0_35] : memref<1x128xf32, #tpu.memory_space<vmem>>, vector<1x128xf32>
    %86 = vector.broadcast %85 : vector<1x128xf32> to vector<8x128xf32>
    %87 = arith.addf %84, %86 : vector<8x128xf32>
    %c0_36 = arith.constant 0 : index
    %c0_37 = arith.constant 0 : index
    %88 = vector.load %arg1[%c0_36, %c0_37] : memref<8x1xi32, #tpu.memory_space<vmem>>, vector<8x1xi32>
    %89 = vector.broadcast %arg0 : i32 to vector<8x1xi32>
    %90 = arith.cmpi sgt, %88, %89 : vector<8x1xi32>
    %cst_38 = arith.constant 0.000000e+00 : f32
    %91 = vector.shape_cast %90 : vector<8x1xi1> to vector<8x1xi1>
    %92 = vector.broadcast %91 : vector<8x1xi1> to vector<8x128xi1>
    %93 = vector.broadcast %cst_38 : f32 to vector<8x128xf32>
    %94 = arith.select %92, %87, %93 : vector<8x128xi1>, vector<8x128xf32>
    %c0_39 = arith.constant 0 : index
    %c0_40 = arith.constant 0 : index
    %c0_41 = arith.constant 0 : index
    %95 = vector.load %arg15[%c0_39, %c0_40, %c0_41] : memref<1x8x128xf32, #tpu.memory_space<vmem>>, vector<1x8x128xf32>
    %96 = vector.shape_cast %95 : vector<1x8x128xf32> to vector<8x128xf32>
    %97 = vector.shape_cast %94 : vector<8x128xf32> to vector<1x8x128xf32>
    tpu.vector_store %arg15[%c0_39, %c0_40, %c0_41], %97 {strides = array<i32>} : memref<1x8x128xf32, #tpu.memory_space<vmem>>, vector<1x8x128xf32>,
    %cst_42 = arith.constant 0.000000e+00 : f32
    %98 = vector.shape_cast %90 : vector<8x1xi1> to vector<8x1xi1>
    %99 = vector.broadcast %98 : vector<8x1xi1> to vector<8x16xi1>
    %100 = vector.broadcast %cst_42 : f32 to vector<8x16xf32>
    %101 = arith.select %99, %40, %100 : vector<8x16xi1>, vector<8x16xf32>
    %c0_43 = arith.constant 0 : index
    %c0_44 = arith.constant 0 : index
    %c0_45 = arith.constant 0 : index
    %102 = vector.load %arg16[%c0_43, %c0_44, %c0_45] : memref<1x8x16xf32, #tpu.memory_space<vmem>>, vector<1x8x16xf32>
    %103 = vector.shape_cast %102 : vector<1x8x16xf32> to vector<8x16xf32>
    %104 = vector.shape_cast %101 : vector<8x16xf32> to vector<1x8x16xf32>
    tpu.vector_store %arg16[%c0_43, %c0_44, %c0_45], %104 {strides = array<i32>} : memref<1x8x16xf32, #tpu.memory_space<vmem>>, vector<1x8x16xf32>,
    %c0_46 = arith.constant 0 : index
    %c0_47 = arith.constant 0 : index
    %105 = vector.load %arg21[%c0_46, %c0_47] : memref<8x128xf32, #tpu.memory_space<vmem>>, vector<8x128xf32>
    tpu.vector_store %arg21[%c0_46, %c0_47], %81 {strides = array<i32>} : memref<8x128xf32, #tpu.memory_space<vmem>>, vector<8x128xf32>,
    %c0_48 = arith.constant 0 : index
    %c0_49 = arith.constant 0 : index
    %106 = vector.load %arg22[%c0_48, %c0_49] : memref<8x128xf32, #tpu.memory_space<vmem>>, vector<8x128xf32>
    tpu.vector_store %arg22[%c0_48, %c0_49], %79 {strides = array<i32>} : memref<8x128xf32, #tpu.memory_space<vmem>>, vector<8x128xf32>,
    %107 = tpu.iota {dimensions = array<i32: 1>} : vector<8x128xi32>
    %108 = arith.sitofp %107 : vector<8x128xi32> to vector<8x128xf32>
    %c64_i32 = arith.constant 64 : i32
    %109 = vector.broadcast %c64_i32 : i32 to vector<8x128xi32>
    %110 = arith.cmpi slt, %107, %109 : vector<8x128xi32>
    %cst_50 = arith.constant -1.000000e+30 : f32
    %111 = vector.broadcast %cst_50 : f32 to vector<8x128xf32>
    %112 = arith.select %110, %87, %111 : vector<8x128xi1>, vector<8x128xf32>
    %cst_51 = arith.constant dense<0xFF800000> : vector<8xf32>
    %113 = vector.multi_reduction <maximumf>, %112, %cst_51 [1] : vector<8x128xf32> to vector<8xf32>
    %114 = vector.shape_cast %113 : vector<8xf32> to vector<8x1xf32>
    %115 = vector.broadcast %114 : vector<8x1xf32> to vector<8x128xf32>
    %116 = arith.cmpf oeq, %112, %115 : vector<8x128xf32>
    %cst_52 = arith.constant 1.000000e+09 : f32
    %117 = vector.broadcast %cst_52 : f32 to vector<8x128xf32>
    %118 = arith.select %116, %108, %117 : vector<8x128xi1>, vector<8x128xf32>
    %cst_53 = arith.constant dense<0x7F800000> : vector<8xf32>
    %119 = vector.multi_reduction <minimumf>, %118, %cst_53 [1] : vector<8x128xf32> to vector<8xf32>
    %120 = vector.shape_cast %119 : vector<8xf32> to vector<8x1xf32>
    %121 = vector.broadcast %120 : vector<8x1xf32> to vector<8x128xf32>
    %122 = arith.cmpf oeq, %108, %121 : vector<8x128xf32>
    %123 = arith.extui %122 : vector<8x128xi1> to vector<8x128xi32>
    %124 = arith.sitofp %123 : vector<8x128xi32> to vector<8x128xf32>
    %125 = arith.truncf %124 : vector<8x128xf32> to vector<8x128xbf16>
    %c0_54 = arith.constant 0 : index
    %c0_55 = arith.constant 0 : index
    %126 = vector.load %arg19[%c0_54, %c0_55] : memref<128x128xbf16, #tpu.memory_space<vmem>>, vector<128x128xbf16>
    %cst_56 = arith.constant dense<0.000000e+00> : vector<8x128xf32>
    %127 = tpu.matmul %125, %126, %cst_56 {dimension_numbers = #tpu.dot_dimension_numbers<[1], [0], [0], [1], [0, 0, 1, 1], [], []>} : vector<8x128xbf16>, vector<128x128xbf16>, vector<8x128xf32> -> vector<8x128xf32>
    %128 = arith.truncf %127 : vector<8x128xf32> to vector<8x128xbf16>
    %c0_57 = arith.constant 0 : index
    %c0_58 = arith.constant 0 : index
    %129 = vector.load %arg23[%c0_57, %c0_58] : memref<8x128xbf16, #tpu.memory_space<vmem>>, vector<8x128xbf16>
    tpu.vector_store %arg23[%c0_57, %c0_58], %128 {strides = array<i32>} : memref<8x128xbf16, #tpu.memory_space<vmem>>, vector<8x128xbf16>,
    return
  }
  func.func @transform_0(%arg0: i32) -> (i32, i32) {
    %c0_i32 = arith.constant 0 : i32
    %c0_i32_0 = arith.constant 0 : i32
    %c0_i32_1 = arith.constant 0 : i32
    return %c0_i32, %c0_i32_0 : i32, i32
  }
  func.func @transform_1(%arg0: i32) -> (i32, i32) {
    %c0_i32 = arith.constant 0 : i32
    %c0_i32_0 = arith.constant 0 : i32
    %c0_i32_1 = arith.constant 0 : i32
    return %c0_i32, %c0_i32_0 : i32, i32
  }
  func.func @transform_2(%arg0: i32) -> (i32, i32) {
    %c0_i32 = arith.constant 0 : i32
    %c0_i32_0 = arith.constant 0 : i32
    %c0_i32_1 = arith.constant 0 : i32
    return %c0_i32, %c0_i32_0 : i32, i32
  }
  func.func @transform_3(%arg0: i32) -> (i32, i32) {
    %c0_i32 = arith.constant 0 : i32
    %c0_i32_0 = arith.constant 0 : i32
    %c0_i32_1 = arith.constant 0 : i32
    return %c0_i32, %c0_i32_0 : i32, i32
  }
  func.func @transform_4(%arg0: i32) -> (i32, i32) {
    %c0_i32 = arith.constant 0 : i32
    %c0_i32_0 = arith.constant 0 : i32
    %c0_i32_1 = arith.constant 0 : i32
    return %c0_i32, %c0_i32_0 : i32, i32
  }
  func.func @transform_5(%arg0: i32) -> (i32, i32) {
    %c0_i32 = arith.constant 0 : i32
    %c0_i32_0 = arith.constant 0 : i32
    %c0_i32_1 = arith.constant 0 : i32
    return %c0_i32, %c0_i32_0 : i32, i32
  }
  func.func @transform_6(%arg0: i32) -> (i32, i32) {
    %c0_i32 = arith.constant 0 : i32
    %c0_i32_0 = arith.constant 0 : i32
    %c0_i32_1 = arith.constant 0 : i32
    return %c0_i32, %c0_i32_0 : i32, i32
  }
  func.func @transform_7(%arg0: i32) -> (i32, i32) {
    %c0_i32 = arith.constant 0 : i32
    %c0_i32_0 = arith.constant 0 : i32
    %c0_i32_1 = arith.constant 0 : i32
    return %c0_i32, %c0_i32_0 : i32, i32
  }
  func.func @transform_8(%arg0: i32) -> (i32, i32) {
    %c0_i32 = arith.constant 0 : i32
    %c0_i32_0 = arith.constant 0 : i32
    %c0_i32_1 = arith.constant 0 : i32
    return %c0_i32, %c0_i32_0 : i32, i32
  }
  func.func @transform_9(%arg0: i32) -> (i32, i32) {
    %c0_i32 = arith.constant 0 : i32
    %c0_i32_0 = arith.constant 0 : i32
    %c0_i32_1 = arith.constant 0 : i32
    return %c0_i32, %c0_i32_0 : i32, i32
  }
  func.func @transform_10(%arg0: i32) -> (i32, i32) {
    %c0_i32 = arith.constant 0 : i32
    %c0_i32_0 = arith.constant 0 : i32
    %c0_i32_1 = arith.constant 0 : i32
    return %c0_i32, %c0_i32_0 : i32, i32
  }
  func.func @transform_14(%arg0: i32) -> (i32, i32, i32) {
    %c0_i32 = arith.constant 0 : i32
    %c0_i32_0 = arith.constant 0 : i32
    %c0_i32_1 = arith.constant 0 : i32
    return %arg0, %c0_i32, %c0_i32_0 : i32, i32, i32
  }
  func.func @transform_15(%arg0: i32) -> (i32, i32, i32) {
    %c0_i32 = arith.constant 0 : i32
    %c0_i32_0 = arith.constant 0 : i32
    %c0_i32_1 = arith.constant 0 : i32
    return %arg0, %c0_i32, %c0_i32_0 : i32, i32, i32
  }
}

</mosaic_0001>

<llo_original>
// kernel: tpu_custom_call.1
$region0: #{tpu_custom_call.1}
  #allocation0 [shape = 'u32[]', space=smem, size = 0x4, offset = 0x4, fixed_abs, tag = 'smem constant byte address 0x4 - core index']
  #allocation1 [shape = 'u32[144,128]{1,0:T(1,128)}', space=vmem, size = 0x12000, scoped, tag = 'internal scratch']
  #allocation2 [shape = 'bf16[8,16,128]{2,1,0:T(8,128)(2,1)}', space=vmem, size = 0x8000, scoped, tag = 'scratch operand']
  #allocation3 [shape = 'bf16[128,128]{1,0:T(8,128)(2,1)}', space=vmem, size = 0x8000, scoped, tag = 'scratch operand']
  #allocation4 [shape = 'bf16[128,128]{1,0:T(8,128)(2,1)}', space=vmem, size = 0x8000, scoped, tag = 'scratch operand']
  #allocation5 [shape = 'f32[8,16,128]{2,1,0:T(8,128)}', space=vmem, size = 0x10000, scoped, tag = 'scratch operand']
  #allocation6 [shape = 'f32[8,128]{1,0:T(8,128)}', space=vmem, size = 0x1000, scoped, tag = 'scratch operand']
  #allocation7 [shape = 'f32[8,128]{1,0:T(8,128)}', space=vmem, size = 0x1000, scoped, tag = 'scratch operand']
  #allocation8 [shape = 'bf16[8,128]{1,0:T(8,128)(2,1)}', space=vmem, size = 0x800, scoped, tag = 'scratch operand']
  #allocation9 [shape = 's32[3]{0}', space=sflag, size = 0xc, scoped, tag = 'scratch operand']
  #allocation21 [shape = 's32[]', space=sflag, size = 0x4, offset = 0, fixed_abs, tag = 'sflag constant byte address 0x0 - dummy sync flag']
  #allocation22 [shape = 's32[]', space=sflag, size = 0x4, offset = 0, fixed_abs, tag = 'sflag constant byte address 0x0 - dummy sync flag']
  #allocation23 [shape = 'u32[]', space=smem, size = 0x4, offset = 0x44, fixed_abs, tag = 'smem constant byte address 0x44 - assertion arg 0']
  #allocation24 [shape = 'u32[]', space=smem, size = 0x4, offset = 0x48, fixed_abs, tag = 'smem constant byte address 0x48 - assertion arg 1']
  #allocation25 [shape = 's32[]', space=sflag, size = 0x4, offset = 0, fixed_abs, tag = 'sflag constant byte address 0x0 - dummy sync flag']
  #allocation26 [shape = 's32[]', space=sflag, size = 0x4, offset = 0, fixed_abs, tag = 'sflag constant byte address 0x0 - dummy sync flag']
  #allocation27 [shape = 's32[]', space=sflag, size = 0x4, offset = 0, fixed_abs, tag = 'sflag constant byte address 0x0 - dummy sync flag']
  #allocation28 [shape = 's32[]', space=sflag, size = 0x4, offset = 0, fixed_abs, tag = 'sflag constant byte address 0x0 - dummy sync flag']
  %s0 = inlined_call_operand.vmem [shape: s32[8,1], index: 0, kind: input, shape index: {}]
  %s1 = inlined_call_operand.vmem [shape: bf16[8,128], index: 1, kind: input, shape index: {}]
  %s2 = inlined_call_operand.hbm [shape: bf16[256,768], index: 2, kind: input, shape index: {}]
  %s3 = inlined_call_operand.vmem [shape: f32[1,768], index: 3, kind: input, shape index: {}]
  %s4 = inlined_call_operand.hbm [shape: bf16[128,512], index: 4, kind: input, shape index: {}]
  %s5 = inlined_call_operand.hbm [shape: bf16[128,128], index: 5, kind: input, shape index: {}]
  %s6 = inlined_call_operand.vmem [shape: f32[1,128], index: 6, kind: input, shape index: {}]
  %s7 = inlined_call_operand.vmem [shape: f32[1,128], index: 7, kind: input, shape index: {}]
  %s8 = inlined_call_operand.hbm [shape: bf16[128,256], index: 8, kind: input, shape index: {}]
  %s9 = inlined_call_operand.vmem [shape: f32[1,256], index: 9, kind: input, shape index: {}]
  %s10 = inlined_call_operand.vmem [shape: f32[1,128], index: 10, kind: input, shape index: {}]
  %s11 = inlined_call_operand.hbm [shape: bf16[8,16,128], index: 11, kind: input, shape index: {}]
  %s12 = inlined_call_operand.hbm [shape: bf16[128,128], index: 12, kind: input, shape index: {}]
  %s13 = inlined_call_operand.hbm [shape: bf16[128,128], index: 13, kind: input, shape index: {}]
  %s14 = inlined_call_operand.hbm [shape: f32[7,8,128], index: 14, kind: output, shape index: {0}]
  %s15 = inlined_call_operand.hbm [shape: f32[7,8,16], index: 15, kind: output, shape index: {1}]
  %16 = xla_tuple %s14, %s15
  %s17 = sld [smem:[#allocation0]]
  $region117: #{tpu_custom_call.1} parent=0
    _
  %s19 = ssub.s32 1, %s17
  %s20 = scalar_select 0, %s19, %s17
  $region1: #{tpu_custom_call.1} parent=0
    #allocation10 [shape = 'u8[393216]{0}', space=vmem, size = 0x60000, scoped, tag = 'input window, operand 2, single buffered']
    #allocation11 [shape = 's32[2]{0}', space=sflag, size = 0x8, scoped, tag = 'scoped memory for tpu_custom_call.1']
    #allocation12 [shape = 's32[2]{0}', space=sflag, size = 0x8, scoped, tag = 'scoped memory for tpu_custom_call.1']
    #allocation13 [shape = 'u8[131072]{0}', space=vmem, size = 0x20000, scoped, tag = 'input window, operand 4, single buffered']
    #allocation14 [shape = 's32[1]{0}', space=sflag, size = 0x4, scoped, tag = 'scoped memory for tpu_custom_call.1']
    #allocation15 [shape = 'u8[32768]{0}', space=vmem, size = 0x8000, scoped, tag = 'input window, operand 5, single buffered']
    #allocation16 [shape = 'u8[65536]{0}', space=vmem, size = 0x10000, scoped, tag = 'input window, operand 8, single buffered']
    #allocation17 [shape = 's32[1]{0}', space=sflag, size = 0x4, scoped, tag = 'scoped memory for tpu_custom_call.1']
    #allocation18 [shape = 'u8[8192]{0}', space=vmem, size = 0x2000, scoped, tag = 'output window, operand 0']
    #allocation19 [shape = 'u8[8192]{0}', space=vmem, size = 0x2000, scoped, tag = 'output window, operand 1']
    #allocation20 [shape = 's32[2]{0}', space=sflag, size = 0x8, scoped, tag = 'scoped memory for tpu_custom_call.1']
    %21 = vsyncpa [#allocation11], 0
    %22 = vsyncpa [#allocation14], 0
    %23 = vsyncpa [#allocation17], 0
    %24 = vsyncpa [#allocation12], 0
    %s25 = scalar_lea.sflag [#allocation12], 1
    %26 = vsyncpa %s25, 0
    %27 = vsyncpa [#allocation20], 0
    %s28 = scalar_lea.sflag [#allocation20], 1
    %29 = vsyncpa %s28, 0
    loop: start=0, step=1, limit=9
    $region2: #{tpu_custom_call.1} parent=1 // loop_pre_header
      _
    $region3: #{tpu_custom_call.1} parent=1 // loop_header
      %s31 = sphi 0, %s35
      %p32 = scmp.ge.s32.totalorder %s31, 9
      %s39 = sphi 0, %s39
      %s41 = sphi 0, %s39
      %s42 = sphi 0, %s41
      %s56 = sphi 0, %s42
      %s60 = sphi 0, %s60
      %s62 = sphi 0, %s60
      %s63 = sphi 0, %s62
      %s77 = sphi 0, %s63
      %s81 = sphi 0, %s81
      %s83 = sphi 0, %s81
      %s84 = sphi 0, %s83
      %s98 = sphi 0, %s84
      %s102 = sphi 0, %s102
      %s104 = sphi 0, %s102
      %s105 = sphi 0, %s104
      %s119 = sphi 0, %s105
      %s123 = sphi 0, %s123
      %s125 = sphi 0, %s123
      %s126 = sphi 0, %s125
      %s140 = sphi 0, %s126
      %s144 = sphi 0, %s144
      %s146 = sphi 0, %s144
      %s147 = sphi 0, %s146
      %s161 = sphi 0, %s147
      %s165 = sphi 0, %s165
      %s167 = sphi 0, %s165
      %s168 = sphi 0, %s167
      %s182 = sphi 0, %s168
      %s186 = sphi 0, %s186
      %s188 = sphi 0, %s186
      %s189 = sphi 0, %s188
      %s203 = sphi 0, %s189
      %s207 = sphi 0, %s207
      %s209 = sphi 0, %s207
      %s210 = sphi 0, %s209
      %s224 = sphi 0, %s210
      %s228 = sphi 0, %s228
      %s230 = sphi 0, %s228
      %s231 = sphi 0, %s230
      %s245 = sphi 0, %s231
      %s249 = sphi 0, %s249
      %s251 = sphi 0, %s249
      %s252 = sphi 0, %s251
      %s266 = sphi 0, %s252
      %s272 = sphi 0, %s274
      %s275 = sphi 0, %s272
      %s276 = sphi 0, %s275
      %s292 = sphi 0, %s276
      %s298 = sphi 0, %s300
      %s301 = sphi 0, %s298
      %s302 = sphi 0, %s301
      %s318 = sphi 0, %s302
    $region4: #{tpu_custom_call.1} parent=1 // loop_header_branch
      %34 = sbr.rel (%p32) target = $region8
    $region5: #{tpu_custom_call.1} parent=1 // loop_body
      %s36 = ssub.s32 %s31, 1
      %s37 = ssub.s32 %s31, 2
      %s38 = sadd.s32 %s31, 1
      %s40 = sadd.s32 %s39, 1
      %p43 = scmp.eq.s32.totalorder %s31, 6
      %p44 = scmp.ne.s32.totalorder %s39, %s41
      %p45 = scmp.eq.s32.totalorder %s31, 0
      %p46 = por %p44, %p45
      %p47 = scmp.ne.s32.totalorder %s39, %s41
      %p48 = scmp.eq.s32.totalorder %s36, 6
      %p49 = por %p47, %p48
      %p50 = scmp.ne.s32.totalorder %s41, %s42
      %p51 = scmp.eq.s32.totalorder %s36, 0
      %p52 = por %p50, %p51
      %p53 = scmp.ne.s32.totalorder %s41, %s42
      %p54 = scmp.eq.s32.totalorder %s37, 6
      %p55 = por %p53, %p54
      %p57 = scmp.ne.s32.totalorder %s42, %s56
      %p58 = scmp.eq.s32.totalorder %s37, 0
      %p59 = por %p57, %p58
      %s61 = sadd.s32 %s60, 1
      %p64 = scmp.eq.s32.totalorder %s31, 6
      %p65 = scmp.ne.s32.totalorder %s60, %s62
      %p66 = scmp.eq.s32.totalorder %s31, 0
      %p67 = por %p65, %p66
      %p68 = scmp.ne.s32.totalorder %s60, %s62
      %p69 = scmp.eq.s32.totalorder %s36, 6
      %p70 = por %p68, %p69
      %p71 = scmp.ne.s32.totalorder %s62, %s63
      %p72 = scmp.eq.s32.totalorder %s36, 0
      %p73 = por %p71, %p72
      %p74 = scmp.ne.s32.totalorder %s62, %s63
      %p75 = scmp.eq.s32.totalorder %s37, 6
      %p76 = por %p74, %p75
      %p78 = scmp.ne.s32.totalorder %s63, %s77
      %p79 = scmp.eq.s32.totalorder %s37, 0
      %p80 = por %p78, %p79
      %s82 = sadd.s32 %s81, 1
      %p85 = scmp.eq.s32.totalorder %s31, 6
      %p86 = scmp.ne.s32.totalorder %s81, %s83
      %p87 = scmp.eq.s32.totalorder %s31, 0
      %p88 = por %p86, %p87
      %p89 = scmp.ne.s32.totalorder %s81, %s83
      %p90 = scmp.eq.s32.totalorder %s36, 6
      %p91 = por %p89, %p90
      %p92 = scmp.ne.s32.totalorder %s83, %s84
      %p93 = scmp.eq.s32.totalorder %s36, 0
      %p94 = por %p92, %p93
      %p95 = scmp.ne.s32.totalorder %s83, %s84
      %p96 = scmp.eq.s32.totalorder %s37, 6
      %p97 = por %p95, %p96
      %p99 = scmp.ne.s32.totalorder %s84, %s98
      %p100 = scmp.eq.s32.totalorder %s37, 0
      %p101 = por %p99, %p100
      %s103 = sadd.s32 %s102, 1
      %p106 = scmp.eq.s32.totalorder %s31, 6
      %p107 = scmp.ne.s32.totalorder %s102, %s104
      %p108 = scmp.eq.s32.totalorder %s31, 0
      %p109 = por %p107, %p108
      %p110 = scmp.ne.s32.totalorder %s102, %s104
      %p111 = scmp.eq.s32.totalorder %s36, 6
      %p112 = por %p110, %p111
      %p113 = scmp.ne.s32.totalorder %s104, %s105
      %p114 = scmp.eq.s32.totalorder %s36, 0
      %p115 = por %p113, %p114
      %p116 = scmp.ne.s32.totalorder %s104, %s105
      %p117 = scmp.eq.s32.totalorder %s37, 6
      %p118 = por %p116, %p117
      %p120 = scmp.ne.s32.totalorder %s105, %s119
      %p121 = scmp.eq.s32.totalorder %s37, 0
      %p122 = por %p120, %p121
      %s124 = sadd.s32 %s123, 1
      %p127 = scmp.eq.s32.totalorder %s31, 6
      %p128 = scmp.ne.s32.totalorder %s123, %s125
      %p129 = scmp.eq.s32.totalorder %s31, 0
      %p130 = por %p128, %p129
      %p131 = scmp.ne.s32.totalorder %s123, %s125
      %p132 = scmp.eq.s32.totalorder %s36, 6
      %p133 = por %p131, %p132
      %p134 = scmp.ne.s32.totalorder %s125, %s126
      %p135 = scmp.eq.s32.totalorder %s36, 0
      %p136 = por %p134, %p135
      %p137 = scmp.ne.s32.totalorder %s125, %s126
      %p138 = scmp.eq.s32.totalorder %s37, 6
      %p139 = por %p137, %p138
      %p141 = scmp.ne.s32.totalorder %s126, %s140
      %p142 = scmp.eq.s32.totalorder %s37, 0
      %p143 = por %p141, %p142
      %s145 = sadd.s32 %s144, 1
      %p148 = scmp.eq.s32.totalorder %s31, 6
      %p149 = scmp.ne.s32.totalorder %s144, %s146
      %p150 = scmp.eq.s32.totalorder %s31, 0
      %p151 = por %p149, %p150
      %p152 = scmp.ne.s32.totalorder %s144, %s146
      %p153 = scmp.eq.s32.totalorder %s36, 6
      %p154 = por %p152, %p153
      %p155 = scmp.ne.s32.totalorder %s146, %s147
      %p156 = scmp.eq.s32.totalorder %s36, 0
      %p157 = por %p155, %p156
      %p158 = scmp.ne.s32.totalorder %s146, %s147
      %p159 = scmp.eq.s32.totalorder %s37, 6
      %p160 = por %p158, %p159
      %p162 = scmp.ne.s32.totalorder %s147, %s161
      %p163 = scmp.eq.s32.totalorder %s37, 0
      %p164 = por %p162, %p163
      %s166 = sadd.s32 %s165, 1
      %p169 = scmp.eq.s32.totalorder %s31, 6
      %p170 = scmp.ne.s32.totalorder %s165, %s167
      %p171 = scmp.eq.s32.totalorder %s31, 0
      %p172 = por %p170, %p171
      %p173 = scmp.ne.s32.totalorder %s165, %s167
      %p174 = scmp.eq.s32.totalorder %s36, 6
      %p175 = por %p173, %p174
      %p176 = scmp.ne.s32.totalorder %s167, %s168
      %p177 = scmp.eq.s32.totalorder %s36, 0
      %p178 = por %p176, %p177
      %p179 = scmp.ne.s32.totalorder %s167, %s168
      %p180 = scmp.eq.s32.totalorder %s37, 6
      %p181 = por %p179, %p180
      %p183 = scmp.ne.s32.totalorder %s168, %s182
      %p184 = scmp.eq.s32.totalorder %s37, 0
      %p185 = por %p183, %p184
      %s187 = sadd.s32 %s186, 1
      %p190 = scmp.eq.s32.totalorder %s31, 6
      %p191 = scmp.ne.s32.totalorder %s186, %s188
      %p192 = scmp.eq.s32.totalorder %s31, 0
      %p193 = por %p191, %p192
      %p194 = scmp.ne.s32.totalorder %s186, %s188
      %p195 = scmp.eq.s32.totalorder %s36, 6
      %p196 = por %p194, %p195
      %p197 = scmp.ne.s32.totalorder %s188, %s189
      %p198 = scmp.eq.s32.totalorder %s36, 0
      %p199 = por %p197, %p198
      %p200 = scmp.ne.s32.totalorder %s188, %s189
      %p201 = scmp.eq.s32.totalorder %s37, 6
      %p202 = por %p200, %p201
      %p204 = scmp.ne.s32.totalorder %s189, %s203
      %p205 = scmp.eq.s32.totalorder %s37, 0
      %p206 = por %p204, %p205
      %s208 = sadd.s32 %s207, 1
      %p211 = scmp.eq.s32.totalorder %s31, 6
      %p212 = scmp.ne.s32.totalorder %s207, %s209
      %p213 = scmp.eq.s32.totalorder %s31, 0
      %p214 = por %p212, %p213
      %p215 = scmp.ne.s32.totalorder %s207, %s209
      %p216 = scmp.eq.s32.totalorder %s36, 6
      %p217 = por %p215, %p216
      %p218 = scmp.ne.s32.totalorder %s209, %s210
      %p219 = scmp.eq.s32.totalorder %s36, 0
      %p220 = por %p218, %p219
      %p221 = scmp.ne.s32.totalorder %s209, %s210
      %p222 = scmp.eq.s32.totalorder %s37, 6
      %p223 = por %p221, %p222
      %p225 = scmp.ne.s32.totalorder %s210, %s224
      %p226 = scmp.eq.s32.totalorder %s37, 0
      %p227 = por %p225, %p226
      %s229 = sadd.s32 %s228, 1
      %p232 = scmp.eq.s32.totalorder %s31, 6
      %p233 = scmp.ne.s32.totalorder %s228, %s230
      %p234 = scmp.eq.s32.totalorder %s31, 0
      %p235 = por %p233, %p234
      %p236 = scmp.ne.s32.totalorder %s228, %s230
      %p237 = scmp.eq.s32.totalorder %s36, 6
      %p238 = por %p236, %p237
      %p239 = scmp.ne.s32.totalorder %s230, %s231
      %p240 = scmp.eq.s32.totalorder %s36, 0
      %p241 = por %p239, %p240
      %p242 = scmp.ne.s32.totalorder %s230, %s231
      %p243 = scmp.eq.s32.totalorder %s37, 6
      %p244 = por %p242, %p243
      %p246 = scmp.ne.s32.totalorder %s231, %s245
      %p247 = scmp.eq.s32.totalorder %s37, 0
      %p248 = por %p246, %p247
      %s250 = sadd.s32 %s249, 1
      %p253 = scmp.eq.s32.totalorder %s31, 6
      %p254 = scmp.ne.s32.totalorder %s249, %s251
      %p255 = scmp.eq.s32.totalorder %s31, 0
      %p256 = por %p254, %p255
      %p257 = scmp.ne.s32.totalorder %s249, %s251
      %p258 = scmp.eq.s32.totalorder %s36, 6
      %p259 = por %p257, %p258
      %p260 = scmp.ne.s32.totalorder %s251, %s252
      %p261 = scmp.eq.s32.totalorder %s36, 0
      %p262 = por %p260, %p261
      %p263 = scmp.ne.s32.totalorder %s251, %s252
      %p264 = scmp.eq.s32.totalorder %s37, 6
      %p265 = por %p263, %p264
      %p267 = scmp.ne.s32.totalorder %s252, %s266
      %p268 = scmp.eq.s32.totalorder %s37, 0
      %p269 = por %p267, %p268
      %s270 = ssub.s32 %s31, %s38
      %p271 = scmp.eq.s32.totalorder %s270, 0
      %s273 = sadd.s32 %s272, 1
      %s274 = scalar_select %p271, %s272, %s273
      %p277 = pneg %p271
      %p278 = scmp.eq.s32.totalorder %s31, 6
      %p279 = por %p277, %p278
      %p280 = scmp.ne.s32.totalorder %s272, %s275
      %p281 = scmp.eq.s32.totalorder %s31, 0
      %p282 = por %p280, %p281
      %p283 = scmp.ne.s32.totalorder %s272, %s275
      %p284 = scmp.eq.s32.totalorder %s36, 6
      %p285 = por %p283, %p284
      %p286 = scmp.ne.s32.totalorder %s275, %s276
      %p287 = scmp.eq.s32.totalorder %s36, 0
      %p288 = por %p286, %p287
      %p289 = scmp.ne.s32.totalorder %s275, %s276
      %p290 = scmp.eq.s32.totalorder %s37, 6
      %p291 = por %p289, %p290
      %p293 = scmp.ne.s32.totalorder %s276, %s292
      %p294 = scmp.eq.s32.totalorder %s37, 0
      %p295 = por %p293, %p294
      %s296 = ssub.s32 %s31, %s38
      %p297 = scmp.eq.s32.totalorder %s296, 0
      %s299 = sadd.s32 %s298, 1
      %s300 = scalar_select %p297, %s298, %s299
      %p303 = pneg %p297
      %p304 = scmp.eq.s32.totalorder %s31, 6
      %p305 = por %p303, %p304
      %p306 = scmp.ne.s32.totalorder %s298, %s301
      %p307 = scmp.eq.s32.totalorder %s31, 0
      %p308 = por %p306, %p307
      %p309 = scmp.ne.s32.totalorder %s298, %s301
      %p310 = scmp.eq.s32.totalorder %s36, 6
      %p311 = por %p309, %p310
      %p312 = scmp.ne.s32.totalorder %s301, %s302
      %p313 = scmp.eq.s32.totalorder %s36, 0
      %p314 = por %p312, %p313
      %p315 = scmp.ne.s32.totalorder %s301, %s302
      %p316 = scmp.eq.s32.totalorder %s37, 6
      %p317 = por %p315, %p316
      %p319 = scmp.ne.s32.totalorder %s302, %s318
      %p320 = scmp.eq.s32.totalorder %s37, 0
      %p321 = por %p319, %p320
      %p322 = scmp.le.s32.totalorder 1, %s31
      %p323 = scmp.lt.s32.totalorder %s31, 8
      %p324 = pnand %p322, %p323
      %p325 = pneg %p324
      // Predicated region
      $region9: #{tpu_custom_call.1} parent=5 // pred_check
        _
      $region10: #{tpu_custom_call.1} parent=5 // pred_check_branch
        %327 = sbr.rel (%p324) target = $region12
      $region11: #{tpu_custom_call.1} parent=5 // pred_region
        %s328 = ssub.s32 %s31, 1
        // Predicated region
        $region13: #{tpu_custom_call.1} parent=11 // pred_check
          %p329 = pneg %p52
        $region14: #{tpu_custom_call.1} parent=11 // pred_check_branch
          %331 = sbr.rel (%p329) target = $region16
        $region15: #{tpu_custom_call.1} parent=11 // pred_region
          _
        $region16: #{tpu_custom_call.1} parent=11 // pred_fallthru
          _
        // Predicated region
        $region17: #{tpu_custom_call.1} parent=11 // pred_check
          %p332 = pneg %p73
        $region18: #{tpu_custom_call.1} parent=11 // pred_check_branch
          %334 = sbr.rel (%p332) target = $region20
        $region19: #{tpu_custom_call.1} parent=11 // pred_region
          _
        $region20: #{tpu_custom_call.1} parent=11 // pred_fallthru
          _
        // Predicated region
        $region21: #{tpu_custom_call.1} parent=11 // pred_check
          %p335 = pneg %p94
        $region22: #{tpu_custom_call.1} parent=11 // pred_check_branch
          %337 = sbr.rel (%p335) target = $region24
        $region23: #{tpu_custom_call.1} parent=11 // pred_region
          %s339 = ssub.s32 12288, 12288
          %340 = vsyncadd [#allocation11], %s339
          %s341 = sshll.u32 [#allocation10], 4
          %s342 = int_to_ptr.vmem [resolvable:$true] %s341
          %347 = dma.hbm_to_vmem [thread:$0]  %s2, 12288, %s342, [#allocation11], 384, 384, 24
        $region24: #{tpu_custom_call.1} parent=11 // pred_fallthru
          _
        // Predicated region
        $region25: #{tpu_custom_call.1} parent=11 // pred_check
          %p348 = pneg %p115
        $region26: #{tpu_custom_call.1} parent=11 // pred_check_branch
          %350 = sbr.rel (%p348) target = $region28
        $region27: #{tpu_custom_call.1} parent=11 // pred_region
          _
        $region28: #{tpu_custom_call.1} parent=11 // pred_fallthru
          _
        // Predicated region
        $region29: #{tpu_custom_call.1} parent=11 // pred_check
          %p351 = pneg %p136
        $region30: #{tpu_custom_call.1} parent=11 // pred_check_branch
          %353 = sbr.rel (%p351) target = $region32
        $region31: #{tpu_custom_call.1} parent=11 // pred_region
          %s355 = ssub.s32 4096, 4096
          %356 = vsyncadd [#allocation14], %s355
          %s357 = sshll.u32 [#allocation13], 4
          %s358 = int_to_ptr.vmem [resolvable:$true] %s357
          %363 = dma.hbm_to_vmem [thread:$0]  %s4, 4096, %s358, [#allocation14], 256, 256, 16
        $region32: #{tpu_custom_call.1} parent=11 // pred_fallthru
          _
        // Predicated region
        $region33: #{tpu_custom_call.1} parent=11 // pred_check
          %p364 = pneg %p157
        $region34: #{tpu_custom_call.1} parent=11 // pred_check_branch
          %366 = sbr.rel (%p364) target = $region36
        $region35: #{tpu_custom_call.1} parent=11 // pred_region
          %s368 = ssub.s32 1024, 1024
          %369 = vsyncadd [#allocation14], %s368
          %s370 = sshll.u32 [#allocation15], 4
          %s371 = int_to_ptr.vmem [resolvable:$true] %s370
          %376 = dma.hbm_to_vmem [thread:$0]  %s5, 1024, %s371, [#allocation14], 64, 64, 4
        $region36: #{tpu_custom_call.1} parent=11 // pred_fallthru
          _
        // Predicated region
        $region37: #{tpu_custom_call.1} parent=11 // pred_check
          %p377 = pneg %p178
        $region38: #{tpu_custom_call.1} parent=11 // pred_check_branch
          %379 = sbr.rel (%p377) target = $region40
        $region39: #{tpu_custom_call.1} parent=11 // pred_region
          _
        $region40: #{tpu_custom_call.1} parent=11 // pred_fallthru
          _
        // Predicated region
        $region41: #{tpu_custom_call.1} parent=11 // pred_check
          %p380 = pneg %p199
        $region42: #{tpu_custom_call.1} parent=11 // pred_check_branch
          %382 = sbr.rel (%p380) target = $region44
        $region43: #{tpu_custom_call.1} parent=11 // pred_region
          _
        $region44: #{tpu_custom_call.1} parent=11 // pred_fallthru
          _
        // Predicated region
        $region45: #{tpu_custom_call.1} parent=11 // pred_check
          %p383 = pneg %p220
        $region46: #{tpu_custom_call.1} parent=11 // pred_check_branch
          %385 = sbr.rel (%p383) target = $region48
        $region47: #{tpu_custom_call.1} parent=11 // pred_region
          %s387 = ssub.s32 2048, 2048
          %388 = vsyncadd [#allocation17], %s387
          %s389 = sshll.u32 [#allocation16], 4
          %s390 = int_to_ptr.vmem [resolvable:$true] %s389
          %395 = dma.hbm_to_vmem [thread:$0]  %s8, 2048, %s390, [#allocation17], 128, 128, 8
        $region48: #{tpu_custom_call.1} parent=11 // pred_fallthru
          _
        // Predicated region
        $region49: #{tpu_custom_call.1} parent=11 // pred_check
          %p396 = pneg %p241
        $region50: #{tpu_custom_call.1} parent=11 // pred_check_branch
          %398 = sbr.rel (%p396) target = $region52
        $region51: #{tpu_custom_call.1} parent=11 // pred_region
          _
        $region52: #{tpu_custom_call.1} parent=11 // pred_fallthru
          _
        // Predicated region
        $region53: #{tpu_custom_call.1} parent=11 // pred_check
          %p399 = pneg %p262
        $region54: #{tpu_custom_call.1} parent=11 // pred_check_branch
          %401 = sbr.rel (%p399) target = $region56
        $region55: #{tpu_custom_call.1} parent=11 // pred_region
          _
        $region56: #{tpu_custom_call.1} parent=11 // pred_fallthru
          _
      $region12: #{tpu_custom_call.1} parent=5 // pred_fallthru
        _
      %p402 = scmp.lt.s32.totalorder %s31, 7
      // Predicated region
      $region57: #{tpu_custom_call.1} parent=5 // pred_check
        %p403 = pneg %p402
      $region58: #{tpu_custom_call.1} parent=5 // pred_check_branch
        %405 = sbr.rel (%p403) target = $region60
      $region59: #{tpu_custom_call.1} parent=5 // pred_region
        _
      $region60: #{tpu_custom_call.1} parent=5 // pred_fallthru
        _
      %p406 = scmp.le.s32.totalorder 1, %s31
      %p407 = scmp.lt.s32.totalorder %s31, 8
      %p408 = pnand %p406, %p407
      %p409 = pneg %p408
      // Predicated region
      $region61: #{tpu_custom_call.1} parent=5 // pred_check
        _
      $region62: #{tpu_custom_call.1} parent=5 // pred_check_branch
        %411 = sbr.rel (%p408) target = $region64
      $region63: #{tpu_custom_call.1} parent=5 // pred_region
        %s412 = ssub.s32 %s31, 1
        // Predicated region
        $region65: #{tpu_custom_call.1} parent=63 // pred_check
          %p413 = pneg %p94
        $region66: #{tpu_custom_call.1} parent=63 // pred_check_branch
          %415 = sbr.rel (%p413) target = $region68
        $region67: #{tpu_custom_call.1} parent=63 // pred_region
          %416 = dma.done [#allocation11], 12288
        $region68: #{tpu_custom_call.1} parent=63 // pred_fallthru
          _
        // Predicated region
        $region69: #{tpu_custom_call.1} parent=63 // pred_check
          %p417 = pneg %p136
        $region70: #{tpu_custom_call.1} parent=63 // pred_check_branch
          %419 = sbr.rel (%p417) target = $region72
        $region71: #{tpu_custom_call.1} parent=63 // pred_region
          %420 = dma.done [#allocation14], 4096
        $region72: #{tpu_custom_call.1} parent=63 // pred_fallthru
          _
        // Predicated region
        $region73: #{tpu_custom_call.1} parent=63 // pred_check
          %p421 = pneg %p157
        $region74: #{tpu_custom_call.1} parent=63 // pred_check_branch
          %423 = sbr.rel (%p421) target = $region76
        $region75: #{tpu_custom_call.1} parent=63 // pred_region
          %424 = dma.done [#allocation14], 1024
        $region76: #{tpu_custom_call.1} parent=63 // pred_fallthru
          _
        // Predicated region
        $region77: #{tpu_custom_call.1} parent=63 // pred_check
          %p425 = pneg %p220
        $region78: #{tpu_custom_call.1} parent=63 // pred_check_branch
          %427 = sbr.rel (%p425) target = $region80
        $region79: #{tpu_custom_call.1} parent=63 // pred_region
          %428 = dma.done [#allocation17], 2048
        $region80: #{tpu_custom_call.1} parent=63 // pred_fallthru
          _
        %p429 = pneg %p52
        %p430 = pneg %p49
        %p431 = pneg %p73
        %p432 = pneg %p70
        %p433 = pneg %p94
        %p434 = pneg %p91
        %p435 = pneg %p115
        %p436 = pneg %p112
        %p437 = pneg %p136
        %p438 = pneg %p133
        %p439 = pneg %p157
        %p440 = pneg %p154
        %p441 = pneg %p178
        %p442 = pneg %p175
        %p443 = pneg %p199
        %p444 = pneg %p196
        %p445 = pneg %p220
        %p446 = pneg %p217
        %p447 = pneg %p241
        %p448 = pneg %p238
        %p449 = pneg %p262
        %p450 = pneg %p259
        %p451 = pneg %p288
        %p452 = pneg %p285
        %s453 = sand.u32 %s275, 1
        %s454 = scalar_lea.sflag [#allocation12], %s453
        %s455 = sand.u32 %s275, 1
        %s456 = smul.addr %s455, 8
        %s457 = scalar_lea.vmem [#allocation18], %s456
        %p458 = pneg %p314
        %p459 = pneg %p311
        %s460 = sand.u32 %s301, 1
        %s461 = scalar_lea.sflag [#allocation20], %s460
        %s462 = sand.u32 %s301, 1
        %s463 = smul.addr %s462, 8
        %s464 = scalar_lea.vmem [#allocation19], %s463
        %p466 = scmp.eq.s32.totalorder %s36, 0
        // Predicated region
        $region81: #{tpu_custom_call.1} parent=63 // pred_check
          %p467 = pneg %p466
        $region82: #{tpu_custom_call.1} parent=63 // pred_check_branch
          %469 = sbr.rel (%p467) target = $region84
        $region83: #{tpu_custom_call.1} parent=63 // pred_region
          // Predicated region
          $region85: #{tpu_custom_call.1} parent=83 // pred_check
            _
          $region86: #{tpu_custom_call.1} parent=83 // pred_check_branch
            %471 = sbr.rel target = $region88
          $region87: #{tpu_custom_call.1} parent=83 // pred_region
            %472 = sst [smem:[#allocation23]] [#allocation22]
            %473 = sst [smem:[#allocation24]] [#allocation21]
          $region88: #{tpu_custom_call.1} parent=83 // pred_fallthru
            _
          %475 = shalt.err (0)
          %s477 = sshll.u32 [#allocation2], 4
          %s478 = int_to_ptr.vmem [resolvable:$true] %s477
          %480 = dma.hbm_to_vmem [thread:$0]  %s11, 1024, %s478, [#allocation9]
          %s481 = scalar_lea.sflag [#allocation9], 1
          // Predicated region
          $region89: #{tpu_custom_call.1} parent=83 // pred_check
            _
          $region90: #{tpu_custom_call.1} parent=83 // pred_check_branch
            %483 = sbr.rel target = $region92
          $region91: #{tpu_custom_call.1} parent=83 // pred_region
            %484 = sst [smem:[#allocation23]] [#allocation26]
            %485 = sst [smem:[#allocation24]] [#allocation25]
          $region92: #{tpu_custom_call.1} parent=83 // pred_fallthru
            _
          %487 = shalt.err (0)
          %s489 = sshll.u32 [#allocation3], 4
          %s490 = int_to_ptr.vmem [resolvable:$true] %s489
          %492 = dma.hbm_to_vmem [thread:$0]  %s12, 1024, %s490, %s481
          %s493 = scalar_lea.sflag [#allocation9], 2
          // Predicated region
          $region93: #{tpu_custom_call.1} parent=83 // pred_check
            _
          $region94: #{tpu_custom_call.1} parent=83 // pred_check_branch
            %495 = sbr.rel target = $region96
          $region95: #{tpu_custom_call.1} parent=83 // pred_region
            %496 = sst [smem:[#allocation23]] [#allocation28]
            %497 = sst [smem:[#allocation24]] [#allocation27]
          $region96: #{tpu_custom_call.1} parent=83 // pred_fallthru
            _
          %499 = shalt.err (0)
          %s501 = sshll.u32 [#allocation4], 4
          %s502 = int_to_ptr.vmem [resolvable:$true] %s501
          %504 = dma.hbm_to_vmem [thread:$0]  %s13, 1024, %s502, %s493
          %s505 = smul.u32 4, 8
          %s506 = smul.u32 %s505, 2
          %s507 = smul.u32 %s506, 1
          %s508 = sshll.u32 %s507, 4
          %509 = dma.done [#allocation9], %s508
          %s510 = smul.u32 4, 16
          %s511 = smul.u32 %s510, 1
          %s512 = sshll.u32 %s511, 4
          %513 = dma.done %s481, %s512
          %s514 = sshll.u32 %s511, 4
          %515 = dma.done %s493, %s514
          %v516 = vld [vmem:[#allocation2] sm:$0xf]
          %v517 = vld [vmem:[#allocation2 + $0x4] sm:$0xf]
          %v518 = vld [vmem:[#allocation2 + $0x8] sm:$0xf]
          %v519 = vld [vmem:[#allocation2 + $0xc] sm:$0xf]
          %v520 = vld [vmem:[#allocation2 + $0x10] sm:$0xf]
          %v521 = vld [vmem:[#allocation2 + $0x14] sm:$0xf]
          %v522 = vld [vmem:[#allocation2 + $0x18] sm:$0xf]
          %v523 = vld [vmem:[#allocation2 + $0x1c] sm:$0xf]
          %v524 = vld [vmem:[#allocation2 + $0x20] sm:$0xf]
          %v525 = vld [vmem:[#allocation2 + $0x24] sm:$0xf]
          %v526 = vld [vmem:[#allocation2 + $0x28] sm:$0xf]
          %v527 = vld [vmem:[#allocation2 + $0x2c] sm:$0xf]
          %v528 = vld [vmem:[#allocation2 + $0x30] sm:$0xf]
          %v529 = vld [vmem:[#allocation2 + $0x34] sm:$0xf]
          %v530 = vld [vmem:[#allocation2 + $0x38] sm:$0xf]
          %v531 = vld [vmem:[#allocation2 + $0x3c] sm:$0xf]
          %v532 = vunpack.c.l.bf16 %v516
          %v533 = vunpack.c.l.bf16 %v517
          %v534 = vunpack.c.l.bf16 %v518
          %v535 = vunpack.c.l.bf16 %v519
          %v536 = vunpack.c.l.bf16 %v520
          %v537 = vunpack.c.l.bf16 %v521
          %v538 = vunpack.c.l.bf16 %v522
          %v539 = vunpack.c.l.bf16 %v523
          %v540 = vunpack.c.l.bf16 %v524
          %v541 = vunpack.c.l.bf16 %v525
          %v542 = vunpack.c.l.bf16 %v526
          %v543 = vunpack.c.l.bf16 %v527
          %v544 = vunpack.c.l.bf16 %v528
          %v545 = vunpack.c.l.bf16 %v529
          %v546 = vunpack.c.l.bf16 %v530
          %v547 = vunpack.c.l.bf16 %v531
          %v548 = vadd.f32 %v532, %v533
          %v549 = vrot.slane %v548, 4
          %v550 = vadd.f32 %v548, %v549
          %v551 = vrot.slane %v550, 2
          %v552 = vadd.f32 %v550, %v551
          %v553 = vrot.slane %v552, 1
          %v554 = vadd.f32 %v552, %v553
          %v555 = vadd.f32 %v534, %v535
          %v556 = vrot.slane %v555, 4
          %v557 = vadd.f32 %v555, %v556
          %v558 = vrot.slane %v557, 2
          %v559 = vadd.f32 %v557, %v558
          %v560 = vrot.slane %v559, 1
          %v561 = vadd.f32 %v559, %v560
          %v562 = vadd.f32 %v536, %v537
          %v563 = vrot.slane %v562, 4
          %v564 = vadd.f32 %v562, %v563
          %v565 = vrot.slane %v564, 2
          %v566 = vadd.f32 %v564, %v565
          %v567 = vrot.slane %v566, 1
          %v568 = vadd.f32 %v566, %v567
          %v569 = vadd.f32 %v538, %v539
          %v570 = vrot.slane %v569, 4
          %v571 = vadd.f32 %v569, %v570
          %v572 = vrot.slane %v571, 2
          %v573 = vadd.f32 %v571, %v572
          %v574 = vrot.slane %v573, 1
          %v575 = vadd.f32 %v573, %v574
          %v576 = vadd.f32 %v540, %v541
          %v577 = vrot.slane %v576, 4
          %v578 = vadd.f32 %v576, %v577
          %v579 = vrot.slane %v578, 2
          %v580 = vadd.f32 %v578, %v579
          %v581 = vrot.slane %v580, 1
          %v582 = vadd.f32 %v580, %v581
          %v583 = vadd.f32 %v542, %v543
          %v584 = vrot.slane %v583, 4
          %v585 = vadd.f32 %v583, %v584
          %v586 = vrot.slane %v585, 2
          %v587 = vadd.f32 %v585, %v586
          %v588 = vrot.slane %v587, 1
          %v589 = vadd.f32 %v587, %v588
          %v590 = vadd.f32 %v544, %v545
          %v591 = vrot.slane %v590, 4
          %v592 = vadd.f32 %v590, %v591
          %v593 = vrot.slane %v592, 2
          %v594 = vadd.f32 %v592, %v593
          %v595 = vrot.slane %v594, 1
          %v596 = vadd.f32 %v594, %v595
          %v597 = vadd.f32 %v546, %v547
          %v598 = vrot.slane %v597, 4
          %v599 = vadd.f32 %v597, %v598
          %v600 = vrot.slane %v599, 2
          %v601 = vadd.f32 %v599, %v600
          %v602 = vrot.slane %v601, 1
          %v603 = vadd.f32 %v601, %v602
          %v604 = vmul.f32 %v554, 0.0625
          %v605 = vmul.f32 %v561, 0.0625
          %v606 = vmul.f32 %v568, 0.0625
          %v607 = vmul.f32 %v575, 0.0625
          %v608 = vmul.f32 %v582, 0.0625
          %v609 = vmul.f32 %v589, 0.0625
          %v610 = vmul.f32 %v596, 0.0625
          %v611 = vmul.f32 %v603, 0.0625
          %v612 = vpack.c.bf16 %v604, %v604
          %v613 = vpack.c.bf16 %v605, %v605
          %v614 = vpack.c.bf16 %v606, %v606
          %v615 = vpack.c.bf16 %v607, %v607
          %v616 = vpack.c.bf16 %v608, %v608
          %v617 = vpack.c.bf16 %v609, %v609
          %v618 = vpack.c.bf16 %v610, %v610
          %v619 = vpack.c.bf16 %v611, %v611
          %v620 = vld [vmem:[#allocation16] sm:$0xff]
          %v621 = vld [vmem:[#allocation16 + $0x8] sm:$0xff]
          %v622 = vld [vmem:[#allocation16 + $0x10] sm:$0xff]
          %v623 = vld [vmem:[#allocation16 + $0x18] sm:$0xff]
          %v624 = vld [vmem:[#allocation16 + $0x20] sm:$0xff]
          %v625 = vld [vmem:[#allocation16 + $0x28] sm:$0xff]
          %v626 = vld [vmem:[#allocation16 + $0x30] sm:$0xff]
          %v627 = vld [vmem:[#allocation16 + $0x38] sm:$0xff]
          %v628 = vld [vmem:[#allocation16 + $0x40] sm:$0xff]
          %v629 = vld [vmem:[#allocation16 + $0x48] sm:$0xff]
          %v630 = vld [vmem:[#allocation16 + $0x50] sm:$0xff]
          %v631 = vld [vmem:[#allocation16 + $0x58] sm:$0xff]
          %v632 = vld [vmem:[#allocation16 + $0x60] sm:$0xff]
          %v633 = vld [vmem:[#allocation16 + $0x68] sm:$0xff]
          %v634 = vld [vmem:[#allocation16 + $0x70] sm:$0xff]
          %v635 = vld [vmem:[#allocation16 + $0x78] sm:$0xff]
          %v636 = vld [vmem:[%s9] sm:$0x3]
          %v638 = vlaneseq
          %v639 = vshrl.u32 %v638, 7
          %v640 = vsub.s32 0, %v639
          %v641 = vrot.slane %v636, %v640
          %v642 = vlaneseq
          %v643 = vshrl.u32 %v642, 7
          %v644 = vsub.s32 1, %v643
          %v645 = vrot.slane %v636, %v644
          %v656 = vunpack.c.l.b16 %v612
          %v657 = vunpack.c.l.b16 %v613
          %v658 = vunpack.c.l.b16 %v614
          %v659 = vunpack.c.l.b16 %v615
          %v660 = vunpack.c.l.b16 %v616
          %v661 = vunpack.c.l.b16 %v617
          %v662 = vunpack.c.l.b16 %v618
          %v663 = vunpack.c.l.b16 %v619
          %vm664 = vcmask 1041409
          %v665 = vsel %vm664, %v657, %v656
          %vm666 = vcmask 1042434
          %v667 = vsel %vm666, %v658, %v665
          %vm668 = vcmask 1043459
          %v669 = vsel %vm668, %v659, %v667
          %vm670 = vcmask 1044484
          %v671 = vsel %vm670, %v660, %v669
          %vm672 = vcmask 1045509
          %v673 = vsel %vm672, %v661, %v671
          %vm674 = vcmask 1046534
          %v675 = vsel %vm674, %v662, %v673
          %vm676 = vcmask 1047559
          %v677 = vsel %vm676, %v663, %v675
          %v678 = vpack.c.b16 %v677, %v677
          %v696 = vunpack.c.l.b16 %v620
          %v697 = vunpack.c.h.b16 %v620
          %v698 = vunpack.c.l.b16 %v621
          %v699 = vunpack.c.h.b16 %v621
          %v700 = vunpack.c.l.b16 %v622
          %v701 = vunpack.c.h.b16 %v622
          %v702 = vunpack.c.l.b16 %v623
          %v703 = vunpack.c.h.b16 %v623
          %v704 = vunpack.c.l.b16 %v624
          %v705 = vunpack.c.h.b16 %v624
          %v706 = vunpack.c.l.b16 %v625
          %v707 = vunpack.c.h.b16 %v625
          %v708 = vunpack.c.l.b16 %v626
          %v709 = vunpack.c.h.b16 %v626
          %v710 = vunpack.c.l.b16 %v627
          %v711 = vunpack.c.h.b16 %v627
          %v712 = vunpack.c.l.b16 %v628
          %v713 = vunpack.c.h.b16 %v628
          %v714 = vunpack.c.l.b16 %v629
          %v715 = vunpack.c.h.b16 %v629
          %v716 = vunpack.c.l.b16 %v630
          %v717 = vunpack.c.h.b16 %v630
          %v718 = vunpack.c.l.b16 %v631
          %v719 = vunpack.c.h.b16 %v631
          %v720 = vunpack.c.l.b16 %v632
          %v721 = vunpack.c.h.b16 %v632
          %v722 = vunpack.c.l.b16 %v633
          %v723 = vunpack.c.h.b16 %v633
          %v724 = vunpack.c.l.b16 %v634
          %v725 = vunpack.c.h.b16 %v634
          %v726 = vunpack.c.l.b16 %v635
          %v727 = vunpack.c.h.b16 %v635
          %v728 = vpack.c.b16 %v698, %v696
          %v729 = vpack.c.b16 %v699, %v697
          %v730 = vpack.c.b16 %v702, %v700
          %v731 = vpack.c.b16 %v703, %v701
          %v732 = vpack.c.b16 %v706, %v704
          %v733 = vpack.c.b16 %v707, %v705
          %v734 = vpack.c.b16 %v710, %v708
          %v735 = vpack.c.b16 %v711, %v709
          %v736 = vpack.c.b16 %v714, %v712
          %v737 = vpack.c.b16 %v715, %v713
          %v738 = vpack.c.b16 %v718, %v716
          %v739 = vpack.c.b16 %v719, %v717
          %v740 = vpack.c.b16 %v722, %v720
          %v741 = vpack.c.b16 %v723, %v721
          %v742 = vpack.c.b16 %v726, %v724
          %v743 = vpack.c.b16 %v727, %v725
          %760 = vmatprep.subr.bf16.mxu0 %v743
          %761 = vmatpush1.bf16.msra.mxu0 %v742
          %762 = vmatprep.subr.bf16.mxu0 %v741
          %763 = vmatpush1.bf16.msra.mxu0 %v740
          %764 = vmatprep.subr.bf16.mxu0 %v739
          %765 = vmatpush1.bf16.msra.mxu0 %v738
          %766 = vmatprep.subr.bf16.mxu0 %v737
          %767 = vmatpush1.bf16.msra.mxu0 %v736
          %768 = vmatprep.subr.bf16.mxu0 %v735
          %769 = vmatpush1.bf16.msra.mxu0 %v734
          %770 = vmatprep.subr.bf16.mxu0 %v733
          %771 = vmatpush1.bf16.msra.mxu0 %v732
          %772 = vmatprep.subr.bf16.mxu0 %v731
          %773 = vmatpush1.bf16.msra.mxu0 %v730
          %774 = vmatprep.subr.bf16.mxu0 %v729
          %775 = vmatpush1.bf16.msra.mxu0 %v728
          %776 = vmatprep.subr.bf16.mxu0 0
          %777 = vmatpush2.bf16.msra.mxu0 0
          %778 = vmatprep.subr.bf16.mxu0 0
          %779 = vmatpush2.bf16.msra.mxu0 0
          %780 = vmatprep.subr.bf16.mxu0 0
          %781 = vmatpush2.bf16.msra.mxu0 0
          %782 = vmatprep.subr.bf16.mxu0 0
          %783 = vmatpush2.bf16.msra.mxu0 0
          %784 = vmatprep.subr.bf16.mxu0 0
          %785 = vmatpush2.bf16.msra.mxu0 0
          %786 = vmatprep.subr.bf16.mxu0 0
          %787 = vmatpush2.bf16.msra.mxu0 0
          %788 = vmatprep.subr.bf16.mxu0 0
          %789 = vmatpush2.bf16.msra.mxu0 0
          %790 = vmatprep.subr.bf16.mxu0 0
          %791 = vmatpush2.bf16.msra.mxu0 0
          %792 = vmatprep.mubr.bf16.mxu0 0
          %793 = vmatmul.mubr.bf16.gmra.mxu0 %v678
          %v794 = vpop.f32.mrf.mxu0
          %v795 = vadd.f32 %v641, %v794
          %v796 = vpop.f32.mrf.mxu0
          %v797 = vadd.f32 %v645, %v796
          %v798 = vpop.f32.mrf.mxu0
          %v799 = vpop.f32.mrf.mxu0
          %800 = vdwg.mxu0
          %801 = vst [vmem:[#allocation6] sm:$0xff] %v795
          %802 = vst [vmem:[#allocation7] sm:$0xff] %v797
          %v803 = vld [vmem:[%s1] sm:$0xf]
          %804 = vst [vmem:[#allocation8] sm:$0xf] %v803
          %v805 = vld [vmem:[#allocation15] sm:$0xf]
          %v806 = vld [vmem:[#allocation15 + $0x4] sm:$0xf]
          %v807 = vld [vmem:[#allocation15 + $0x8] sm:$0xf]
          %v808 = vld [vmem:[#allocation15 + $0xc] sm:$0xf]
          %v809 = vld [vmem:[#allocation15 + $0x10] sm:$0xf]
          %v810 = vld [vmem:[#allocation15 + $0x14] sm:$0xf]
          %v811 = vld [vmem:[#allocation15 + $0x18] sm:$0xf]
          %v812 = vld [vmem:[#allocation15 + $0x1c] sm:$0xf]
          %v813 = vld [vmem:[#allocation15 + $0x20] sm:$0xf]
          %v814 = vld [vmem:[#allocation15 + $0x24] sm:$0xf]
          %v815 = vld [vmem:[#allocation15 + $0x28] sm:$0xf]
          %v816 = vld [vmem:[#allocation15 + $0x2c] sm:$0xf]
          %v817 = vld [vmem:[#allocation15 + $0x30] sm:$0xf]
          %v818 = vld [vmem:[#allocation15 + $0x34] sm:$0xf]
          %v819 = vld [vmem:[#allocation15 + $0x38] sm:$0xf]
          %v820 = vld [vmem:[#allocation15 + $0x3c] sm:$0xf]
          %v821 = vld [vmem:[%s6] sm:$0x1]
          %v823 = vlaneseq
          %v824 = vshrl.u32 %v823, 7
          %v825 = vsub.s32 0, %v824
          %v826 = vrot.slane %v821, %v825
          %v844 = vunpack.c.l.b16 %v516
          %v845 = vunpack.c.l.b16 %v517
          %v846 = vunpack.c.l.b16 %v518
          %v847 = vunpack.c.l.b16 %v519
          %v848 = vunpack.c.l.b16 %v520
          %v849 = vunpack.c.l.b16 %v521
          %v850 = vunpack.c.l.b16 %v522
          %v851 = vunpack.c.l.b16 %v523
          %v852 = vunpack.c.l.b16 %v524
          %v853 = vunpack.c.l.b16 %v525
          %v854 = vunpack.c.l.b16 %v526
          %v855 = vunpack.c.l.b16 %v527
          %v856 = vunpack.c.l.b16 %v528
          %v857 = vunpack.c.l.b16 %v529
          %v858 = vunpack.c.l.b16 %v530
          %v859 = vunpack.c.l.b16 %v531
          %v860 = vpack.c.b16 %v845, %v844
          %v861 = vpack.c.b16 %v847, %v846
          %v862 = vpack.c.b16 %v849, %v848
          %v863 = vpack.c.b16 %v851, %v850
          %v864 = vpack.c.b16 %v853, %v852
          %v865 = vpack.c.b16 %v855, %v854
          %v866 = vpack.c.b16 %v857, %v856
          %v867 = vpack.c.b16 %v859, %v858
          %v892 = vunpack.c.l.b16 %v805
          %v893 = vunpack.c.l.b16 %v806
          %v894 = vunpack.c.l.b16 %v807
          %v895 = vunpack.c.l.b16 %v808
          %v896 = vunpack.c.l.b16 %v809
          %v897 = vunpack.c.l.b16 %v810
          %v898 = vunpack.c.l.b16 %v811
          %v899 = vunpack.c.l.b16 %v812
          %v900 = vunpack.c.l.b16 %v813
          %v901 = vunpack.c.l.b16 %v814
          %v902 = vunpack.c.l.b16 %v815
          %v903 = vunpack.c.l.b16 %v816
          %v904 = vunpack.c.l.b16 %v817
          %v905 = vunpack.c.l.b16 %v818
          %v906 = vunpack.c.l.b16 %v819
          %v907 = vunpack.c.l.b16 %v820
          %v908 = vpack.c.b16 %v893, %v892
          %v909 = vpack.c.b16 %v895, %v894
          %v910 = vpack.c.b16 %v897, %v896
          %v911 = vpack.c.b16 %v899, %v898
          %v912 = vpack.c.b16 %v901, %v900
          %v913 = vpack.c.b16 %v903, %v902
          %v914 = vpack.c.b16 %v905, %v904
          %v915 = vpack.c.b16 %v907, %v906
          %924 = vmatprep.subr.bf16.mxu0 0
          %925 = vmatpush1.bf16.msra.mxu0 %v915
          %926 = vmatprep.subr.bf16.mxu0 0
          %927 = vmatpush1.bf16.msra.mxu0 %v914
          %928 = vmatprep.subr.bf16.mxu0 0
          %929 = vmatpush1.bf16.msra.mxu0 %v913
          %930 = vmatprep.subr.bf16.mxu0 0
          %931 = vmatpush1.bf16.msra.mxu0 %v912
          %932 = vmatprep.subr.bf16.mxu0 0
          %933 = vmatpush1.bf16.msra.mxu0 %v911
          %934 = vmatprep.subr.bf16.mxu0 0
          %935 = vmatpush1.bf16.msra.mxu0 %v910
          %936 = vmatprep.subr.bf16.mxu0 0
          %937 = vmatpush1.bf16.msra.mxu0 %v909
          %938 = vmatprep.subr.bf16.mxu0 0
          %939 = vmatpush1.bf16.msra.mxu0 %v908
          %940 = vmatprep.subr.bf16.mxu0 0
          %941 = vmatpush2.bf16.msra.mxu0 0
          %942 = vmatprep.subr.bf16.mxu0 0
          %943 = vmatpush2.bf16.msra.mxu0 0
          %944 = vmatprep.subr.bf16.mxu0 0
          %945 = vmatpush2.bf16.msra.mxu0 0
          %946 = vmatprep.subr.bf16.mxu0 0
          %947 = vmatpush2.bf16.msra.mxu0 0
          %948 = vmatprep.subr.bf16.mxu0 0
          %949 = vmatpush2.bf16.msra.mxu0 0
          %950 = vmatprep.subr.bf16.mxu0 0
          %951 = vmatpush2.bf16.msra.mxu0 0
          %952 = vmatprep.subr.bf16.mxu0 0
          %953 = vmatpush2.bf16.msra.mxu0 0
          %954 = vmatprep.subr.bf16.mxu0 0
          %955 = vmatpush2.bf16.msra.mxu0 0
          %956 = vmatprep.mubr.bf16.mxu0 0
          %957 = vmatmul.mubr.bf16.gmra.mxu0 %v860
          %v958 = vpop.f32.mrf.mxu0
          %v959 = vadd.f32 %v826, %v958
          %v960 = vpop.f32.mrf.mxu0
          %v961 = vpop.f32.mrf.mxu0
          %v962 = vadd.f32 %v826, %v961
          %v963 = vpop.f32.mrf.mxu0
          %964 = vmatprep.mubr.bf16.mxu0 0
          %965 = vmatmul.mubr.bf16.gmra.mxu0 %v861
          %v966 = vpop.f32.mrf.mxu0
          %v967 = vadd.f32 %v826, %v966
          %v968 = vpop.f32.mrf.mxu0
          %v969 = vpop.f32.mrf.mxu0
          %v970 = vadd.f32 %v826, %v969
          %v971 = vpop.f32.mrf.mxu0
          %972 = vmatprep.mubr.bf16.mxu0 0
          %973 = vmatmul.mubr.bf16.gmra.mxu0 %v862
          %v974 = vpop.f32.mrf.mxu0
          %v975 = vadd.f32 %v826, %v974
          %v976 = vpop.f32.mrf.mxu0
          %v977 = vpop.f32.mrf.mxu0
          %v978 = vadd.f32 %v826, %v977
          %v979 = vpop.f32.mrf.mxu0
          %980 = vmatprep.mubr.bf16.mxu0 0
          %981 = vmatmul.mubr.bf16.gmra.mxu0 %v863
          %v982 = vpop.f32.mrf.mxu0
          %v983 = vadd.f32 %v826, %v982
          %v984 = vpop.f32.mrf.mxu0
          %v985 = vpop.f32.mrf.mxu0
          %v986 = vadd.f32 %v826, %v985
          %v987 = vpop.f32.mrf.mxu0
          %988 = vmatprep.mubr.bf16.mxu0 0
          %989 = vmatmul.mubr.bf16.gmra.mxu0 %v864
          %v990 = vpop.f32.mrf.mxu0
          %v991 = vadd.f32 %v826, %v990
          %v992 = vpop.f32.mrf.mxu0
          %v993 = vpop.f32.mrf.mxu0
          %v994 = vadd.f32 %v826, %v993
          %v995 = vpop.f32.mrf.mxu0
          %996 = vmatprep.mubr.bf16.mxu0 0
          %997 = vmatmul.mubr.bf16.gmra.mxu0 %v865
          %v998 = vpop.f32.mrf.mxu0
          %v999 = vadd.f32 %v826, %v998
          %v1000 = vpop.f32.mrf.mxu0
          %v1001 = vpop.f32.mrf.mxu0
          %v1002 = vadd.f32 %v826, %v1001
          %v1003 = vpop.f32.mrf.mxu0
          %1004 = vmatprep.mubr.bf16.mxu0 0
          %1005 = vmatmul.mubr.bf16.gmra.mxu0 %v866
          %v1006 = vpop.f32.mrf.mxu0
          %v1007 = vadd.f32 %v826, %v1006
          %v1008 = vpop.f32.mrf.mxu0
          %v1009 = vpop.f32.mrf.mxu0
          %v1010 = vadd.f32 %v826, %v1009
          %v1011 = vpop.f32.mrf.mxu0
          %1012 = vmatprep.mubr.bf16.mxu0 0
          %1013 = vmatmul.mubr.bf16.gmra.mxu0 %v867
          %v1014 = vpop.f32.mrf.mxu0
          %v1015 = vadd.f32 %v826, %v1014
          %v1016 = vpop.f32.mrf.mxu0
          %v1017 = vpop.f32.mrf.mxu0
          %v1018 = vadd.f32 %v826, %v1017
          %v1019 = vpop.f32.mrf.mxu0
          %1020 = vdwg.mxu0
          %1021 = vst [vmem:[#allocation5] sm:$0xff] %v959
          %1022 = vst [vmem:[#allocation5 + $0x8] sm:$0xff] %v962
          %1023 = vst [vmem:[#allocation5 + $0x10] sm:$0xff] %v967
          %1024 = vst [vmem:[#allocation5 + $0x18] sm:$0xff] %v970
          %1025 = vst [vmem:[#allocation5 + $0x20] sm:$0xff] %v975
          %1026 = vst [vmem:[#allocation5 + $0x28] sm:$0xff] %v978
          %1027 = vst [vmem:[#allocation5 + $0x30] sm:$0xff] %v983
          %1028 = vst [vmem:[#allocation5 + $0x38] sm:$0xff] %v986
          %1029 = vst [vmem:[#allocation5 + $0x40] sm:$0xff] %v991
          %1030 = vst [vmem:[#allocation5 + $0x48] sm:$0xff] %v994
          %1031 = vst [vmem:[#allocation5 + $0x50] sm:$0xff] %v999
          %1032 = vst [vmem:[#allocation5 + $0x58] sm:$0xff] %v1002
          %1033 = vst [vmem:[#allocation5 + $0x60] sm:$0xff] %v1007
          %1034 = vst [vmem:[#allocation5 + $0x68] sm:$0xff] %v1010
          %1035 = vst [vmem:[#allocation5 + $0x70] sm:$0xff] %v1015
          %1036 = vst [vmem:[#allocation5 + $0x78] sm:$0xff] %v1018
        $region84: #{tpu_custom_call.1} parent=63 // pred_fallthru
          _
        %v1037 = vld [vmem:[#allocation6] sm:$0xff]
        %v1038 = vld [vmem:[#allocation7] sm:$0xff]
        %v1039 = vld [vmem:[#allocation8] sm:$0xf]
        %v1040 = vpack.c.bf16 %v1037, %v1037
        %v1041 = vld [vmem:[#allocation10] sm:$0xff]
        %v1042 = vld [vmem:[#allocation10 + $0x8] sm:$0xff]
        %v1043 = vld [vmem:[#allocation10 + $0x10] sm:$0xff]
        %v1044 = vld [vmem:[#allocation10 + $0x18] sm:$0xff]
        %v1045 = vld [vmem:[#allocation10 + $0x20] sm:$0xff]
        %v1046 = vld [vmem:[#allocation10 + $0x28] sm:$0xff]
        %v1047 = vld [vmem:[#allocation10 + $0x30] sm:$0xff]
        %v1048 = vld [vmem:[#allocation10 + $0x38] sm:$0xff]
        %v1049 = vld [vmem:[#allocation10 + $0x40] sm:$0xff]
        %v1050 = vld [vmem:[#allocation10 + $0x48] sm:$0xff]
        %v1051 = vld [vmem:[#allocation10 + $0x50] sm:$0xff]
        %v1052 = vld [vmem:[#allocation10 + $0x58] sm:$0xff]
        %v1053 = vld [vmem:[#allocation10 + $0x60] sm:$0xff]
        %v1054 = vld [vmem:[#allocation10 + $0x68] sm:$0xff]
        %v1055 = vld [vmem:[#allocation10 + $0x70] sm:$0xff]
        %v1056 = vld [vmem:[#allocation10 + $0x78] sm:$0xff]
        %v1057 = vld [vmem:[#allocation10 + $0x80] sm:$0xff]
        %v1058 = vld [vmem:[#allocation10 + $0x88] sm:$0xff]
        %v1059 = vld [vmem:[#allocation10 + $0x90] sm:$0xff]
        %v1060 = vld [vmem:[#allocation10 + $0x98] sm:$0xff]
        %v1061 = vld [vmem:[#allocation10 + $0xa0] sm:$0xff]
        %v1062 = vld [vmem:[#allocation10 + $0xa8] sm:$0xff]
        %v1063 = vld [vmem:[#allocation10 + $0xb0] sm:$0xff]
        %v1064 = vld [vmem:[#allocation10 + $0xb8] sm:$0xff]
        %v1065 = vld [vmem:[#allocation10 + $0xc0] sm:$0xff]
        %v1066 = vld [vmem:[#allocation10 + $0xc8] sm:$0xff]
        %v1067 = vld [vmem:[#allocation10 + $0xd0] sm:$0xff]
        %v1068 = vld [vmem:[#allocation10 + $0xd8] sm:$0xff]
        %v1069 = vld [vmem:[#allocation10 + $0xe0] sm:$0xff]
        %v1070 = vld [vmem:[#allocation10 + $0xe8] sm:$0xff]
        %v1071 = vld [vmem:[#allocation10 + $0xf0] sm:$0xff]
        %v1072 = vld [vmem:[#allocation10 + $0xf8] sm:$0xff]
        %v1073 = vld [vmem:[#allocation10 + $0x100] sm:$0xff]
        %v1074 = vld [vmem:[#allocation10 + $0x108] sm:$0xff]
        %v1075 = vld [vmem:[#allocation10 + $0x110] sm:$0xff]
        %v1076 = vld [vmem:[#allocation10 + $0x118] sm:$0xff]
        %v1077 = vld [vmem:[#allocation10 + $0x120] sm:$0xff]
        %v1078 = vld [vmem:[#allocation10 + $0x128] sm:$0xff]
        %v1079 = vld [vmem:[#allocation10 + $0x130] sm:$0xff]
        %v1080 = vld [vmem:[#allocation10 + $0x138] sm:$0xff]
        %v1081 = vld [vmem:[#allocation10 + $0x140] sm:$0xff]
        %v1082 = vld [vmem:[#allocation10 + $0x148] sm:$0xff]
        %v1083 = vld [vmem:[#allocation10 + $0x150] sm:$0xff]
        %v1084 = vld [vmem:[#allocation10 + $0x158] sm:$0xff]
        %v1085 = vld [vmem:[#allocation10 + $0x160] sm:$0xff]
        %v1086 = vld [vmem:[#allocation10 + $0x168] sm:$0xff]
        %v1087 = vld [vmem:[#allocation10 + $0x170] sm:$0xff]
        %v1088 = vld [vmem:[#allocation10 + $0x178] sm:$0xff]
        %v1089 = vld [vmem:[#allocation10 + $0x180] sm:$0xff]
        %v1090 = vld [vmem:[#allocation10 + $0x188] sm:$0xff]
        %v1091 = vld [vmem:[#allocation10 + $0x190] sm:$0xff]
        %v1092 = vld [vmem:[#allocation10 + $0x198] sm:$0xff]
        %v1093 = vld [vmem:[#allocation10 + $0x1a0] sm:$0xff]
        %v1094 = vld [vmem:[#allocation10 + $0x1a8] sm:$0xff]
        %v1095 = vld [vmem:[#allocation10 + $0x1b0] sm:$0xff]
        %v1096 = vld [vmem:[#allocation10 + $0x1b8] sm:$0xff]
        %v1097 = vld [vmem:[#allocation10 + $0x1c0] sm:$0xff]
        %v1098 = vld [vmem:[#allocation10 + $0x1c8] sm:$0xff]
        %v1099 = vld [vmem:[#allocation10 + $0x1d0] sm:$0xff]
        %v1100 = vld [vmem:[#allocation10 + $0x1d8] sm:$0xff]
        %v1101 = vld [vmem:[#allocation10 + $0x1e0] sm:$0xff]
        %v1102 = vld [vmem:[#allocation10 + $0x1e8] sm:$0xff]
        %v1103 = vld [vmem:[#allocation10 + $0x1f0] sm:$0xff]
        %v1104 = vld [vmem:[#allocation10 + $0x1f8] sm:$0xff]
        %v1105 = vld [vmem:[#allocation10 + $0x200] sm:$0xff]
        %v1106 = vld [vmem:[#allocation10 + $0x208] sm:$0xff]
        %v1107 = vld [vmem:[#allocation10 + $0x210] sm:$0xff]
        %v1108 = vld [vmem:[#allocation10 + $0x218] sm:$0xff]
        %v1109 = vld [vmem:[#allocation10 + $0x220] sm:$0xff]
        %v1110 = vld [vmem:[#allocation10 + $0x228] sm:$0xff]
        %v1111 = vld [vmem:[#allocation10 + $0x230] sm:$0xff]
        %v1112 = vld [vmem:[#allocation10 + $0x238] sm:$0xff]
        %v1113 = vld [vmem:[#allocation10 + $0x240] sm:$0xff]
        %v1114 = vld [vmem:[#allocation10 + $0x248] sm:$0xff]
        %v1115 = vld [vmem:[#allocation10 + $0x250] sm:$0xff]
        %v1116 = vld [vmem:[#allocation10 + $0x258] sm:$0xff]
        %v1117 = vld [vmem:[#allocation10 + $0x260] sm:$0xff]
        %v1118 = vld [vmem:[#allocation10 + $0x268] sm:$0xff]
        %v1119 = vld [vmem:[#allocation10 + $0x270] sm:$0xff]
        %v1120 = vld [vmem:[#allocation10 + $0x278] sm:$0xff]
        %v1121 = vld [vmem:[#allocation10 + $0x280] sm:$0xff]
        %v1122 = vld [vmem:[#allocation10 + $0x288] sm:$0xff]
        %v1123 = vld [vmem:[#allocation10 + $0x290] sm:$0xff]
        %v1124 = vld [vmem:[#allocation10 + $0x298] sm:$0xff]
        %v1125 = vld [vmem:[#allocation10 + $0x2a0] sm:$0xff]
        %v1126 = vld [vmem:[#allocation10 + $0x2a8] sm:$0xff]
        %v1127 = vld [vmem:[#allocation10 + $0x2b0] sm:$0xff]
        %v1128 = vld [vmem:[#allocation10 + $0x2b8] sm:$0xff]
        %v1129 = vld [vmem:[#allocation10 + $0x2c0] sm:$0xff]
        %v1130 = vld [vmem:[#allocation10 + $0x2c8] sm:$0xff]
        %v1131 = vld [vmem:[#allocation10 + $0x2d0] sm:$0xff]
        %v1132 = vld [vmem:[#allocation10 + $0x2d8] sm:$0xff]
        %v1133 = vld [vmem:[#allocation10 + $0x2e0] sm:$0xff]
        %v1134 = vld [vmem:[#allocation10 + $0x2e8] sm:$0xff]
        %v1135 = vld [vmem:[#allocation10 + $0x2f0] sm:$0xff]
        %v1136 = vld [vmem:[#allocation10 + $0x2f8] sm:$0xff]
        %v1137 = vld [vmem:[%s3] sm:$0x3f]
        %v1139 = vlaneseq
        %v1140 = vshrl.u32 %v1139, 7
        %v1141 = vsub.s32 0, %v1140
        %v1142 = vrot.slane %v1137, %v1141
        %v1143 = vlaneseq
        %v1144 = vshrl.u32 %v1143, 7
        %v1145 = vsub.s32 1, %v1144
        %v1146 = vrot.slane %v1137, %v1145
        %v1147 = vlaneseq
        %v1148 = vshrl.u32 %v1147, 7
        %v1149 = vsub.s32 2, %v1148
        %v1150 = vrot.slane %v1137, %v1149
        %v1151 = vlaneseq
        %v1152 = vshrl.u32 %v1151, 7
        %v1153 = vsub.s32 3, %v1152
        %v1154 = vrot.slane %v1137, %v1153
        %v1155 = vlaneseq
        %v1156 = vshrl.u32 %v1155, 7
        %v1157 = vsub.s32 4, %v1156
        %v1158 = vrot.slane %v1137, %v1157
        %v1159 = vlaneseq
        %v1160 = vshrl.u32 %v1159, 7
        %v1161 = vsub.s32 5, %v1160
        %v1162 = vrot.slane %v1137, %v1161
        %v1265 = vunpack.c.l.b16 %v1041
        %v1266 = vunpack.c.h.b16 %v1041
        %v1267 = vunpack.c.l.b16 %v1042
        %v1268 = vunpack.c.h.b16 %v1042
        %v1269 = vunpack.c.l.b16 %v1043
        %v1270 = vunpack.c.h.b16 %v1043
        %v1271 = vunpack.c.l.b16 %v1044
        %v1272 = vunpack.c.h.b16 %v1044
        %v1273 = vunpack.c.l.b16 %v1045
        %v1274 = vunpack.c.h.b16 %v1045
        %v1275 = vunpack.c.l.b16 %v1046
        %v1276 = vunpack.c.h.b16 %v1046
        %v1277 = vunpack.c.l.b16 %v1047
        %v1278 = vunpack.c.h.b16 %v1047
        %v1279 = vunpack.c.l.b16 %v1048
        %v1280 = vunpack.c.h.b16 %v1048
        %v1281 = vunpack.c.l.b16 %v1049
        %v1282 = vunpack.c.h.b16 %v1049
        %v1283 = vunpack.c.l.b16 %v1050
        %v1284 = vunpack.c.h.b16 %v1050
        %v1285 = vunpack.c.l.b16 %v1051
        %v1286 = vunpack.c.h.b16 %v1051
        %v1287 = vunpack.c.l.b16 %v1052
        %v1288 = vunpack.c.h.b16 %v1052
        %v1289 = vunpack.c.l.b16 %v1053
        %v1290 = vunpack.c.h.b16 %v1053
        %v1291 = vunpack.c.l.b16 %v1054
        %v1292 = vunpack.c.h.b16 %v1054
        %v1293 = vunpack.c.l.b16 %v1055
        %v1294 = vunpack.c.h.b16 %v1055
        %v1295 = vunpack.c.l.b16 %v1056
        %v1296 = vunpack.c.h.b16 %v1056
        %v1297 = vunpack.c.l.b16 %v1057
        %v1298 = vunpack.c.h.b16 %v1057
        %v1299 = vunpack.c.l.b16 %v1058
        %v1300 = vunpack.c.h.b16 %v1058
        %v1301 = vunpack.c.l.b16 %v1059
        %v1302 = vunpack.c.h.b16 %v1059
        %v1303 = vunpack.c.l.b16 %v1060
        %v1304 = vunpack.c.h.b16 %v1060
        %v1305 = vunpack.c.l.b16 %v1061
        %v1306 = vunpack.c.h.b16 %v1061
        %v1307 = vunpack.c.l.b16 %v1062
        %v1308 = vunpack.c.h.b16 %v1062
        %v1309 = vunpack.c.l.b16 %v1063
        %v1310 = vunpack.c.h.b16 %v1063
        %v1311 = vunpack.c.l.b16 %v1064
        %v1312 = vunpack.c.h.b16 %v1064
        %v1313 = vunpack.c.l.b16 %v1065
        %v1314 = vunpack.c.h.b16 %v1065
        %v1315 = vunpack.c.l.b16 %v1066
        %v1316 = vunpack.c.h.b16 %v1066
        %v1317 = vunpack.c.l.b16 %v1067
        %v1318 = vunpack.c.h.b16 %v1067
        %v1319 = vunpack.c.l.b16 %v1068
        %v1320 = vunpack.c.h.b16 %v1068
        %v1321 = vunpack.c.l.b16 %v1069
        %v1322 = vunpack.c.h.b16 %v1069
        %v1323 = vunpack.c.l.b16 %v1070
        %v1324 = vunpack.c.h.b16 %v1070
        %v1325 = vunpack.c.l.b16 %v1071
        %v1326 = vunpack.c.h.b16 %v1071
        %v1327 = vunpack.c.l.b16 %v1072
        %v1328 = vunpack.c.h.b16 %v1072
        %v1329 = vunpack.c.l.b16 %v1073
        %v1330 = vunpack.c.h.b16 %v1073
        %v1331 = vunpack.c.l.b16 %v1074
        %v1332 = vunpack.c.h.b16 %v1074
        %v1333 = vunpack.c.l.b16 %v1075
        %v1334 = vunpack.c.h.b16 %v1075
        %v1335 = vunpack.c.l.b16 %v1076
        %v1336 = vunpack.c.h.b16 %v1076
        %v1337 = vunpack.c.l.b16 %v1077
        %v1338 = vunpack.c.h.b16 %v1077
        %v1339 = vunpack.c.l.b16 %v1078
        %v1340 = vunpack.c.h.b16 %v1078
        %v1341 = vunpack.c.l.b16 %v1079
        %v1342 = vunpack.c.h.b16 %v1079
        %v1343 = vunpack.c.l.b16 %v1080
        %v1344 = vunpack.c.h.b16 %v1080
        %v1345 = vunpack.c.l.b16 %v1081
        %v1346 = vunpack.c.h.b16 %v1081
        %v1347 = vunpack.c.l.b16 %v1082
        %v1348 = vunpack.c.h.b16 %v1082
        %v1349 = vunpack.c.l.b16 %v1083
        %v1350 = vunpack.c.h.b16 %v1083
        %v1351 = vunpack.c.l.b16 %v1084
        %v1352 = vunpack.c.h.b16 %v1084
        %v1353 = vunpack.c.l.b16 %v1085
        %v1354 = vunpack.c.h.b16 %v1085
        %v1355 = vunpack.c.l.b16 %v1086
        %v1356 = vunpack.c.h.b16 %v1086
        %v1357 = vunpack.c.l.b16 %v1087
        %v1358 = vunpack.c.h.b16 %v1087
        %v1359 = vunpack.c.l.b16 %v1088
        %v1360 = vunpack.c.h.b16 %v1088
        %v1361 = vunpack.c.l.b16 %v1089
        %v1362 = vunpack.c.h.b16 %v1089
        %v1363 = vunpack.c.l.b16 %v1090
        %v1364 = vunpack.c.h.b16 %v1090
        %v1365 = vunpack.c.l.b16 %v1091
        %v1366 = vunpack.c.h.b16 %v1091
        %v1367 = vunpack.c.l.b16 %v1092
        %v1368 = vunpack.c.h.b16 %v1092
        %v1369 = vunpack.c.l.b16 %v1093
        %v1370 = vunpack.c.h.b16 %v1093
        %v1371 = vunpack.c.l.b16 %v1094
        %v1372 = vunpack.c.h.b16 %v1094
        %v1373 = vunpack.c.l.b16 %v1095
        %v1374 = vunpack.c.h.b16 %v1095
        %v1375 = vunpack.c.l.b16 %v1096
        %v1376 = vunpack.c.h.b16 %v1096
        %v1377 = vunpack.c.l.b16 %v1097
        %v1378 = vunpack.c.h.b16 %v1097
        %v1379 = vunpack.c.l.b16 %v1098
        %v1380 = vunpack.c.h.b16 %v1098
        %v1381 = vunpack.c.l.b16 %v1099
        %v1382 = vunpack.c.h.b16 %v1099
        %v1383 = vunpack.c.l.b16 %v1100
        %v1384 = vunpack.c.h.b16 %v1100
        %v1385 = vunpack.c.l.b16 %v1101
        %v1386 = vunpack.c.h.b16 %v1101
        %v1387 = vunpack.c.l.b16 %v1102
        %v1388 = vunpack.c.h.b16 %v1102
        %v1389 = vunpack.c.l.b16 %v1103
        %v1390 = vunpack.c.h.b16 %v1103
        %v1391 = vunpack.c.l.b16 %v1104
        %v1392 = vunpack.c.h.b16 %v1104
        %v1393 = vunpack.c.l.b16 %v1105
        %v1394 = vunpack.c.h.b16 %v1105
        %v1395 = vunpack.c.l.b16 %v1106
        %v1396 = vunpack.c.h.b16 %v1106
        %v1397 = vunpack.c.l.b16 %v1107
        %v1398 = vunpack.c.h.b16 %v1107
        %v1399 = vunpack.c.l.b16 %v1108
        %v1400 = vunpack.c.h.b16 %v1108
        %v1401 = vunpack.c.l.b16 %v1109
        %v1402 = vunpack.c.h.b16 %v1109
        %v1403 = vunpack.c.l.b16 %v1110
        %v1404 = vunpack.c.h.b16 %v1110
        %v1405 = vunpack.c.l.b16 %v1111
        %v1406 = vunpack.c.h.b16 %v1111
        %v1407 = vunpack.c.l.b16 %v1112
        %v1408 = vunpack.c.h.b16 %v1112
        %v1409 = vunpack.c.l.b16 %v1113
        %v1410 = vunpack.c.h.b16 %v1113
        %v1411 = vunpack.c.l.b16 %v1114
        %v1412 = vunpack.c.h.b16 %v1114
        %v1413 = vunpack.c.l.b16 %v1115
        %v1414 = vunpack.c.h.b16 %v1115
        %v1415 = vunpack.c.l.b16 %v1116
        %v1416 = vunpack.c.h.b16 %v1116
        %v1417 = vunpack.c.l.b16 %v1117
        %v1418 = vunpack.c.h.b16 %v1117
        %v1419 = vunpack.c.l.b16 %v1118
        %v1420 = vunpack.c.h.b16 %v1118
        %v1421 = vunpack.c.l.b16 %v1119
        %v1422 = vunpack.c.h.b16 %v1119
        %v1423 = vunpack.c.l.b16 %v1120
        %v1424 = vunpack.c.h.b16 %v1120
        %v1425 = vunpack.c.l.b16 %v1121
        %v1426 = vunpack.c.h.b16 %v1121
        %v1427 = vunpack.c.l.b16 %v1122
        %v1428 = vunpack.c.h.b16 %v1122
        %v1429 = vunpack.c.l.b16 %v1123
        %v1430 = vunpack.c.h.b16 %v1123
        %v1431 = vunpack.c.l.b16 %v1124
        %v1432 = vunpack.c.h.b16 %v1124
        %v1433 = vunpack.c.l.b16 %v1125
        %v1434 = vunpack.c.h.b16 %v1125
        %v1435 = vunpack.c.l.b16 %v1126
        %v1436 = vunpack.c.h.b16 %v1126
        %v1437 = vunpack.c.l.b16 %v1127
        %v1438 = vunpack.c.h.b16 %v1127
        %v1439 = vunpack.c.l.b16 %v1128
        %v1440 = vunpack.c.h.b16 %v1128
        %v1441 = vunpack.c.l.b16 %v1129
        %v1442 = vunpack.c.h.b16 %v1129
        %v1443 = vunpack.c.l.b16 %v1130
        %v1444 = vunpack.c.h.b16 %v1130
        %v1445 = vunpack.c.l.b16 %v1131
        %v1446 = vunpack.c.h.b16 %v1131
        %v1447 = vunpack.c.l.b16 %v1132
        %v1448 = vunpack.c.h.b16 %v1132
        %v1449 = vunpack.c.l.b16 %v1133
        %v1450 = vunpack.c.h.b16 %v1133
        %v1451 = vunpack.c.l.b16 %v1134
        %v1452 = vunpack.c.h.b16 %v1134
        %v1453 = vunpack.c.l.b16 %v1135
        %v1454 = vunpack.c.h.b16 %v1135
        %v1455 = vunpack.c.l.b16 %v1136
        %v1456 = vunpack.c.h.b16 %v1136
        %v1457 = vpack.c.b16 %v1271, %v1265
        %v1458 = vpack.c.b16 %v1272, %v1266
        %v1459 = vpack.c.b16 %v1273, %v1267
        %v1460 = vpack.c.b16 %v1274, %v1268
        %v1461 = vpack.c.b16 %v1275, %v1269
        %v1462 = vpack.c.b16 %v1276, %v1270
        %v1463 = vpack.c.b16 %v1283, %v1277
        %v1464 = vpack.c.b16 %v1284, %v1278
        %v1465 = vpack.c.b16 %v1285, %v1279
        %v1466 = vpack.c.b16 %v1286, %v1280
        %v1467 = vpack.c.b16 %v1287, %v1281
        %v1468 = vpack.c.b16 %v1288, %v1282
        %v1469 = vpack.c.b16 %v1295, %v1289
        %v1470 = vpack.c.b16 %v1296, %v1290
        %v1471 = vpack.c.b16 %v1297, %v1291
        %v1472 = vpack.c.b16 %v1298, %v1292
        %v1473 = vpack.c.b16 %v1299, %v1293
        %v1474 = vpack.c.b16 %v1300, %v1294
        %v1475 = vpack.c.b16 %v1307, %v1301
        %v1476 = vpack.c.b16 %v1308, %v1302
        %v1477 = vpack.c.b16 %v1309, %v1303
        %v1478 = vpack.c.b16 %v1310, %v1304
        %v1479 = vpack.c.b16 %v1311, %v1305
        %v1480 = vpack.c.b16 %v1312, %v1306
        %v1481 = vpack.c.b16 %v1319, %v1313
        %v1482 = vpack.c.b16 %v1320, %v1314
        %v1483 = vpack.c.b16 %v1321, %v1315
        %v1484 = vpack.c.b16 %v1322, %v1316
        %v1485 = vpack.c.b16 %v1323, %v1317
        %v1486 = vpack.c.b16 %v1324, %v1318
        %v1487 = vpack.c.b16 %v1331, %v1325
        %v1488 = vpack.c.b16 %v1332, %v1326
        %v1489 = vpack.c.b16 %v1333, %v1327
        %v1490 = vpack.c.b16 %v1334, %v1328
        %v1491 = vpack.c.b16 %v1335, %v1329
        %v1492 = vpack.c.b16 %v1336, %v1330
        %v1493 = vpack.c.b16 %v1343, %v1337
        %v1494 = vpack.c.b16 %v1344, %v1338
        %v1495 = vpack.c.b16 %v1345, %v1339
        %v1496 = vpack.c.b16 %v1346, %v1340
        %v1497 = vpack.c.b16 %v1347, %v1341
        %v1498 = vpack.c.b16 %v1348, %v1342
        %v1499 = vpack.c.b16 %v1355, %v1349
        %v1500 = vpack.c.b16 %v1356, %v1350
        %v1501 = vpack.c.b16 %v1357, %v1351
        %v1502 = vpack.c.b16 %v1358, %v1352
        %v1503 = vpack.c.b16 %v1359, %v1353
        %v1504 = vpack.c.b16 %v1360, %v1354
        %v1505 = vpack.c.b16 %v1367, %v1361
        %v1506 = vpack.c.b16 %v1368, %v1362
        %v1507 = vpack.c.b16 %v1369, %v1363
        %v1508 = vpack.c.b16 %v1370, %v1364
        %v1509 = vpack.c.b16 %v1371, %v1365
        %v1510 = vpack.c.b16 %v1372, %v1366
        %v1511 = vpack.c.b16 %v1379, %v1373
        %v1512 = vpack.c.b16 %v1380, %v1374
        %v1513 = vpack.c.b16 %v1381, %v1375
        %v1514 = vpack.c.b16 %v1382, %v1376
        %v1515 = vpack.c.b16 %v1383, %v1377
        %v1516 = vpack.c.b16 %v1384, %v1378
        %v1517 = vpack.c.b16 %v1391, %v1385
        %v1518 = vpack.c.b16 %v1392, %v1386
        %v1519 = vpack.c.b16 %v1393, %v1387
        %v1520 = vpack.c.b16 %v1394, %v1388
        %v1521 = vpack.c.b16 %v1395, %v1389
        %v1522 = vpack.c.b16 %v1396, %v1390
        %v1523 = vpack.c.b16 %v1403, %v1397
        %v1524 = vpack.c.b16 %v1404, %v1398
        %v1525 = vpack.c.b16 %v1405, %v1399
        %v1526 = vpack.c.b16 %v1406, %v1400
        %v1527 = vpack.c.b16 %v1407, %v1401
        %v1528 = vpack.c.b16 %v1408, %v1402
        %v1529 = vpack.c.b16 %v1415, %v1409
        %v1530 = vpack.c.b16 %v1416, %v1410
        %v1531 = vpack.c.b16 %v1417, %v1411
        %v1532 = vpack.c.b16 %v1418, %v1412
        %v1533 = vpack.c.b16 %v1419, %v1413
        %v1534 = vpack.c.b16 %v1420, %v1414
        %v1535 = vpack.c.b16 %v1427, %v1421
        %v1536 = vpack.c.b16 %v1428, %v1422
        %v1537 = vpack.c.b16 %v1429, %v1423
        %v1538 = vpack.c.b16 %v1430, %v1424
        %v1539 = vpack.c.b16 %v1431, %v1425
        %v1540 = vpack.c.b16 %v1432, %v1426
        %v1541 = vpack.c.b16 %v1439, %v1433
        %v1542 = vpack.c.b16 %v1440, %v1434
        %v1543 = vpack.c.b16 %v1441, %v1435
        %v1544 = vpack.c.b16 %v1442, %v1436
        %v1545 = vpack.c.b16 %v1443, %v1437
        %v1546 = vpack.c.b16 %v1444, %v1438
        %v1547 = vpack.c.b16 %v1451, %v1445
        %v1548 = vpack.c.b16 %v1452, %v1446
        %v1549 = vpack.c.b16 %v1453, %v1447
        %v1550 = vpack.c.b16 %v1454, %v1448
        %v1551 = vpack.c.b16 %v1455, %v1449
        %v1552 = vpack.c.b16 %v1456, %v1450
        %1649 = vmatprep.subr.bf16.mxu0 %v1500
        %1650 = vmatpush1.bf16.msra.mxu0 %v1499
        %1651 = vmatprep.subr.bf16.mxu0 %v1494
        %1652 = vmatpush1.bf16.msra.mxu0 %v1493
        %1653 = vmatprep.subr.bf16.mxu0 %v1488
        %1654 = vmatpush1.bf16.msra.mxu0 %v1487
        %1655 = vmatprep.subr.bf16.mxu0 %v1482
        %1656 = vmatpush1.bf16.msra.mxu0 %v1481
        %1657 = vmatprep.subr.bf16.mxu0 %v1476
        %1658 = vmatpush1.bf16.msra.mxu0 %v1475
        %1659 = vmatprep.subr.bf16.mxu0 %v1470
        %1660 = vmatpush1.bf16.msra.mxu0 %v1469
        %1661 = vmatprep.subr.bf16.mxu0 %v1464
        %1662 = vmatpush1.bf16.msra.mxu0 %v1463
        %1663 = vmatprep.subr.bf16.mxu0 %v1458
        %1664 = vmatpush1.bf16.msra.mxu0 %v1457
        %1665 = vmatprep.subr.bf16.mxu0 %v1548
        %1666 = vmatpush2.bf16.msra.mxu0 %v1547
        %1667 = vmatprep.subr.bf16.mxu0 %v1542
        %1668 = vmatpush2.bf16.msra.mxu0 %v1541
        %1669 = vmatprep.subr.bf16.mxu0 %v1536
        %1670 = vmatpush2.bf16.msra.mxu0 %v1535
        %1671 = vmatprep.subr.bf16.mxu0 %v1530
        %1672 = vmatpush2.bf16.msra.mxu0 %v1529
        %1673 = vmatprep.subr.bf16.mxu0 %v1524
        %1674 = vmatpush2.bf16.msra.mxu0 %v1523
        %1675 = vmatprep.subr.bf16.mxu0 %v1518
        %1676 = vmatpush2.bf16.msra.mxu0 %v1517
        %1677 = vmatprep.subr.bf16.mxu0 %v1512
        %1678 = vmatpush2.bf16.msra.mxu0 %v1511
        %1679 = vmatprep.subr.bf16.mxu0 %v1506
        %1680 = vmatpush2.bf16.msra.mxu0 %v1505
        %1681 = vmatprep.mubr.bf16.mxu0 %v1040
        %1682 = vmatmul.mubr.bf16.gmra.mxu0 %v1039
        %v1683 = vpop.f32.mrf.mxu0
        %v1684 = vadd.f32 %v1142, %v1683
        %v1685 = vpop.f32.mrf.mxu0
        %v1686 = vadd.f32 %v1146, %v1685
        %v1687 = vpop.f32.mrf.mxu0
        %v1688 = vpop.f32.mrf.mxu0
        %1689 = vdwg.mxu0
        %1690 = vmatprep.subr.bf16.mxu0 %v1502
        %1691 = vmatpush1.bf16.msra.mxu0 %v1501
        %1692 = vmatprep.subr.bf16.mxu0 %v1496
        %1693 = vmatpush1.bf16.msra.mxu0 %v1495
        %1694 = vmatprep.subr.bf16.mxu0 %v1490
        %1695 = vmatpush1.bf16.msra.mxu0 %v1489
        %1696 = vmatprep.subr.bf16.mxu0 %v1484
        %1697 = vmatpush1.bf16.msra.mxu0 %v1483
        %1698 = vmatprep.subr.bf16.mxu0 %v1478
        %1699 = vmatpush1.bf16.msra.mxu0 %v1477
        %1700 = vmatprep.subr.bf16.mxu0 %v1472
        %1701 = vmatpush1.bf16.msra.mxu0 %v1471
        %1702 = vmatprep.subr.bf16.mxu0 %v1466
        %1703 = vmatpush1.bf16.msra.mxu0 %v1465
        %1704 = vmatprep.subr.bf16.mxu0 %v1460
        %1705 = vmatpush1.bf16.msra.mxu0 %v1459
        %1706 = vmatprep.subr.bf16.mxu0 %v1550
        %1707 = vmatpush2.bf16.msra.mxu0 %v1549
        %1708 = vmatprep.subr.bf16.mxu0 %v1544
        %1709 = vmatpush2.bf16.msra.mxu0 %v1543
        %1710 = vmatprep.subr.bf16.mxu0 %v1538
        %1711 = vmatpush2.bf16.msra.mxu0 %v1537
        %1712 = vmatprep.subr.bf16.mxu0 %v1532
        %1713 = vmatpush2.bf16.msra.mxu0 %v1531
        %1714 = vmatprep.subr.bf16.mxu0 %v1526
        %1715 = vmatpush2.bf16.msra.mxu0 %v1525
        %1716 = vmatprep.subr.bf16.mxu0 %v1520
        %1717 = vmatpush2.bf16.msra.mxu0 %v1519
        %1718 = vmatprep.subr.bf16.mxu0 %v1514
        %1719 = vmatpush2.bf16.msra.mxu0 %v1513
        %1720 = vmatprep.subr.bf16.mxu0 %v1508
        %1721 = vmatpush2.bf16.msra.mxu0 %v1507
        %1722 = vmatprep.mubr.bf16.mxu0 %v1040
        %1723 = vmatmul.mubr.bf16.gmra.mxu0 %v1039
        %v1724 = vpop.f32.mrf.mxu0
        %v1725 = vadd.f32 %v1150, %v1724
        %v1726 = vpop.f32.mrf.mxu0
        %v1727 = vadd.f32 %v1154, %v1726
        %v1728 = vpop.f32.mrf.mxu0
        %v1729 = vpop.f32.mrf.mxu0
        %1730 = vdwg.mxu0
        %1731 = vmatprep.subr.bf16.mxu0 %v1504
        %1732 = vmatpush1.bf16.msra.mxu0 %v1503
        %1733 = vmatprep.subr.bf16.mxu0 %v1498
        %1734 = vmatpush1.bf16.msra.mxu0 %v1497
        %1735 = vmatprep.subr.bf16.mxu0 %v1492
        %1736 = vmatpush1.bf16.msra.mxu0 %v1491
        %1737 = vmatprep.subr.bf16.mxu0 %v1486
        %1738 = vmatpush1.bf16.msra.mxu0 %v1485
        %1739 = vmatprep.subr.bf16.mxu0 %v1480
        %1740 = vmatpush1.bf16.msra.mxu0 %v1479
        %1741 = vmatprep.subr.bf16.mxu0 %v1474
        %1742 = vmatpush1.bf16.msra.mxu0 %v1473
        %1743 = vmatprep.subr.bf16.mxu0 %v1468
        %1744 = vmatpush1.bf16.msra.mxu0 %v1467
        %1745 = vmatprep.subr.bf16.mxu0 %v1462
        %1746 = vmatpush1.bf16.msra.mxu0 %v1461
        %1747 = vmatprep.subr.bf16.mxu0 %v1552
        %1748 = vmatpush2.bf16.msra.mxu0 %v1551
        %1749 = vmatprep.subr.bf16.mxu0 %v1546
        %1750 = vmatpush2.bf16.msra.mxu0 %v1545
        %1751 = vmatprep.subr.bf16.mxu0 %v1540
        %1752 = vmatpush2.bf16.msra.mxu0 %v1539
        %1753 = vmatprep.subr.bf16.mxu0 %v1534
        %1754 = vmatpush2.bf16.msra.mxu0 %v1533
        %1755 = vmatprep.subr.bf16.mxu0 %v1528
        %1756 = vmatpush2.bf16.msra.mxu0 %v1527
        %1757 = vmatprep.subr.bf16.mxu0 %v1522
        %1758 = vmatpush2.bf16.msra.mxu0 %v1521
        %1759 = vmatprep.subr.bf16.mxu0 %v1516
        %1760 = vmatpush2.bf16.msra.mxu0 %v1515
        %1761 = vmatprep.subr.bf16.mxu0 %v1510
        %1762 = vmatpush2.bf16.msra.mxu0 %v1509
        %1763 = vmatprep.mubr.bf16.mxu0 %v1040
        %1764 = vmatmul.mubr.bf16.gmra.mxu0 %v1039
        %v1765 = vpop.f32.mrf.mxu0
        %v1766 = vadd.f32 %v1158, %v1765
        %v1767 = vpop.f32.mrf.mxu0
        %v1768 = vadd.f32 %v1162, %v1767
        %v1769 = vpop.f32.mrf.mxu0
        %v1770 = vpop.f32.mrf.mxu0
        %1771 = vdwg.mxu0
        %v1772 = vld [vmem:[#allocation5] sm:$0xff]
        %v1773 = vld [vmem:[#allocation5 + $0x8] sm:$0xff]
        %v1774 = vld [vmem:[#allocation5 + $0x10] sm:$0xff]
        %v1775 = vld [vmem:[#allocation5 + $0x18] sm:$0xff]
        %v1776 = vld [vmem:[#allocation5 + $0x20] sm:$0xff]
        %v1777 = vld [vmem:[#allocation5 + $0x28] sm:$0xff]
        %v1778 = vld [vmem:[#allocation5 + $0x30] sm:$0xff]
        %v1779 = vld [vmem:[#allocation5 + $0x38] sm:$0xff]
        %v1780 = vld [vmem:[#allocation5 + $0x40] sm:$0xff]
        %v1781 = vld [vmem:[#allocation5 + $0x48] sm:$0xff]
        %v1782 = vld [vmem:[#allocation5 + $0x50] sm:$0xff]
        %v1783 = vld [vmem:[#allocation5 + $0x58] sm:$0xff]
        %v1784 = vld [vmem:[#allocation5 + $0x60] sm:$0xff]
        %v1785 = vld [vmem:[#allocation5 + $0x68] sm:$0xff]
        %v1786 = vld [vmem:[#allocation5 + $0x70] sm:$0xff]
        %v1787 = vld [vmem:[#allocation5 + $0x78] sm:$0xff]
        %v1789 = vcombine.high %v1684, %v1684
        %v1791 = vunpack.c.l.s4 1966171168
        %v1792 = vunpack.c.0.s8 %v1791
        %v1793 = vlaneseq
        %v1794 = vshrl.u32 %v1793, 7
        %v1795 = vsub.s32 %v1792, %v1794
        %v1796 = vrot.slane %v1684, %v1795
        %v1798 = vunpack.c.l.s4 1966171168
        %v1799 = vunpack.c.0.s8 %v1798
        %v1800 = vlaneseq
        %v1801 = vshrl.u32 %v1800, 7
        %v1802 = vsub.s32 %v1799, %v1801
        %v1803 = vrot.slane %v1789, %v1802
        %v1804 = vcombine.high %v1796, %v1796
        %v1805 = vcombine.high %v1803, %v1803
        %v1807 = vunpack.c.l.s4 1966171168
        %v1808 = vunpack.c.0.s8 %v1807
        %v1809 = vlaneseq
        %v1810 = vshrl.u32 %v1809, 7
        %v1811 = vsub.s32 %v1808, %v1810
        %v1812 = vrot.slane %v1796, %v1811
        %v1814 = vunpack.c.l.s4 1966171168
        %v1815 = vunpack.c.0.s8 %v1814
        %v1816 = vlaneseq
        %v1817 = vshrl.u32 %v1816, 7
        %v1818 = vsub.s32 %v1815, %v1817
        %v1819 = vrot.slane %v1803, %v1818
        %v1821 = vunpack.c.l.s4 1966171168
        %v1822 = vunpack.c.0.s8 %v1821
        %v1823 = vlaneseq
        %v1824 = vshrl.u32 %v1823, 7
        %v1825 = vsub.s32 %v1822, %v1824
        %v1826 = vrot.slane %v1804, %v1825
        %v1828 = vunpack.c.l.s4 1966171168
        %v1829 = vunpack.c.0.s8 %v1828
        %v1830 = vlaneseq
        %v1831 = vshrl.u32 %v1830, 7
        %v1832 = vsub.s32 %v1829, %v1831
        %v1833 = vrot.slane %v1805, %v1832
        %v1834 = vcombine.high %v1812, %v1812
        %v1835 = vcombine.high %v1819, %v1819
        %v1836 = vcombine.high %v1826, %v1826
        %v1837 = vcombine.high %v1833, %v1833
        %v1838 = vlaneseq
        %v1839 = vshrl.u32 %v1838, 7
        %v1840 = vsub.s32 0, %v1839
        %v1841 = vrot.slane %v1812, %v1840
        %v1842 = vlaneseq
        %v1843 = vshrl.u32 %v1842, 7
        %v1844 = vsub.s32 0, %v1843
        %v1845 = vrot.slane %v1826, %v1844
        %v1846 = vlaneseq
        %v1847 = vshrl.u32 %v1846, 7
        %v1848 = vsub.s32 0, %v1847
        %v1849 = vrot.slane %v1834, %v1848
        %v1850 = vlaneseq
        %v1851 = vshrl.u32 %v1850, 7
        %v1852 = vsub.s32 0, %v1851
        %v1853 = vrot.slane %v1836, %v1852
        %v1854 = vlaneseq
        %v1855 = vshrl.u32 %v1854, 7
        %v1856 = vsub.s32 0, %v1855
        %v1857 = vrot.slane %v1819, %v1856
        %v1858 = vlaneseq
        %v1859 = vshrl.u32 %v1858, 7
        %v1860 = vsub.s32 0, %v1859
        %v1861 = vrot.slane %v1833, %v1860
        %v1862 = vlaneseq
        %v1863 = vshrl.u32 %v1862, 7
        %v1864 = vsub.s32 0, %v1863
        %v1865 = vrot.slane %v1835, %v1864
        %v1866 = vlaneseq
        %v1867 = vshrl.u32 %v1866, 7
        %v1868 = vsub.s32 0, %v1867
        %v1869 = vrot.slane %v1837, %v1868
        %v1878 = vadd.f32 %v1772, %v1841
        %v1879 = vadd.f32 %v1773, %v1841
        %v1880 = vadd.f32 %v1774, %v1845
        %v1881 = vadd.f32 %v1775, %v1845
        %v1882 = vadd.f32 %v1776, %v1849
        %v1883 = vadd.f32 %v1777, %v1849
        %v1884 = vadd.f32 %v1778, %v1853
        %v1885 = vadd.f32 %v1779, %v1853
        %v1886 = vadd.f32 %v1780, %v1857
        %v1887 = vadd.f32 %v1781, %v1857
        %v1888 = vadd.f32 %v1782, %v1861
        %v1889 = vadd.f32 %v1783, %v1861
        %v1890 = vadd.f32 %v1784, %v1865
        %v1891 = vadd.f32 %v1785, %v1865
        %v1892 = vadd.f32 %v1786, %v1869
        %v1893 = vadd.f32 %v1787, %v1869
        %v1894 = vmax.f32 %v1878, 0.0
        %v1895 = vmax.f32 %v1879, 0.0
        %v1896 = vmax.f32 %v1880, 0.0
        %v1897 = vmax.f32 %v1881, 0.0
        %v1898 = vmax.f32 %v1882, 0.0
        %v1899 = vmax.f32 %v1883, 0.0
        %v1900 = vmax.f32 %v1884, 0.0
        %v1901 = vmax.f32 %v1885, 0.0
        %v1902 = vmax.f32 %v1886, 0.0
        %v1903 = vmax.f32 %v1887, 0.0
        %v1904 = vmax.f32 %v1888, 0.0
        %v1905 = vmax.f32 %v1889, 0.0
        %v1906 = vmax.f32 %v1890, 0.0
        %v1907 = vmax.f32 %v1891, 0.0
        %v1908 = vmax.f32 %v1892, 0.0
        %v1909 = vmax.f32 %v1893, 0.0
        %v1910 = vld [vmem:[%s7] sm:$0x1]
        %v1912 = vlaneseq
        %v1913 = vshrl.u32 %v1912, 7
        %v1914 = vsub.s32 0, %v1913
        %v1915 = vrot.slane %v1910, %v1914
        %v1917 = vmul.f32 %v1894, %v1915
        %v1918 = vmul.f32 %v1895, %v1915
        %v1919 = vmul.f32 %v1896, %v1915
        %v1920 = vmul.f32 %v1897, %v1915
        %v1921 = vmul.f32 %v1898, %v1915
        %v1922 = vmul.f32 %v1899, %v1915
        %v1923 = vmul.f32 %v1900, %v1915
        %v1924 = vmul.f32 %v1901, %v1915
        %v1925 = vmul.f32 %v1902, %v1915
        %v1926 = vmul.f32 %v1903, %v1915
        %v1927 = vmul.f32 %v1904, %v1915
        %v1928 = vmul.f32 %v1905, %v1915
        %v1929 = vmul.f32 %v1906, %v1915
        %v1930 = vmul.f32 %v1907, %v1915
        %v1931 = vmul.f32 %v1908, %v1915
        %v1932 = vmul.f32 %v1909, %v1915
        %1933 = vadd.xlane.f32.xlu0 %v1917
        %v1934 = vpop.xlane.xlu0 %1933
        %1935 = vadd.xlane.f32.xlu0 %v1918
        %v1936 = vpop.xlane.xlu0 %1935
        %1937 = vadd.xlane.f32.xlu0 %v1919
        %v1938 = vpop.xlane.xlu0 %1937
        %1939 = vadd.xlane.f32.xlu0 %v1920
        %v1940 = vpop.xlane.xlu0 %1939
        %1941 = vadd.xlane.f32.xlu0 %v1921
        %v1942 = vpop.xlane.xlu0 %1941
        %1943 = vadd.xlane.f32.xlu0 %v1922
        %v1944 = vpop.xlane.xlu0 %1943
        %1945 = vadd.xlane.f32.xlu0 %v1923
        %v1946 = vpop.xlane.xlu0 %1945
        %1947 = vadd.xlane.f32.xlu0 %v1924
        %v1948 = vpop.xlane.xlu0 %1947
        %1949 = vadd.xlane.f32.xlu0 %v1925
        %v1950 = vpop.xlane.xlu0 %1949
        %1951 = vadd.xlane.f32.xlu0 %v1926
        %v1952 = vpop.xlane.xlu0 %1951
        %1953 = vadd.xlane.f32.xlu0 %v1927
        %v1954 = vpop.xlane.xlu0 %1953
        %1955 = vadd.xlane.f32.xlu0 %v1928
        %v1956 = vpop.xlane.xlu0 %1955
        %1957 = vadd.xlane.f32.xlu0 %v1929
        %v1958 = vpop.xlane.xlu0 %1957
        %1959 = vadd.xlane.f32.xlu0 %v1930
        %v1960 = vpop.xlane.xlu0 %1959
        %1961 = vadd.xlane.f32.xlu0 %v1931
        %v1962 = vpop.xlane.xlu0 %1961
        %1963 = vadd.xlane.f32.xlu0 %v1932
        %v1964 = vpop.xlane.xlu0 %1963
        %v1965 = vlaneseq
        %v1966 = vand.u32 %v1965, 127
        %vm1967 = vcmp.lt.s32.totalorder %v1966, 16
        %v1984 = vlaneseq
        %v1985 = vshrl.u32 %v1984, 7
        %v1986 = vsub.s32 %v1966, %v1985
        %v1987 = vrot.slane %v1934, %v1986
        %v1988 = vadd.s32 %v1966, 4294967288
        %v1989 = vlaneseq
        %v1990 = vshrl.u32 %v1989, 7
        %v1991 = vsub.s32 %v1988, %v1990
        %v1992 = vrot.slane %v1936, %v1991
        %vm1993 = vcmask 130112
        %v1994 = vsel %vm1993, %v1992, %v1987
        %v1995 = vlaneseq
        %v1996 = vshrl.u32 %v1995, 7
        %v1997 = vsub.s32 %v1966, %v1996
        %v1998 = vrot.slane %v1938, %v1997
        %v1999 = vlaneseq
        %v2000 = vshrl.u32 %v1999, 7
        %v2001 = vsub.s32 %v1988, %v2000
        %v2002 = vrot.slane %v1940, %v2001
        %v2003 = vsel %vm1993, %v2002, %v1998
        %v2004 = vlaneseq
        %v2005 = vshrl.u32 %v2004, 7
        %v2006 = vsub.s32 %v1966, %v2005
        %v2007 = vrot.slane %v1942, %v2006
        %v2008 = vlaneseq
        %v2009 = vshrl.u32 %v2008, 7
        %v2010 = vsub.s32 %v1988, %v2009
        %v2011 = vrot.slane %v1944, %v2010
        %v2012 = vsel %vm1993, %v2011, %v2007
        %v2013 = vlaneseq
        %v2014 = vshrl.u32 %v2013, 7
        %v2015 = vsub.s32 %v1966, %v2014
        %v2016 = vrot.slane %v1946, %v2015
        %v2017 = vlaneseq
        %v2018 = vshrl.u32 %v2017, 7
        %v2019 = vsub.s32 %v1988, %v2018
        %v2020 = vrot.slane %v1948, %v2019
        %v2021 = vsel %vm1993, %v2020, %v2016
        %v2022 = vlaneseq
        %v2023 = vshrl.u32 %v2022, 7
        %v2024 = vsub.s32 %v1966, %v2023
        %v2025 = vrot.slane %v1950, %v2024
        %v2026 = vlaneseq
        %v2027 = vshrl.u32 %v2026, 7
        %v2028 = vsub.s32 %v1988, %v2027
        %v2029 = vrot.slane %v1952, %v2028
        %v2030 = vsel %vm1993, %v2029, %v2025
        %v2031 = vlaneseq
        %v2032 = vshrl.u32 %v2031, 7
        %v2033 = vsub.s32 %v1966, %v2032
        %v2034 = vrot.slane %v1954, %v2033
        %v2035 = vlaneseq
        %v2036 = vshrl.u32 %v2035, 7
        %v2037 = vsub.s32 %v1988, %v2036
        %v2038 = vrot.slane %v1956, %v2037
        %v2039 = vsel %vm1993, %v2038, %v2034
        %v2040 = vlaneseq
        %v2041 = vshrl.u32 %v2040, 7
        %v2042 = vsub.s32 %v1966, %v2041
        %v2043 = vrot.slane %v1958, %v2042
        %v2044 = vlaneseq
        %v2045 = vshrl.u32 %v2044, 7
        %v2046 = vsub.s32 %v1988, %v2045
        %v2047 = vrot.slane %v1960, %v2046
        %v2048 = vsel %vm1993, %v2047, %v2043
        %v2049 = vlaneseq
        %v2050 = vshrl.u32 %v2049, 7
        %v2051 = vsub.s32 %v1966, %v2050
        %v2052 = vrot.slane %v1962, %v2051
        %v2053 = vlaneseq
        %v2054 = vshrl.u32 %v2053, 7
        %v2055 = vsub.s32 %v1988, %v2054
        %v2056 = vrot.slane %v1964, %v2055
        %v2057 = vsel %vm1993, %v2056, %v2052
        %vm2058 = vcmask 1041409
        %v2059 = vsel %vm2058, %v2003, %v1994
        %vm2060 = vcmask 1042434
        %v2061 = vsel %vm2060, %v2012, %v2059
        %vm2062 = vcmask 1043459
        %v2063 = vsel %vm2062, %v2021, %v2061
        %vm2064 = vcmask 1044484
        %v2065 = vsel %vm2064, %v2030, %v2063
        %vm2066 = vcmask 1045509
        %v2067 = vsel %vm2066, %v2039, %v2065
        %vm2068 = vcmask 1046534
        %v2069 = vsel %vm2068, %v2048, %v2067
        %vm2070 = vcmask 1047559
        %v2071 = vsel %vm2070, %v2057, %v2069
        %v2073 = vsel %vm1967, %v2071, -1e+30
        %vm2074 = vcmask 130048
        %v2075 = vsel %vm2074, %v2073, -inf
        %2076 = vmax.xlane.f32.xlu0 %v2075
        %v2077 = vpop.xlane.xlu0 %2076
        %v2078 = vsub.f32 %v2073, %v2077
        %v2079 = vmul.f32 %v2078, 1.442695
        %v2080 = vpow.pop %v2079
        %v2081 = vsel %vm2074, %v2080, 0.0
        %2082 = vadd.xlane.f32.xlu0 %v2081
        %v2083 = vpop.xlane.xlu0 %2082
        %v2084 = vrcp.pop %v2083
        %v2085 = vmul.f32 %v2080, %v2084
        %v2086 = vld [vmem:[#allocation2] sm:$0xf]
        %v2087 = vld [vmem:[#allocation2 + $0x4] sm:$0xf]
        %v2088 = vld [vmem:[#allocation2 + $0x8] sm:$0xf]
        %v2089 = vld [vmem:[#allocation2 + $0xc] sm:$0xf]
        %v2090 = vld [vmem:[#allocation2 + $0x10] sm:$0xf]
        %v2091 = vld [vmem:[#allocation2 + $0x14] sm:$0xf]
        %v2092 = vld [vmem:[#allocation2 + $0x18] sm:$0xf]
        %v2093 = vld [vmem:[#allocation2 + $0x1c] sm:$0xf]
        %v2094 = vld [vmem:[#allocation2 + $0x20] sm:$0xf]
        %v2095 = vld [vmem:[#allocation2 + $0x24] sm:$0xf]
        %v2096 = vld [vmem:[#allocation2 + $0x28] sm:$0xf]
        %v2097 = vld [vmem:[#allocation2 + $0x2c] sm:$0xf]
        %v2098 = vld [vmem:[#allocation2 + $0x30] sm:$0xf]
        %v2099 = vld [vmem:[#allocation2 + $0x34] sm:$0xf]
        %v2100 = vld [vmem:[#allocation2 + $0x38] sm:$0xf]
        %v2101 = vld [vmem:[#allocation2 + $0x3c] sm:$0xf]
        %v2102 = vlaneseq
        %v2103 = vshrl.u32 %v2102, 7
        %v2104 = vsub.s32 0, %v2103
        %v2105 = vrot.slane %v2085, %v2104
        %2107 = vbcast.lane.b32.xlu0 %v2105, 256
        %v2108 = vpop.permute.xlu0 %2107
        %s2110 = sor.u32 256, 8
        %2111 = vbcast.lane.b32.xlu0 %v2105, %s2110
        %v2112 = vpop.permute.xlu0 %2111
        %v2113 = vlaneseq
        %v2114 = vshrl.u32 %v2113, 7
        %v2115 = vsub.s32 1, %v2114
        %v2116 = vrot.slane %v2085, %v2115
        %2118 = vbcast.lane.b32.xlu0 %v2116, 256
        %v2119 = vpop.permute.xlu0 %2118
        %s2121 = sor.u32 256, 8
        %2122 = vbcast.lane.b32.xlu0 %v2116, %s2121
        %v2123 = vpop.permute.xlu0 %2122
        %v2124 = vlaneseq
        %v2125 = vshrl.u32 %v2124, 7
        %v2126 = vsub.s32 2, %v2125
        %v2127 = vrot.slane %v2085, %v2126
        %2129 = vbcast.lane.b32.xlu0 %v2127, 256
        %v2130 = vpop.permute.xlu0 %2129
        %s2132 = sor.u32 256, 8
        %2133 = vbcast.lane.b32.xlu0 %v2127, %s2132
        %v2134 = vpop.permute.xlu0 %2133
        %v2135 = vlaneseq
        %v2136 = vshrl.u32 %v2135, 7
        %v2137 = vsub.s32 3, %v2136
        %v2138 = vrot.slane %v2085, %v2137
        %2140 = vbcast.lane.b32.xlu0 %v2138, 256
        %v2141 = vpop.permute.xlu0 %2140
        %s2143 = sor.u32 256, 8
        %2144 = vbcast.lane.b32.xlu0 %v2138, %s2143
        %v2145 = vpop.permute.xlu0 %2144
        %v2146 = vlaneseq
        %v2147 = vshrl.u32 %v2146, 7
        %v2148 = vsub.s32 4, %v2147
        %v2149 = vrot.slane %v2085, %v2148
        %2151 = vbcast.lane.b32.xlu0 %v2149, 256
        %v2152 = vpop.permute.xlu0 %2151
        %s2154 = sor.u32 256, 8
        %2155 = vbcast.lane.b32.xlu0 %v2149, %s2154
        %v2156 = vpop.permute.xlu0 %2155
        %v2157 = vlaneseq
        %v2158 = vshrl.u32 %v2157, 7
        %v2159 = vsub.s32 5, %v2158
        %v2160 = vrot.slane %v2085, %v2159
        %2162 = vbcast.lane.b32.xlu0 %v2160, 256
        %v2163 = vpop.permute.xlu0 %2162
        %s2165 = sor.u32 256, 8
        %2166 = vbcast.lane.b32.xlu0 %v2160, %s2165
        %v2167 = vpop.permute.xlu0 %2166
        %v2168 = vlaneseq
        %v2169 = vshrl.u32 %v2168, 7
        %v2170 = vsub.s32 6, %v2169
        %v2171 = vrot.slane %v2085, %v2170
        %2173 = vbcast.lane.b32.xlu0 %v2171, 256
        %v2174 = vpop.permute.xlu0 %2173
        %s2176 = sor.u32 256, 8
        %2177 = vbcast.lane.b32.xlu0 %v2171, %s2176
        %v2178 = vpop.permute.xlu0 %2177
        %v2179 = vlaneseq
        %v2180 = vshrl.u32 %v2179, 7
        %v2181 = vsub.s32 7, %v2180
        %v2182 = vrot.slane %v2085, %v2181
        %2184 = vbcast.lane.b32.xlu0 %v2182, 256
        %v2185 = vpop.permute.xlu0 %2184
        %s2187 = sor.u32 256, 8
        %2188 = vbcast.lane.b32.xlu0 %v2182, %s2187
        %v2189 = vpop.permute.xlu0 %2188
        %v2190 = vunpack.c.l.bf16 %v2086
        %v2191 = vunpack.c.l.bf16 %v2087
        %v2192 = vunpack.c.l.bf16 %v2088
        %v2193 = vunpack.c.l.bf16 %v2089
        %v2194 = vunpack.c.l.bf16 %v2090
        %v2195 = vunpack.c.l.bf16 %v2091
        %v2196 = vunpack.c.l.bf16 %v2092
        %v2197 = vunpack.c.l.bf16 %v2093
        %v2198 = vunpack.c.l.bf16 %v2094
        %v2199 = vunpack.c.l.bf16 %v2095
        %v2200 = vunpack.c.l.bf16 %v2096
        %v2201 = vunpack.c.l.bf16 %v2097
        %v2202 = vunpack.c.l.bf16 %v2098
        %v2203 = vunpack.c.l.bf16 %v2099
        %v2204 = vunpack.c.l.bf16 %v2100
        %v2205 = vunpack.c.l.bf16 %v2101
        %v2206 = vmul.f32 %v2190, %v2108
        %v2207 = vmul.f32 %v2191, %v2112
        %v2208 = vmul.f32 %v2192, %v2119
        %v2209 = vmul.f32 %v2193, %v2123
        %v2210 = vmul.f32 %v2194, %v2130
        %v2211 = vmul.f32 %v2195, %v2134
        %v2212 = vmul.f32 %v2196, %v2141
        %v2213 = vmul.f32 %v2197, %v2145
        %v2214 = vmul.f32 %v2198, %v2152
        %v2215 = vmul.f32 %v2199, %v2156
        %v2216 = vmul.f32 %v2200, %v2163
        %v2217 = vmul.f32 %v2201, %v2167
        %v2218 = vmul.f32 %v2202, %v2174
        %v2219 = vmul.f32 %v2203, %v2178
        %v2220 = vmul.f32 %v2204, %v2185
        %v2221 = vmul.f32 %v2205, %v2189
        %v2222 = vadd.f32 %v2206, %v2207
        %v2223 = vrot.slane %v2222, 4
        %v2224 = vadd.f32 %v2222, %v2223
        %v2225 = vrot.slane %v2224, 2
        %v2226 = vadd.f32 %v2224, %v2225
        %v2227 = vrot.slane %v2226, 1
        %v2228 = vadd.f32 %v2226, %v2227
        %v2229 = vadd.f32 %v2208, %v2209
        %v2230 = vrot.slane %v2229, 4
        %v2231 = vadd.f32 %v2229, %v2230
        %v2232 = vrot.slane %v2231, 2
        %v2233 = vadd.f32 %v2231, %v2232
        %v2234 = vrot.slane %v2233, 1
        %v2235 = vadd.f32 %v2233, %v2234
        %v2236 = vadd.f32 %v2210, %v2211
        %v2237 = vrot.slane %v2236, 4
        %v2238 = vadd.f32 %v2236, %v2237
        %v2239 = vrot.slane %v2238, 2
        %v2240 = vadd.f32 %v2238, %v2239
        %v2241 = vrot.slane %v2240, 1
        %v2242 = vadd.f32 %v2240, %v2241
        %v2243 = vadd.f32 %v2212, %v2213
        %v2244 = vrot.slane %v2243, 4
        %v2245 = vadd.f32 %v2243, %v2244
        %v2246 = vrot.slane %v2245, 2
        %v2247 = vadd.f32 %v2245, %v2246
        %v2248 = vrot.slane %v2247, 1
        %v2249 = vadd.f32 %v2247, %v2248
        %v2250 = vadd.f32 %v2214, %v2215
        %v2251 = vrot.slane %v2250, 4
        %v2252 = vadd.f32 %v2250, %v2251
        %v2253 = vrot.slane %v2252, 2
        %v2254 = vadd.f32 %v2252, %v2253
        %v2255 = vrot.slane %v2254, 1
        %v2256 = vadd.f32 %v2254, %v2255
        %v2257 = vadd.f32 %v2216, %v2217
        %v2258 = vrot.slane %v2257, 4
        %v2259 = vadd.f32 %v2257, %v2258
        %v2260 = vrot.slane %v2259, 2
        %v2261 = vadd.f32 %v2259, %v2260
        %v2262 = vrot.slane %v2261, 1
        %v2263 = vadd.f32 %v2261, %v2262
        %v2264 = vadd.f32 %v2218, %v2219
        %v2265 = vrot.slane %v2264, 4
        %v2266 = vadd.f32 %v2264, %v2265
        %v2267 = vrot.slane %v2266, 2
        %v2268 = vadd.f32 %v2266, %v2267
        %v2269 = vrot.slane %v2268, 1
        %v2270 = vadd.f32 %v2268, %v2269
        %v2271 = vadd.f32 %v2220, %v2221
        %v2272 = vrot.slane %v2271, 4
        %v2273 = vadd.f32 %v2271, %v2272
        %v2274 = vrot.slane %v2273, 2
        %v2275 = vadd.f32 %v2273, %v2274
        %v2276 = vrot.slane %v2275, 1
        %v2277 = vadd.f32 %v2275, %v2276
        %v2278 = vxor.u32 %v1686, 2147483648
        %v2279 = vmul.f32 %v2278, 1.442695
        %v2280 = vpow.pop %v2279
        %v2281 = vadd.f32 %v2280, 1.0
        %v2282 = vrcp.pop %v2281
        %v2283 = vmul.f32 1.0, %v2282
        %v2292 = vsel %vm2058, %v2235, %v2228
        %v2293 = vsel %vm2060, %v2242, %v2292
        %v2294 = vsel %vm2062, %v2249, %v2293
        %v2295 = vsel %vm2064, %v2256, %v2294
        %v2296 = vsel %vm2066, %v2263, %v2295
        %v2297 = vsel %vm2068, %v2270, %v2296
        %v2298 = vsel %vm2070, %v2277, %v2297
        %v2300 = vmul.f32 %v2283, %v2298
        %v2301 = vpack.c.bf16 %v2300, %v2300
        %v2302 = vld [vmem:[#allocation13] sm:$0xff]
        %v2303 = vld [vmem:[#allocation13 + $0x8] sm:$0xff]
        %v2304 = vld [vmem:[#allocation13 + $0x10] sm:$0xff]
        %v2305 = vld [vmem:[#allocation13 + $0x18] sm:$0xff]
        %v2306 = vld [vmem:[#allocation13 + $0x20] sm:$0xff]
        %v2307 = vld [vmem:[#allocation13 + $0x28] sm:$0xff]
        %v2308 = vld [vmem:[#allocation13 + $0x30] sm:$0xff]
        %v2309 = vld [vmem:[#allocation13 + $0x38] sm:$0xff]
        %v2310 = vld [vmem:[#allocation13 + $0x40] sm:$0xff]
        %v2311 = vld [vmem:[#allocation13 + $0x48] sm:$0xff]
        %v2312 = vld [vmem:[#allocation13 + $0x50] sm:$0xff]
        %v2313 = vld [vmem:[#allocation13 + $0x58] sm:$0xff]
        %v2314 = vld [vmem:[#allocation13 + $0x60] sm:$0xff]
        %v2315 = vld [vmem:[#allocation13 + $0x68] sm:$0xff]
        %v2316 = vld [vmem:[#allocation13 + $0x70] sm:$0xff]
        %v2317 = vld [vmem:[#allocation13 + $0x78] sm:$0xff]
        %v2318 = vld [vmem:[#allocation13 + $0x80] sm:$0xff]
        %v2319 = vld [vmem:[#allocation13 + $0x88] sm:$0xff]
        %v2320 = vld [vmem:[#allocation13 + $0x90] sm:$0xff]
        %v2321 = vld [vmem:[#allocation13 + $0x98] sm:$0xff]
        %v2322 = vld [vmem:[#allocation13 + $0xa0] sm:$0xff]
        %v2323 = vld [vmem:[#allocation13 + $0xa8] sm:$0xff]
        %v2324 = vld [vmem:[#allocation13 + $0xb0] sm:$0xff]
        %v2325 = vld [vmem:[#allocation13 + $0xb8] sm:$0xff]
        %v2326 = vld [vmem:[#allocation13 + $0xc0] sm:$0xff]
        %v2327 = vld [vmem:[#allocation13 + $0xc8] sm:$0xff]
        %v2328 = vld [vmem:[#allocation13 + $0xd0] sm:$0xff]
        %v2329 = vld [vmem:[#allocation13 + $0xd8] sm:$0xff]
        %v2330 = vld [vmem:[#allocation13 + $0xe0] sm:$0xff]
        %v2331 = vld [vmem:[#allocation13 + $0xe8] sm:$0xff]
        %v2332 = vld [vmem:[#allocation13 + $0xf0] sm:$0xff]
        %v2333 = vld [vmem:[#allocation13 + $0xf8] sm:$0xff]
        %v2366 = vunpack.c.l.b16 %v2302
        %v2367 = vunpack.c.h.b16 %v2302
        %v2368 = vunpack.c.l.b16 %v2303
        %v2369 = vunpack.c.h.b16 %v2303
        %v2370 = vunpack.c.l.b16 %v2304
        %v2371 = vunpack.c.h.b16 %v2304
        %v2372 = vunpack.c.l.b16 %v2305
        %v2373 = vunpack.c.h.b16 %v2305
        %v2374 = vunpack.c.l.b16 %v2306
        %v2375 = vunpack.c.h.b16 %v2306
        %v2376 = vunpack.c.l.b16 %v2307
        %v2377 = vunpack.c.h.b16 %v2307
        %v2378 = vunpack.c.l.b16 %v2308
        %v2379 = vunpack.c.h.b16 %v2308
        %v2380 = vunpack.c.l.b16 %v2309
        %v2381 = vunpack.c.h.b16 %v2309
        %v2382 = vunpack.c.l.b16 %v2310
        %v2383 = vunpack.c.h.b16 %v2310
        %v2384 = vunpack.c.l.b16 %v2311
        %v2385 = vunpack.c.h.b16 %v2311
        %v2386 = vunpack.c.l.b16 %v2312
        %v2387 = vunpack.c.h.b16 %v2312
        %v2388 = vunpack.c.l.b16 %v2313
        %v2389 = vunpack.c.h.b16 %v2313
        %v2390 = vunpack.c.l.b16 %v2314
        %v2391 = vunpack.c.h.b16 %v2314
        %v2392 = vunpack.c.l.b16 %v2315
        %v2393 = vunpack.c.h.b16 %v2315
        %v2394 = vunpack.c.l.b16 %v2316
        %v2395 = vunpack.c.h.b16 %v2316
        %v2396 = vunpack.c.l.b16 %v2317
        %v2397 = vunpack.c.h.b16 %v2317
        %v2398 = vunpack.c.l.b16 %v2318
        %v2399 = vunpack.c.h.b16 %v2318
        %v2400 = vunpack.c.l.b16 %v2319
        %v2401 = vunpack.c.h.b16 %v2319
        %v2402 = vunpack.c.l.b16 %v2320
        %v2403 = vunpack.c.h.b16 %v2320
        %v2404 = vunpack.c.l.b16 %v2321
        %v2405 = vunpack.c.h.b16 %v2321
        %v2406 = vunpack.c.l.b16 %v2322
        %v2407 = vunpack.c.h.b16 %v2322
        %v2408 = vunpack.c.l.b16 %v2323
        %v2409 = vunpack.c.h.b16 %v2323
        %v2410 = vunpack.c.l.b16 %v2324
        %v2411 = vunpack.c.h.b16 %v2324
        %v2412 = vunpack.c.l.b16 %v2325
        %v2413 = vunpack.c.h.b16 %v2325
        %v2414 = vunpack.c.l.b16 %v2326
        %v2415 = vunpack.c.h.b16 %v2326
        %v2416 = vunpack.c.l.b16 %v2327
        %v2417 = vunpack.c.h.b16 %v2327
        %v2418 = vunpack.c.l.b16 %v2328
        %v2419 = vunpack.c.h.b16 %v2328
        %v2420 = vunpack.c.l.b16 %v2329
        %v2421 = vunpack.c.h.b16 %v2329
        %v2422 = vunpack.c.l.b16 %v2330
        %v2423 = vunpack.c.h.b16 %v2330
        %v2424 = vunpack.c.l.b16 %v2331
        %v2425 = vunpack.c.h.b16 %v2331
        %v2426 = vunpack.c.l.b16 %v2332
        %v2427 = vunpack.c.h.b16 %v2332
        %v2428 = vunpack.c.l.b16 %v2333
        %v2429 = vunpack.c.h.b16 %v2333
        %v2430 = vpack.c.b16 %v2370, %v2366
        %v2431 = vpack.c.b16 %v2371, %v2367
        %v2432 = vpack.c.b16 %v2372, %v2368
        %v2433 = vpack.c.b16 %v2373, %v2369
        %v2434 = vpack.c.b16 %v2378, %v2374
        %v2435 = vpack.c.b16 %v2379, %v2375
        %v2436 = vpack.c.b16 %v2380, %v2376
        %v2437 = vpack.c.b16 %v2381, %v2377
        %v2438 = vpack.c.b16 %v2386, %v2382
        %v2439 = vpack.c.b16 %v2387, %v2383
        %v2440 = vpack.c.b16 %v2388, %v2384
        %v2441 = vpack.c.b16 %v2389, %v2385
        %v2442 = vpack.c.b16 %v2394, %v2390
        %v2443 = vpack.c.b16 %v2395, %v2391
        %v2444 = vpack.c.b16 %v2396, %v2392
        %v2445 = vpack.c.b16 %v2397, %v2393
        %v2446 = vpack.c.b16 %v2402, %v2398
        %v2447 = vpack.c.b16 %v2403, %v2399
        %v2448 = vpack.c.b16 %v2404, %v2400
        %v2449 = vpack.c.b16 %v2405, %v2401
        %v2450 = vpack.c.b16 %v2410, %v2406
        %v2451 = vpack.c.b16 %v2411, %v2407
        %v2452 = vpack.c.b16 %v2412, %v2408
        %v2453 = vpack.c.b16 %v2413, %v2409
        %v2454 = vpack.c.b16 %v2418, %v2414
        %v2455 = vpack.c.b16 %v2419, %v2415
        %v2456 = vpack.c.b16 %v2420, %v2416
        %v2457 = vpack.c.b16 %v2421, %v2417
        %v2458 = vpack.c.b16 %v2426, %v2422
        %v2459 = vpack.c.b16 %v2427, %v2423
        %v2460 = vpack.c.b16 %v2428, %v2424
        %v2461 = vpack.c.b16 %v2429, %v2425
        %2494 = vmatprep.subr.bf16.mxu0 %v2459
        %2495 = vmatpush1.bf16.msra.mxu0 %v2458
        %2496 = vmatprep.subr.bf16.mxu0 %v2455
        %2497 = vmatpush1.bf16.msra.mxu0 %v2454
        %2498 = vmatprep.subr.bf16.mxu0 %v2451
        %2499 = vmatpush1.bf16.msra.mxu0 %v2450
        %2500 = vmatprep.subr.bf16.mxu0 %v2447
        %2501 = vmatpush1.bf16.msra.mxu0 %v2446
        %2502 = vmatprep.subr.bf16.mxu0 %v2443
        %2503 = vmatpush1.bf16.msra.mxu0 %v2442
        %2504 = vmatprep.subr.bf16.mxu0 %v2439
        %2505 = vmatpush1.bf16.msra.mxu0 %v2438
        %2506 = vmatprep.subr.bf16.mxu0 %v2435
        %2507 = vmatpush1.bf16.msra.mxu0 %v2434
        %2508 = vmatprep.subr.bf16.mxu0 %v2431
        %2509 = vmatpush1.bf16.msra.mxu0 %v2430
        %2510 = vmatprep.subr.bf16.mxu0 0
        %2511 = vmatpush2.bf16.msra.mxu0 0
        %2512 = vmatprep.subr.bf16.mxu0 0
        %2513 = vmatpush2.bf16.msra.mxu0 0
        %2514 = vmatprep.subr.bf16.mxu0 0
        %2515 = vmatpush2.bf16.msra.mxu0 0
        %2516 = vmatprep.subr.bf16.mxu0 0
        %2517 = vmatpush2.bf16.msra.mxu0 0
        %2518 = vmatprep.subr.bf16.mxu0 0
        %2519 = vmatpush2.bf16.msra.mxu0 0
        %2520 = vmatprep.subr.bf16.mxu0 0
        %2521 = vmatpush2.bf16.msra.mxu0 0
        %2522 = vmatprep.subr.bf16.mxu0 0
        %2523 = vmatpush2.bf16.msra.mxu0 0
        %2524 = vmatprep.subr.bf16.mxu0 0
        %2525 = vmatpush2.bf16.msra.mxu0 0
        %2526 = vmatprep.mubr.bf16.mxu0 0
        %2527 = vmatmul.mubr.bf16.gmra.mxu0 %v2301
        %v2528 = vpop.f32.mrf.mxu0
        %v2529 = vadd.f32 0.0, %v2528
        %v2530 = vpop.f32.mrf.mxu0
        %v2531 = vadd.f32 0.0, %v2530
        %v2532 = vpop.f32.mrf.mxu0
        %v2533 = vpop.f32.mrf.mxu0
        %2534 = vdwg.mxu0
        %2535 = vmatprep.subr.bf16.mxu0 %v2461
        %2536 = vmatpush1.bf16.msra.mxu0 %v2460
        %2537 = vmatprep.subr.bf16.mxu0 %v2457
        %2538 = vmatpush1.bf16.msra.mxu0 %v2456
        %2539 = vmatprep.subr.bf16.mxu0 %v2453
        %2540 = vmatpush1.bf16.msra.mxu0 %v2452
        %2541 = vmatprep.subr.bf16.mxu0 %v2449
        %2542 = vmatpush1.bf16.msra.mxu0 %v2448
        %2543 = vmatprep.subr.bf16.mxu0 %v2445
        %2544 = vmatpush1.bf16.msra.mxu0 %v2444
        %2545 = vmatprep.subr.bf16.mxu0 %v2441
        %2546 = vmatpush1.bf16.msra.mxu0 %v2440
        %2547 = vmatprep.subr.bf16.mxu0 %v2437
        %2548 = vmatpush1.bf16.msra.mxu0 %v2436
        %2549 = vmatprep.subr.bf16.mxu0 %v2433
        %2550 = vmatpush1.bf16.msra.mxu0 %v2432
        %2551 = vmatprep.subr.bf16.mxu0 0
        %2552 = vmatpush2.bf16.msra.mxu0 0
        %2553 = vmatprep.subr.bf16.mxu0 0
        %2554 = vmatpush2.bf16.msra.mxu0 0
        %2555 = vmatprep.subr.bf16.mxu0 0
        %2556 = vmatpush2.bf16.msra.mxu0 0
        %2557 = vmatprep.subr.bf16.mxu0 0
        %2558 = vmatpush2.bf16.msra.mxu0 0
        %2559 = vmatprep.subr.bf16.mxu0 0
        %2560 = vmatpush2.bf16.msra.mxu0 0
        %2561 = vmatprep.subr.bf16.mxu0 0
        %2562 = vmatpush2.bf16.msra.mxu0 0
        %2563 = vmatprep.subr.bf16.mxu0 0
        %2564 = vmatpush2.bf16.msra.mxu0 0
        %2565 = vmatprep.subr.bf16.mxu0 0
        %2566 = vmatpush2.bf16.msra.mxu0 0
        %2567 = vmatprep.mubr.bf16.mxu0 0
        %2568 = vmatmul.mubr.bf16.gmra.mxu0 %v2301
        %v2569 = vpop.f32.mrf.mxu0
        %v2570 = vadd.f32 0.0, %v2569
        %v2571 = vpop.f32.mrf.mxu0
        %v2572 = vadd.f32 0.0, %v2571
        %v2573 = vpop.f32.mrf.mxu0
        %v2574 = vpop.f32.mrf.mxu0
        %2575 = vdwg.mxu0
        %v2576 = vadd.f32 %v1725, %v2529
        %v2577 = vadd.f32 %v1727, %v2531
        %v2578 = vadd.f32 %v1766, %v2570
        %v2579 = vadd.f32 %v1768, %v2572
        %v2580 = vxor.u32 %v2576, 2147483648
        %v2581 = vmul.f32 %v2580, 1.442695
        %v2582 = vpow.pop %v2581
        %v2583 = vadd.f32 %v2582, 1.0
        %v2584 = vrcp.pop %v2583
        %v2585 = vmul.f32 1.0, %v2584
        %v2586 = vxor.u32 %v2577, 2147483648
        %v2587 = vmul.f32 %v2586, 1.442695
        %v2588 = vpow.pop %v2587
        %v2589 = vadd.f32 %v2588, 1.0
        %v2590 = vrcp.pop %v2589
        %v2591 = vmul.f32 1.0, %v2590
        %v2592 = vtanh.pop %v2578
        %v2593 = vxor.u32 %v2579, 2147483648
        %v2594 = vmul.f32 %v2593, 1.442695
        %v2595 = vpow.pop %v2594
        %v2596 = vadd.f32 %v2595, 1.0
        %v2597 = vrcp.pop %v2596
        %v2598 = vmul.f32 1.0, %v2597
        %v2599 = vmul.f32 %v2591, %v1038
        %v2600 = vmul.f32 %v2585, %v2592
        %v2601 = vadd.f32 %v2599, %v2600
        %v2602 = vtanh.pop %v2601
        %v2603 = vmul.f32 %v2598, %v2602
        %v2604 = vpack.c.bf16 %v2603, %v2603
        %v2605 = vld [vmem:[#allocation3] sm:$0xf]
        %v2606 = vld [vmem:[#allocation3 + $0x4] sm:$0xf]
        %v2607 = vld [vmem:[#allocation3 + $0x8] sm:$0xf]
        %v2608 = vld [vmem:[#allocation3 + $0xc] sm:$0xf]
        %v2609 = vld [vmem:[#allocation3 + $0x10] sm:$0xf]
        %v2610 = vld [vmem:[#allocation3 + $0x14] sm:$0xf]
        %v2611 = vld [vmem:[#allocation3 + $0x18] sm:$0xf]
        %v2612 = vld [vmem:[#allocation3 + $0x1c] sm:$0xf]
        %v2613 = vld [vmem:[#allocation3 + $0x20] sm:$0xf]
        %v2614 = vld [vmem:[#allocation3 + $0x24] sm:$0xf]
        %v2615 = vld [vmem:[#allocation3 + $0x28] sm:$0xf]
        %v2616 = vld [vmem:[#allocation3 + $0x2c] sm:$0xf]
        %v2617 = vld [vmem:[#allocation3 + $0x30] sm:$0xf]
        %v2618 = vld [vmem:[#allocation3 + $0x34] sm:$0xf]
        %v2619 = vld [vmem:[#allocation3 + $0x38] sm:$0xf]
        %v2620 = vld [vmem:[#allocation3 + $0x3c] sm:$0xf]
        %v2621 = vld [vmem:[%s10] sm:$0x1]
        %v2623 = vlaneseq
        %v2624 = vshrl.u32 %v2623, 7
        %v2625 = vsub.s32 0, %v2624
        %v2626 = vrot.slane %v2621, %v2625
        %v2644 = vunpack.c.l.b16 %v2605
        %v2645 = vunpack.c.l.b16 %v2606
        %v2646 = vunpack.c.l.b16 %v2607
        %v2647 = vunpack.c.l.b16 %v2608
        %v2648 = vunpack.c.l.b16 %v2609
        %v2649 = vunpack.c.l.b16 %v2610
        %v2650 = vunpack.c.l.b16 %v2611
        %v2651 = vunpack.c.l.b16 %v2612
        %v2652 = vunpack.c.l.b16 %v2613
        %v2653 = vunpack.c.l.b16 %v2614
        %v2654 = vunpack.c.l.b16 %v2615
        %v2655 = vunpack.c.l.b16 %v2616
        %v2656 = vunpack.c.l.b16 %v2617
        %v2657 = vunpack.c.l.b16 %v2618
        %v2658 = vunpack.c.l.b16 %v2619
        %v2659 = vunpack.c.l.b16 %v2620
        %v2660 = vpack.c.b16 %v2645, %v2644
        %v2661 = vpack.c.b16 %v2647, %v2646
        %v2662 = vpack.c.b16 %v2649, %v2648
        %v2663 = vpack.c.b16 %v2651, %v2650
        %v2664 = vpack.c.b16 %v2653, %v2652
        %v2665 = vpack.c.b16 %v2655, %v2654
        %v2666 = vpack.c.b16 %v2657, %v2656
        %v2667 = vpack.c.b16 %v2659, %v2658
        %2676 = vmatprep.subr.bf16.mxu0 0
        %2677 = vmatpush1.bf16.msra.mxu0 %v2667
        %2678 = vmatprep.subr.bf16.mxu0 0
        %2679 = vmatpush1.bf16.msra.mxu0 %v2666
        %2680 = vmatprep.subr.bf16.mxu0 0
        %2681 = vmatpush1.bf16.msra.mxu0 %v2665
        %2682 = vmatprep.subr.bf16.mxu0 0
        %2683 = vmatpush1.bf16.msra.mxu0 %v2664
        %2684 = vmatprep.subr.bf16.mxu0 0
        %2685 = vmatpush1.bf16.msra.mxu0 %v2663
        %2686 = vmatprep.subr.bf16.mxu0 0
        %2687 = vmatpush1.bf16.msra.mxu0 %v2662
        %2688 = vmatprep.subr.bf16.mxu0 0
        %2689 = vmatpush1.bf16.msra.mxu0 %v2661
        %2690 = vmatprep.subr.bf16.mxu0 0
        %2691 = vmatpush1.bf16.msra.mxu0 %v2660
        %2692 = vmatprep.subr.bf16.mxu0 0
        %2693 = vmatpush2.bf16.msra.mxu0 0
        %2694 = vmatprep.subr.bf16.mxu0 0
        %2695 = vmatpush2.bf16.msra.mxu0 0
        %2696 = vmatprep.subr.bf16.mxu0 0
        %2697 = vmatpush2.bf16.msra.mxu0 0
        %2698 = vmatprep.subr.bf16.mxu0 0
        %2699 = vmatpush2.bf16.msra.mxu0 0
        %2700 = vmatprep.subr.bf16.mxu0 0
        %2701 = vmatpush2.bf16.msra.mxu0 0
        %2702 = vmatprep.subr.bf16.mxu0 0
        %2703 = vmatpush2.bf16.msra.mxu0 0
        %2704 = vmatprep.subr.bf16.mxu0 0
        %2705 = vmatpush2.bf16.msra.mxu0 0
        %2706 = vmatprep.subr.bf16.mxu0 0
        %2707 = vmatpush2.bf16.msra.mxu0 0
        %2708 = vmatprep.mubr.bf16.mxu0 0
        %2709 = vmatmul.mubr.bf16.gmra.mxu0 %v2604
        %v2710 = vpop.f32.mrf.mxu0
        %v2711 = vadd.f32 %v2626, %v2710
        %v2712 = vpop.f32.mrf.mxu0
        %v2713 = vpop.f32.mrf.mxu0
        %v2714 = vpop.f32.mrf.mxu0
        %2715 = vdwg.mxu0
        %v2716 = vld [vmem:[%s0] sm:$0xff]
        %v2717 = vstv %s36
        %vm2718 = vcmp.gt.s32.totalorder %v2716, %v2717
        %v2719 = vsel %vm2718, 1, 0
        %2720 = vset.pattern.permute.xlu0 0
        %2721 = vperm.xlu0 %2720, %v2719
        %v2722 = vpop.permute.xlu0 %2721
        %vm2723 = vcmp.eq.s32.totalorder %v2722, 1
        %v2724 = vsel %vm2723, %v2711, 0.0
        %2725 = vst [vmem:[%s457] sm:$0xff] %v2724
        %v2726 = vsel %vm2723, %v2085, 0.0
        %2727 = vst.msk [vmem:[%s464] sm:$0xff] %vm2074, %v2726
        %2728 = vst [vmem:[#allocation6] sm:$0xff] %v2603
        %2729 = vst [vmem:[#allocation7] sm:$0xff] %v2601
        %v2730 = vcvt.s32.f32 %v1966
        %vm2731 = vcmp.lt.s32.totalorder %v1966, 64
        %v2732 = vsel %vm2731, %v2711, -1e+30
        %2733 = vmax.xlane.f32.xlu0 %v2732
        %v2734 = vpop.xlane.xlu0 %2733
        %vm2735 = vcmp.eq.f32.partialorder %v2732, %v2734
        %v2736 = vsel %vm2735, %v2730, 1e+09
        %2737 = vmin.xlane.f32.xlu0 %v2736
        %v2738 = vpop.xlane.xlu0 %2737
        %vm2739 = vcmp.eq.f32.partialorder %v2730, %v2738
        %v2740 = vsel %vm2739, 1, 0
        %v2741 = vcvt.s32.f32 %v2740
        %v2742 = vpack.c.bf16 %v2741, %v2741
        %v2743 = vld [vmem:[#allocation4] sm:$0xf]
        %v2744 = vld [vmem:[#allocation4 + $0x4] sm:$0xf]
        %v2745 = vld [vmem:[#allocation4 + $0x8] sm:$0xf]
        %v2746 = vld [vmem:[#allocation4 + $0xc] sm:$0xf]
        %v2747 = vld [vmem:[#allocation4 + $0x10] sm:$0xf]
        %v2748 = vld [vmem:[#allocation4 + $0x14] sm:$0xf]
        %v2749 = vld [vmem:[#allocation4 + $0x18] sm:$0xf]
        %v2750 = vld [vmem:[#allocation4 + $0x1c] sm:$0xf]
        %v2751 = vld [vmem:[#allocation4 + $0x20] sm:$0xf]
        %v2752 = vld [vmem:[#allocation4 + $0x24] sm:$0xf]
        %v2753 = vld [vmem:[#allocation4 + $0x28] sm:$0xf]
        %v2754 = vld [vmem:[#allocation4 + $0x2c] sm:$0xf]
        %v2755 = vld [vmem:[#allocation4 + $0x30] sm:$0xf]
        %v2756 = vld [vmem:[#allocation4 + $0x34] sm:$0xf]
        %v2757 = vld [vmem:[#allocation4 + $0x38] sm:$0xf]
        %v2758 = vld [vmem:[#allocation4 + $0x3c] sm:$0xf]
        %v2775 = vunpack.c.l.b16 %v2743
        %v2776 = vunpack.c.l.b16 %v2744
        %v2777 = vunpack.c.l.b16 %v2745
        %v2778 = vunpack.c.l.b16 %v2746
        %v2779 = vunpack.c.l.b16 %v2747
        %v2780 = vunpack.c.l.b16 %v2748
        %v2781 = vunpack.c.l.b16 %v2749
        %v2782 = vunpack.c.l.b16 %v2750
        %v2783 = vunpack.c.l.b16 %v2751
        %v2784 = vunpack.c.l.b16 %v2752
        %v2785 = vunpack.c.l.b16 %v2753
        %v2786 = vunpack.c.l.b16 %v2754
        %v2787 = vunpack.c.l.b16 %v2755
        %v2788 = vunpack.c.l.b16 %v2756
        %v2789 = vunpack.c.l.b16 %v2757
        %v2790 = vunpack.c.l.b16 %v2758
        %v2791 = vpack.c.b16 %v2776, %v2775
        %v2792 = vpack.c.b16 %v2778, %v2777
        %v2793 = vpack.c.b16 %v2780, %v2779
        %v2794 = vpack.c.b16 %v2782, %v2781
        %v2795 = vpack.c.b16 %v2784, %v2783
        %v2796 = vpack.c.b16 %v2786, %v2785
        %v2797 = vpack.c.b16 %v2788, %v2787
        %v2798 = vpack.c.b16 %v2790, %v2789
        %2807 = vmatprep.subr.bf16.mxu0 0
        %2808 = vmatpush1.bf16.msra.mxu0 %v2798
        %2809 = vmatprep.subr.bf16.mxu0 0
        %2810 = vmatpush1.bf16.msra.mxu0 %v2797
        %2811 = vmatprep.subr.bf16.mxu0 0
        %2812 = vmatpush1.bf16.msra.mxu0 %v2796
        %2813 = vmatprep.subr.bf16.mxu0 0
        %2814 = vmatpush1.bf16.msra.mxu0 %v2795
        %2815 = vmatprep.subr.bf16.mxu0 0
        %2816 = vmatpush1.bf16.msra.mxu0 %v2794
        %2817 = vmatprep.subr.bf16.mxu0 0
        %2818 = vmatpush1.bf16.msra.mxu0 %v2793
        %2819 = vmatprep.subr.bf16.mxu0 0
        %2820 = vmatpush1.bf16.msra.mxu0 %v2792
        %2821 = vmatprep.subr.bf16.mxu0 0
        %2822 = vmatpush1.bf16.msra.mxu0 %v2791
        %2823 = vmatprep.subr.bf16.mxu0 0
        %2824 = vmatpush2.bf16.msra.mxu0 0
        %2825 = vmatprep.subr.bf16.mxu0 0
        %2826 = vmatpush2.bf16.msra.mxu0 0
        %2827 = vmatprep.subr.bf16.mxu0 0
        %2828 = vmatpush2.bf16.msra.mxu0 0
        %2829 = vmatprep.subr.bf16.mxu0 0
        %2830 = vmatpush2.bf16.msra.mxu0 0
        %2831 = vmatprep.subr.bf16.mxu0 0
        %2832 = vmatpush2.bf16.msra.mxu0 0
        %2833 = vmatprep.subr.bf16.mxu0 0
        %2834 = vmatpush2.bf16.msra.mxu0 0
        %2835 = vmatprep.subr.bf16.mxu0 0
        %2836 = vmatpush2.bf16.msra.mxu0 0
        %2837 = vmatprep.subr.bf16.mxu0 0
        %2838 = vmatpush2.bf16.msra.mxu0 0
        %2839 = vmatprep.mubr.bf16.mxu0 0
        %2840 = vmatmul.mubr.bf16.gmra.mxu0 %v2742
        %v2841 = vpop.f32.mrf.mxu0
        %v2842 = vadd.f32 0.0, %v2841
        %v2843 = vpop.f32.mrf.mxu0
        %v2844 = vpop.f32.mrf.mxu0
        %v2845 = vpop.f32.mrf.mxu0
        %2846 = vdwg.mxu0
        %v2847 = vpack.c.bf16 %v2842, %v2842
        %2848 = vst [vmem:[#allocation8] sm:$0xf] %v2847
        %s2849 = sand.u32 %s275, 1
        %s2850 = scalar_lea.sflag [#allocation12], %s2849
        %s2851 = sand.u32 %s275, 1
        %s2852 = smul.addr %s2851, 8
        %s2853 = scalar_lea.vmem [#allocation18], %s2852
        %s2854 = sand.u32 %s301, 1
        %s2855 = scalar_lea.sflag [#allocation20], %s2854
        %s2856 = sand.u32 %s301, 1
        %s2857 = smul.addr %s2856, 8
        %s2858 = scalar_lea.vmem [#allocation19], %s2857
        // Predicated region
        $region97: #{tpu_custom_call.1} parent=63 // pred_check
          %p2859 = pneg %p285
        $region98: #{tpu_custom_call.1} parent=63 // pred_check_branch
          %2861 = sbr.rel (%p2859) target = $region100
        $region99: #{tpu_custom_call.1} parent=63 // pred_region
          %s2863 = ssub.s32 128, 128
          %2864 = vsyncadd %s2850, %s2863
          %s2865 = smul.addr %s36, 128
          %s2866 = scalar_lea.hbm %s14, %s2865
          %s2868 = sshll.u32 %s2853, 4
          %s2869 = int_to_ptr.vmem [resolvable:$true] %s2868
          %2871 = dma.vmem_to_hbm [thread:$0]  %s2869, 128, %s2866, %s2850
        $region100: #{tpu_custom_call.1} parent=63 // pred_fallthru
          _
        // Predicated region
        $region101: #{tpu_custom_call.1} parent=63 // pred_check
          %p2872 = pneg %p311
        $region102: #{tpu_custom_call.1} parent=63 // pred_check_branch
          %2874 = sbr.rel (%p2872) target = $region104
        $region103: #{tpu_custom_call.1} parent=63 // pred_region
          %s2876 = ssub.s32 128, 128
          %2877 = vsyncadd %s2855, %s2876
          %s2878 = smul.addr %s36, 128
          %s2879 = scalar_lea.hbm %s15, %s2878
          %s2881 = sshll.u32 %s2858, 4
          %s2882 = int_to_ptr.vmem [resolvable:$true] %s2881
          %2884 = dma.vmem_to_hbm [thread:$0]  %s2882, 128, %s2879, %s2855
        $region104: #{tpu_custom_call.1} parent=63 // pred_fallthru
          _
      $region64: #{tpu_custom_call.1} parent=5 // pred_fallthru
        _
      %p2885 = scmp.le.s32.totalorder 2, %s31
      // Predicated region
      $region105: #{tpu_custom_call.1} parent=5 // pred_check
        %p2886 = pneg %p2885
      $region106: #{tpu_custom_call.1} parent=5 // pred_check_branch
        %2888 = sbr.rel (%p2886) target = $region108
      $region107: #{tpu_custom_call.1} parent=5 // pred_region
        %s2889 = ssub.s32 %s31, 2
        // Predicated region
        $region109: #{tpu_custom_call.1} parent=107 // pred_check
          %p2890 = pneg %p291
        $region110: #{tpu_custom_call.1} parent=107 // pred_check_branch
          %2892 = sbr.rel (%p2890) target = $region112
        $region111: #{tpu_custom_call.1} parent=107 // pred_region
          %s2893 = sand.u32 %s276, 1
          %s2894 = scalar_lea.sflag [#allocation12], %s2893
          %s2895 = sand.u32 %s276, 1
          %s2896 = smul.addr %s2895, 8
          %s2897 = scalar_lea.vmem [#allocation18], %s2896
          %2898 = dma.done %s2894, 128
        $region112: #{tpu_custom_call.1} parent=107 // pred_fallthru
          _
        // Predicated region
        $region113: #{tpu_custom_call.1} parent=107 // pred_check
          %p2899 = pneg %p317
        $region114: #{tpu_custom_call.1} parent=107 // pred_check_branch
          %2901 = sbr.rel (%p2899) target = $region116
        $region115: #{tpu_custom_call.1} parent=107 // pred_region
          %s2902 = sand.u32 %s302, 1
          %s2903 = scalar_lea.sflag [#allocation20], %s2902
          %s2904 = sand.u32 %s302, 1
          %s2905 = smul.addr %s2904, 8
          %s2906 = scalar_lea.vmem [#allocation19], %s2905
          %2907 = dma.done %s2903, 128
        $region116: #{tpu_custom_call.1} parent=107 // pred_fallthru
          _
      $region108: #{tpu_custom_call.1} parent=5 // pred_fallthru
        _
    $region6: #{tpu_custom_call.1} parent=1 // loop_footer
      %s35 = sadd.s32 1, %s31
    $region7: #{tpu_custom_call.1} parent=1 // loop_footer_branch
      %30 = sbr.rel target = $region3
    $region8: #{tpu_custom_call.1} parent=1 // loop_exit
      _
    %2908 = vsyncpa [#allocation11], 1
    %s2909 = scalar_lea.sflag [#allocation11], 1
    %2910 = vsyncpa %s2909, 1
    %2911 = vsyncpa [#allocation14], 1
    %2912 = vsyncpa [#allocation17], 1
    %2913 = vsyncpa [#allocation12], 1
    %s2914 = scalar_lea.sflag [#allocation12], 1
    %2915 = vsyncpa %s2914, 1
    %2916 = vsyncpa [#allocation20], 1
    %s2917 = scalar_lea.sflag [#allocation20], 1
    %2918 = vsyncpa %s2917, 1
  %2919 = vsyncmov [#allocation9]
  %s2920 = vpop.sfrf %2919
  %p2921 = scmp.eq.s32.totalorder %s2920, 0
  %p2922 = pneg %p2921
  %2924 = shalt.err (%p2922)
  %s2925 = scalar_lea.sflag [#allocation9], 1
  %2926 = vsyncmov %s2925
  %s2927 = vpop.sfrf %2926
  %p2928 = scmp.eq.s32.totalorder %s2927, 0
  %p2929 = pneg %p2928
  %2931 = shalt.err (%p2929)
  %s2932 = scalar_lea.sflag [#allocation9], 2
  %2933 = vsyncmov %s2932
  %s2934 = vpop.sfrf %2933
  %p2935 = scmp.eq.s32.totalorder %s2934, 0
  %p2936 = pneg %p2935
  %2938 = shalt.err (%p2936)

</llo_original>
